<compile_context>
chip_gen: v5e
topology: v5e:2x2
jax: 0.10.0
libtpu: 0.0.40
codegen_flags: <defaults>
</compile_context>

<pallas_src>
import functools

import jax
import jax.numpy as jnp
from jax import lax
from jax.experimental import pallas as pl
from jax.experimental.pallas import tpu as pltpu

_BN_EPS = 1e-5
_VMEM_LIMIT_BYTES = 40 * 1024 * 1024     # explicit scoped-VMEM cap (safe on v5e/v6e/v7x)
_VMEM_TILE_BUDGET = 24 * 1024 * 1024     # working-set budget used for tile sizing


# ------------------------------- Pallas kernels -------------------------------


def _conv_relu_stats_kernel(*refs, pool, norm, tile_h, n, w_out, cin, cout,
                            n_tiles, inv_in_count):
    """One row tile of: [prev-layer BN affine] -> [2x2 maxpool] -> conv3x3 -> +bias -> ReLU.

    Also emits this tile's per-channel (sum, sum_sq) so *this* layer's BatchNorm can
    be finalized later without keeping the whole activation resident.
    """
    if norm:
        (body_ref, top_ref, bot_ref, stats_in_ref, g_in_ref, b_in_ref,
         w_ref, bias_ref, act_ref, stats_out_ref, xpad_ref) = refs
    else:
        (body_ref, top_ref, bot_ref,
         w_ref, bias_ref, act_ref, stats_out_ref, xpad_ref) = refs

    h = pl.program_id(0)

    # Finalize the previous layer's streamed BN stats into a per-channel affine.
    if norm:
        tot = jnp.sum(stats_in_ref[...], axis=0)                     # (2, Cin)
        mean = tot[0:1, :] * inv_in_count                            # (1, Cin)
        var = jnp.maximum(tot[1:2, :] * inv_in_count - mean * mean, 0.0)
        in_scale = g_in_ref[...] * lax.rsqrt(var + _BN_EPS)
        in_shift = b_in_ref[...] - mean * in_scale

    def load(ref):
        v = ref[...].astype(jnp.float32)
        if pool:
            # Block is (N, 2*rows, W, 2*Cin): the pool column pair already sits on the
            # lane dim (free wrapper reshape); reduce the row pair here.
            nb, r2, wb, _ = v.shape
            v = jnp.max(v.reshape(nb, r2 // 2, 2, wb, 2 * cin), axis=2)
            v = jnp.maximum(v[..., :cin], v[..., cin:])              # 2x1 -> 1x1
        if norm:
            v = v * in_scale + in_shift                              # fused prev-layer BN
        return v                                                     # (N, rows, W, Cin)

    # Assemble the zero-padded input tile in VMEM.  Every region that is later read
    # is rewritten on every grid step -> safe under "parallel" (megacore) semantics.
    zero_col = jnp.zeros((n, tile_h + 2, 1, cin), jnp.float32)
    xpad_ref[:, :, 0:1, :] = zero_col
    xpad_ref[:, :, w_out + 1:w_out + 2, :] = zero_col
    xpad_ref[:, 1:tile_h + 1, 1:w_out + 1, :] = load(body_ref)
    top_mask = (h > 0).astype(jnp.float32)                           # image-top pad row
    bot_mask = (h < n_tiles - 1).astype(jnp.float32)                 # image-bottom pad row
    xpad_ref[:, 0:1, 1:w_out + 1, :] = load(top_ref) * top_mask
    xpad_ref[:, tile_h + 1:tile_h + 2, 1:w_out + 1, :] = load(bot_ref) * bot_mask

    # im2col: 9 shifted taps of the padded tile concatenated along channels, so the
    # whole 3x3 conv is a single MXU matmul with K = 9*Cin (bf16 operands, f32 acc).
    cols = []
    for dy in range(3):
        for dx in range(3):
            cols.append(xpad_ref[:, dy:dy + tile_h, dx:dx + w_out, :])
    patches = jnp.concatenate(cols, axis=-1)                         # (N, TH, W, 9*Cin)
    patches = patches.reshape(n * tile_h * w_out, 9 * cin).astype(jnp.bfloat16)

    acc = jnp.dot(patches, w_ref[...], preferred_element_type=jnp.float32)
    acc = acc + bias_ref[...]                                        # conv bias
    acc = jnp.maximum(acc, 0.0)                                      # ReLU

    act_ref[...] = acc.reshape(n, tile_h, w_out, cout).astype(act_ref.dtype)

    # Streaming BN statistics for this layer (per-tile partial sums).
    s1 = jnp.sum(acc, axis=0, keepdims=True)                         # (1, Cout)
    s2 = jnp.sum(acc * acc, axis=0, keepdims=True)
    stats_out_ref[...] = jnp.concatenate([s1, s2], axis=0).reshape(1, 2, cout)


def _bn_apply_kernel(a_ref, stats_ref, g_ref, b_ref, o_ref, *, inv_count):
    """Finalize streamed (sum, sum_sq) -> mean/var and apply BN to one row tile."""
    tot = jnp.sum(stats_ref[...], axis=0)                            # (2, C)
    mean = tot[0:1, :] * inv_count
    var = jnp.maximum(tot[1:2, :] * inv_count - mean * mean, 0.0)
    scale = g_ref[...] * lax.rsqrt(var + _BN_EPS)
    shift = b_ref[...] - mean * scale
    o_ref[...] = (a_ref[...] * scale + shift).astype(o_ref.dtype)


# -------------------------------- JAX wrappers ---------------------------------


def _full_spec(a):
    return pl.BlockSpec(a.shape, lambda h: (0,) * a.ndim)


def _compiler_params():
    return pltpu.CompilerParams(dimension_semantics=("parallel",),
                                vmem_limit_bytes=_VMEM_LIMIT_BYTES)


def _conv_relu_stats(x, w_im2col, bias, in_stats, in_gamma, in_beta, *, pool, tile_h):
    norm = in_stats is not None
    if pool:
        n, hu, w, c2 = x.shape                   # x: (N, 2H, W, 2*Cin)
        h_out, cin = hu // 2, c2 // 2
        body_blk = (n, 2 * tile_h, w, c2)
        halo_blk = (n, 2, w, c2)
    else:
        n, h_out, w, cin = x.shape               # x: (N, H, W, Cin)
        body_blk = (n, tile_h, w, cin)
        halo_blk = (n, 1, w, cin)
    cout = w_im2col.shape[-1]
    n_tiles = h_out // tile_h

    # Body rows of the tile + 1-row top/bottom halos (clamped at the image edges;
    # the kernel masks the clamped rows to zero = conv zero padding).
    body_spec = pl.BlockSpec(body_blk, lambda h: (0, h, 0, 0))
    top_spec = pl.BlockSpec(halo_blk,
                            lambda h: (0, jnp.maximum(h * tile_h - 1, 0), 0, 0))
    bot_spec = pl.BlockSpec(halo_blk,
                            lambda h: (0, jnp.minimum((h + 1) * tile_h, h_out - 1), 0, 0))

    inputs = [x, x, x]
    in_specs = [body_spec, top_spec, bot_spec]
    inv_in_count = 1.0
    if norm:
        inputs += [in_stats, in_gamma, in_beta]
        in_specs += [_full_spec(in_stats), _full_spec(in_gamma), _full_spec(in_beta)]
        inv_in_count = 1.0 / float(n * h_out * w)
    inputs += [w_im2col, bias]
    in_specs += [_full_spec(w_im2col), _full_spec(bias)]

    kernel = functools.partial(
        _conv_relu_stats_kernel, pool=pool, norm=norm, tile_h=tile_h, n=n,
        w_out=w, cin=cin, cout=cout, n_tiles=n_tiles, inv_in_count=inv_in_count)

    return pl.pallas_call(
        kernel,
        out_shape=(jax.ShapeDtypeStruct((n, h_out, w, cout), jnp.float32),
                   jax.ShapeDtypeStruct((n_tiles, 2, cout), jnp.float32)),
        grid_spec=pltpu.PrefetchScalarGridSpec(
            num_scalar_prefetch=0,
            grid=(n_tiles,),
            in_specs=in_specs,
            out_specs=[pl.BlockSpec((n, tile_h, w, cout), lambda h: (0, h, 0, 0)),
                       pl.BlockSpec((1, 2, cout), lambda h: (h, 0, 0))],
            scratch_shapes=[pltpu.VMEM((n, tile_h + 2, w + 2, cin), jnp.float32)]),
        compiler_params=_compiler_params(),
    )(*inputs)


def _bn_apply(act, stats, gamma, beta, *, tile_h):
    n, h_out, w, c = act.shape
    n_tiles = h_out // tile_h
    kernel = functools.partial(_bn_apply_kernel,
                               inv_count=1.0 / float(n * h_out * w))
    return pl.pallas_call(
        kernel,
        out_shape=jax.ShapeDtypeStruct((n, h_out, w, c), jnp.float32),
        grid_spec=pltpu.PrefetchScalarGridSpec(
            num_scalar_prefetch=0,
            grid=(n_tiles,),
            in_specs=[pl.BlockSpec((n, tile_h, w, c), lambda h: (0, h, 0, 0)),
                      _full_spec(stats), _full_spec(gamma), _full_spec(beta)],
            out_specs=pl.BlockSpec((n, tile_h, w, c), lambda h: (0, h, 0, 0))),
        compiler_params=_compiler_params(),
    )(act, stats, gamma, beta)


def _pick_tile_h(h_out, n, w, cin, cout, budget=_VMEM_TILE_BUDGET):
    """Largest row tile (divisor of pooled H) whose double-buffered set fits VMEM."""
    best = 1
    for th in range(1, h_out + 1):
        if h_out % th:
            continue
        body = n * (2 * th) * w * (2 * cin) * 4          # pooled-layer worst case, f32
        act = n * th * w * cout * 4
        pad = n * (th + 2) * (w + 2) * cin * 4
        patches = n * th * w * 9 * cin * 2               # bf16 im2col
        est = 2 * (body + act) + pad + 2 * patches + n * th * w * cout * 4
        if est <= budget:
            best = th
    return best


def down_conv(x_nchw, params, *, tile_h=None):
    """DownConv forward: NCHW in -> NCHW out (MaxPool2d(2) + DoubleConv)."""
    n, cin, hu, wu = x_nchw.shape
    assert hu % 2 == 0 and wu % 2 == 0
    h_out, w_out = hu // 2, wu // 2

    c1 = params["w1"].shape[-1]
    c2 = params["w2"].shape[-1]

    # NCHW -> NHWC, then fold the 2x2-pool *column* pair into the lane dim; the
    # reshape is a contiguous re-interpretation (no scrambled 6-D transpose copy).
    x = jnp.transpose(x_nchw, (0, 2, 3, 1)).astype(jnp.float32)
    x = x.reshape(n, hu, w_out, 2 * cin)

    # im2col weights (9*Cin, Cout); bf16 operands for the MXU.
    w1 = params["w1"].reshape(9 * cin, c1).astype(jnp.bfloat16)
    w2 = params["w2"].reshape(9 * c1, c2).astype(jnp.bfloat16)

    if tile_h is None:
        tile_h = _pick_tile_h(h_out, n, w_out, max(cin, c1), max(c1, c2))
    if h_out % tile_h:
        raise ValueError(f"tile_h={tile_h} must divide pooled height {h_out}")

    # Layer 1: fused maxpool -> conv -> ReLU (+ streamed BN1 stats).
    act1, st1 = _conv_relu_stats(x, w1, params["b1"], None, None, None,
                                 pool=True, tile_h=tile_h)
    # Layer 2: fused BN1 -> conv -> ReLU (+ streamed BN2 stats).
    act2, st2 = _conv_relu_stats(act1, w2, params["b2"], st1, params["g1"],
                                 params["be1"], pool=False, tile_h=tile_h)
    # Final BN2 apply.
    out = _bn_apply(act2, st2, params["g2"], params["be2"], tile_h=tile_h)
    return jnp.transpose(out, (0, 3, 1, 2))


# --------------------------- deterministic parameters ---------------------------


def init_params(key, in_channel, out_channel):
    k1, k2, k3, k4 = jax.random.split(key, 4)
    fan1 = in_channel * 9
    fan2 = out_channel * 9
    bnd1 = fan1 ** -0.5
    bnd2 = fan2 ** -0.5
    return dict(
        w1=jax.random.uniform(k1, (3, 3, in_channel, out_channel), jnp.float32, -bnd1, bnd1),
        b1=jax.random.uniform(k2, (1, out_channel), jnp.float32, -bnd1, bnd1),
        g1=jnp.ones((1, out_channel), jnp.float32),
        be1=jnp.zeros((1, out_channel), jnp.float32),
        w2=jax.random.uniform(k3, (3, 3, out_channel, out_channel), jnp.float32, -bnd2, bnd2),
        b2=jax.random.uniform(k4, (1, out_channel), jnp.float32, -bnd2, bnd2),
        g2=jnp.ones((1, out_channel), jnp.float32),
        be2=jnp.zeros((1, out_channel), jnp.float32),
    )


# ------------------------------- pure-JAX reference -----------------------------


def _ref_down_conv(x_nchw, params):
    x = jnp.transpose(x_nchw, (0, 2, 3, 1)).astype(jnp.float32)
    p = lax.reduce_window(x, -jnp.inf, lax.max, (1, 2, 2, 1), (1, 2, 2, 1), "VALID")

    def block(h, w, b, g, be):
        y = lax.conv_general_dilated(h, w, (1, 1), "SAME",
                                     dimension_numbers=("NHWC", "HWIO", "NHWC"))
        y = y + b.reshape(1, 1, 1, -1)
        y = jnp.maximum(y, 0.0)
        mean = jnp.mean(y, axis=(0, 1, 2), keepdims=True)
        var = jnp.mean((y - mean) ** 2, axis=(0, 1, 2), keepdims=True)
        y = (y - mean) * lax.rsqrt(var + _BN_EPS)
        return y * g.reshape(1, 1, 1, -1) + be.reshape(1, 1, 1, -1)

    h1 = block(p, params["w1"], params["b1"], params["g1"], params["be1"])
    h2 = block(h1, params["w2"], params["b2"], params["g2"], params["be2"])
    return jnp.transpose(h2, (0, 3, 1, 2))


# -------------------------------------- main -------------------------------------

if __name__ == "__main__":
    key = jax.random.PRNGKey(0)
    k_param, k_x = jax.random.split(key)

    in_channel, out_channel = 4, 8
    N, H, W = 2, 16, 16

    params = init_params(k_param, in_channel, out_channel)
    x = jax.random.normal(k_x, (N, in_channel, H, W), jnp.float32)

    ref = jax.block_until_ready(_ref_down_conv(x, params))

    fwd = jax.jit(down_conv, static_argnames=("tile_h",))
    # Auto tile (single grid step at this toy size) and a forced 4-step grid that
    # exercises the halo masking + streamed-stats reduction.
    for th in (None, 2):
        out = jax.block_until_ready(fwd(x, params, tile_h=th))
        assert out.shape == (N, out_channel, H // 2, W // 2), out.shape
        diff = jnp.abs(out - ref)
        err_max = float(jnp.max(diff))
        err_mean = float(jnp.mean(diff))
        # bf16 MXU operands (f32 accumulation) => relaxed tolerance vs f32 reference.
        assert err_max < 5e-2 and err_mean < 1e-2, (err_max, err_mean)

    print("KERNEL_OK")
</pallas_src>

<mosaic_0001>
module attributes {stable_mosaic.version = 11 : i64} {
  func.func @_bn_apply_kernel(%arg0: i32, %arg1: memref<2x8x8x8xf32, #tpu.memory_space<vmem>>, %arg2: memref<1x2x8xf32, #tpu.memory_space<vmem>>, %arg3: memref<1x8xf32, #tpu.memory_space<vmem>>, %arg4: memref<1x8xf32, #tpu.memory_space<vmem>>, %arg5: memref<2x8x8x8xf32, #tpu.memory_space<vmem>>) attributes {dimension_semantics = [#tpu.dimension_semantics<parallel>], iteration_bounds = array<i64: 1>, scalar_prefetch = 0 : i64, scratch_operands = 0 : i64, tpu.core_type = #tpu.core_type<tc>, window_params = [{transform_indices = @transform_0, window_bounds = array<i64: 2, 8, 8, 8>}, {pipeline_mode = #tpu.pipeline_mode<synchronous>, transform_indices = @transform_1, window_bounds = array<i64: 1, 2, 8>}, {pipeline_mode = #tpu.pipeline_mode<synchronous>, transform_indices = @transform_2, window_bounds = array<i64: 1, 8>}, {pipeline_mode = #tpu.pipeline_mode<synchronous>, transform_indices = @transform_3, window_bounds = array<i64: 1, 8>}, {transform_indices = @transform_4, window_bounds = array<i64: 2, 8, 8, 8>}]} {
    %c0 = arith.constant 0 : index
    %c0_0 = arith.constant 0 : index
    %c0_1 = arith.constant 0 : index
    %0 = vector.load %arg2[%c0, %c0_0, %c0_1] : memref<1x2x8xf32, #tpu.memory_space<vmem>>, vector<1x2x8xf32>
    %cst = arith.constant dense<0.000000e+00> : vector<2x8xf32>
    %1 = vector.multi_reduction <add>, %0, %cst [0] : vector<1x2x8xf32> to vector<2x8xf32>
    %2 = vector.extract_strided_slice %1 {offsets = [0, 0], sizes = [1, 8], strides = [1, 1]} : vector<2x8xf32> to vector<1x8xf32>
    %cst_2 = arith.constant 7.812500e-03 : f32
    %3 = vector.broadcast %cst_2 : f32 to vector<1x8xf32>
    %4 = arith.mulf %2, %3 : vector<1x8xf32>
    %5 = vector.extract_strided_slice %1 {offsets = [1, 0], sizes = [1, 8], strides = [1, 1]} : vector<2x8xf32> to vector<1x8xf32>
    %cst_3 = arith.constant 7.812500e-03 : f32
    %6 = vector.broadcast %cst_3 : f32 to vector<1x8xf32>
    %7 = arith.mulf %5, %6 : vector<1x8xf32>
    %8 = arith.mulf %4, %4 : vector<1x8xf32>
    %9 = arith.subf %7, %8 : vector<1x8xf32>
    %cst_4 = arith.constant 0.000000e+00 : f32
    %10 = vector.broadcast %cst_4 : f32 to vector<1x8xf32>
    %11 = arith.maximumf %9, %10 : vector<1x8xf32>
    %c0_5 = arith.constant 0 : index
    %c0_6 = arith.constant 0 : index
    %12 = vector.load %arg3[%c0_5, %c0_6] : memref<1x8xf32, #tpu.memory_space<vmem>>, vector<1x8xf32>
    %cst_7 = arith.constant 9.99999974E-6 : f32
    %13 = vector.broadcast %cst_7 : f32 to vector<1x8xf32>
    %14 = arith.addf %11, %13 : vector<1x8xf32>
    %15 = math.rsqrt %14 : vector<1x8xf32>
    %16 = arith.mulf %12, %15 : vector<1x8xf32>
    %c0_8 = arith.constant 0 : index
    %c0_9 = arith.constant 0 : index
    %17 = vector.load %arg4[%c0_8, %c0_9] : memref<1x8xf32, #tpu.memory_space<vmem>>, vector<1x8xf32>
    %18 = arith.mulf %4, %16 : vector<1x8xf32>
    %19 = arith.subf %17, %18 : vector<1x8xf32>
    %c0_10 = arith.constant 0 : index
    %c0_11 = arith.constant 0 : index
    %c0_12 = arith.constant 0 : index
    %c0_13 = arith.constant 0 : index
    %20 = vector.load %arg1[%c0_10, %c0_11, %c0_12, %c0_13] : memref<2x8x8x8xf32, #tpu.memory_space<vmem>>, vector<2x8x8x8xf32>
    %21 = vector.shape_cast %16 : vector<1x8xf32> to vector<1x1x1x8xf32>
    %22 = vector.broadcast %21 : vector<1x1x1x8xf32> to vector<2x8x8x8xf32>
    %23 = arith.mulf %20, %22 : vector<2x8x8x8xf32>
    %24 = vector.shape_cast %19 : vector<1x8xf32> to vector<1x1x1x8xf32>
    %25 = vector.broadcast %24 : vector<1x1x1x8xf32> to vector<2x8x8x8xf32>
    %26 = arith.addf %23, %25 : vector<2x8x8x8xf32>
    %c0_14 = arith.constant 0 : index
    %c0_15 = arith.constant 0 : index
    %c0_16 = arith.constant 0 : index
    %c0_17 = arith.constant 0 : index
    %27 = vector.load %arg5[%c0_14, %c0_15, %c0_16, %c0_17] : memref<2x8x8x8xf32, #tpu.memory_space<vmem>>, vector<2x8x8x8xf32>
    tpu.vector_store %arg5[%c0_14, %c0_15, %c0_16, %c0_17], %26 {strides = array<i32>} : memref<2x8x8x8xf32, #tpu.memory_space<vmem>>, vector<2x8x8x8xf32>,
    return
  }
  func.func @transform_0(%arg0: i32) -> (i32, i32, i32, i32) {
    %c0_i32 = arith.constant 0 : i32
    %c0_i32_0 = arith.constant 0 : i32
    %c0_i32_1 = arith.constant 0 : i32
    %c0_i32_2 = arith.constant 0 : i32
    return %c0_i32, %arg0, %c0_i32_0, %c0_i32_1 : i32, i32, i32, i32
  }
  func.func @transform_1(%arg0: i32) -> (i32, i32, i32) {
    %c0_i32 = arith.constant 0 : i32
    %c0_i32_0 = arith.constant 0 : i32
    %c0_i32_1 = arith.constant 0 : i32
    %c0_i32_2 = arith.constant 0 : i32
    return %c0_i32, %c0_i32_0, %c0_i32_1 : i32, i32, i32
  }
  func.func @transform_2(%arg0: i32) -> (i32, i32) {
    %c0_i32 = arith.constant 0 : i32
    %c0_i32_0 = arith.constant 0 : i32
    %c0_i32_1 = arith.constant 0 : i32
    return %c0_i32, %c0_i32_0 : i32, i32
  }
  func.func @transform_3(%arg0: i32) -> (i32, i32) {
    %c0_i32 = arith.constant 0 : i32
    %c0_i32_0 = arith.constant 0 : i32
    %c0_i32_1 = arith.constant 0 : i32
    return %c0_i32, %c0_i32_0 : i32, i32
  }
  func.func @transform_4(%arg0: i32) -> (i32, i32, i32, i32) {
    %c0_i32 = arith.constant 0 : i32
    %c0_i32_0 = arith.constant 0 : i32
    %c0_i32_1 = arith.constant 0 : i32
    %c0_i32_2 = arith.constant 0 : i32
    return %c0_i32, %arg0, %c0_i32_0, %c0_i32_1 : i32, i32, i32, i32
  }
}

module attributes {stable_mosaic.version = 11 : i64} {
  func.func @_conv_relu_stats_kernel(%arg0: i32, %arg1: memref<2x8x8x8xf32, #tpu.memory_space<vmem>>, %arg2: memref<2x1x8x8xf32, #tpu.memory_space<vmem>>, %arg3: memref<2x1x8x8xf32, #tpu.memory_space<vmem>>, %arg4: memref<1x2x8xf32, #tpu.memory_space<vmem>>, %arg5: memref<1x8xf32, #tpu.memory_space<vmem>>, %arg6: memref<1x8xf32, #tpu.memory_space<vmem>>, %arg7: memref<72x8xbf16, #tpu.memory_space<vmem>>, %arg8: memref<1x8xf32, #tpu.memory_space<vmem>>, %arg9: memref<2x8x8x8xf32, #tpu.memory_space<vmem>>, %arg10: memref<1x2x8xf32, #tpu.memory_space<vmem>>, %arg11: memref<2x10x10x8xf32, #tpu.memory_space<vmem>>) attributes {dimension_semantics = [#tpu.dimension_semantics<parallel>], iteration_bounds = array<i64: 1>, scalar_prefetch = 0 : i64, scratch_operands = 1 : i64, tpu.core_type = #tpu.core_type<tc>, window_params = [{transform_indices = @transform_0, window_bounds = array<i64: 2, 8, 8, 8>}, {transform_indices = @transform_1, window_bounds = array<i64: 2, 1, 8, 8>}, {transform_indices = @transform_2, window_bounds = array<i64: 2, 1, 8, 8>}, {pipeline_mode = #tpu.pipeline_mode<synchronous>, transform_indices = @transform_3, window_bounds = array<i64: 1, 2, 8>}, {pipeline_mode = #tpu.pipeline_mode<synchronous>, transform_indices = @transform_4, window_bounds = array<i64: 1, 8>}, {pipeline_mode = #tpu.pipeline_mode<synchronous>, transform_indices = @transform_5, window_bounds = array<i64: 1, 8>}, {pipeline_mode = #tpu.pipeline_mode<synchronous>, transform_indices = @transform_6, window_bounds = array<i64: 72, 8>}, {pipeline_mode = #tpu.pipeline_mode<synchronous>, transform_indices = @transform_7, window_bounds = array<i64: 1, 8>}, {transform_indices = @transform_8, window_bounds = array<i64: 2, 8, 8, 8>}, {transform_indices = @transform_9, window_bounds = array<i64: 1, 2, 8>}]} {
    %c0 = arith.constant 0 : index
    %c0_0 = arith.constant 0 : index
    %c0_1 = arith.constant 0 : index
    %0 = vector.load %arg4[%c0, %c0_0, %c0_1] : memref<1x2x8xf32, #tpu.memory_space<vmem>>, vector<1x2x8xf32>
    %cst = arith.constant dense<0.000000e+00> : vector<2x8xf32>
    %1 = vector.multi_reduction <add>, %0, %cst [0] : vector<1x2x8xf32> to vector<2x8xf32>
    %2 = vector.extract_strided_slice %1 {offsets = [0, 0], sizes = [1, 8], strides = [1, 1]} : vector<2x8xf32> to vector<1x8xf32>
    %cst_2 = arith.constant 7.812500e-03 : f32
    %3 = vector.broadcast %cst_2 : f32 to vector<1x8xf32>
    %4 = arith.mulf %2, %3 : vector<1x8xf32>
    %5 = vector.extract_strided_slice %1 {offsets = [1, 0], sizes = [1, 8], strides = [1, 1]} : vector<2x8xf32> to vector<1x8xf32>
    %cst_3 = arith.constant 7.812500e-03 : f32
    %6 = vector.broadcast %cst_3 : f32 to vector<1x8xf32>
    %7 = arith.mulf %5, %6 : vector<1x8xf32>
    %8 = arith.mulf %4, %4 : vector<1x8xf32>
    %9 = arith.subf %7, %8 : vector<1x8xf32>
    %cst_4 = arith.constant 0.000000e+00 : f32
    %10 = vector.broadcast %cst_4 : f32 to vector<1x8xf32>
    %11 = arith.maximumf %9, %10 : vector<1x8xf32>
    %c0_5 = arith.constant 0 : index
    %c0_6 = arith.constant 0 : index
    %12 = vector.load %arg5[%c0_5, %c0_6] : memref<1x8xf32, #tpu.memory_space<vmem>>, vector<1x8xf32>
    %cst_7 = arith.constant 9.99999974E-6 : f32
    %13 = vector.broadcast %cst_7 : f32 to vector<1x8xf32>
    %14 = arith.addf %11, %13 : vector<1x8xf32>
    %15 = math.rsqrt %14 : vector<1x8xf32>
    %16 = arith.mulf %12, %15 : vector<1x8xf32>
    %c0_8 = arith.constant 0 : index
    %c0_9 = arith.constant 0 : index
    %17 = vector.load %arg6[%c0_8, %c0_9] : memref<1x8xf32, #tpu.memory_space<vmem>>, vector<1x8xf32>
    %18 = arith.mulf %4, %16 : vector<1x8xf32>
    %19 = arith.subf %17, %18 : vector<1x8xf32>
    %cst_10 = arith.constant 0.000000e+00 : f32
    %20 = vector.broadcast %cst_10 : f32 to vector<2x10x1x8xf32>
    %c0_11 = arith.constant 0 : index
    %c0_12 = arith.constant 0 : index
    %c0_13 = arith.constant 0 : index
    %c0_14 = arith.constant 0 : index
    %21 = vector.load %arg11[%c0_11, %c0_12, %c0_13, %c0_14] : memref<2x10x10x8xf32, #tpu.memory_space<vmem>>, vector<2x10x1x8xf32>
    tpu.vector_store %arg11[%c0_11, %c0_12, %c0_13, %c0_14], %20 {strides = array<i32>} : memref<2x10x10x8xf32, #tpu.memory_space<vmem>>, vector<2x10x1x8xf32>,
    %c0_15 = arith.constant 0 : index
    %c0_16 = arith.constant 0 : index
    %c9 = arith.constant 9 : index
    %c0_17 = arith.constant 0 : index
    %22 = vector.load %arg11[%c0_15, %c0_16, %c9, %c0_17] : memref<2x10x10x8xf32, #tpu.memory_space<vmem>>, vector<2x10x1x8xf32>
    tpu.vector_store %arg11[%c0_15, %c0_16, %c9, %c0_17], %20 {strides = array<i32>} : memref<2x10x10x8xf32, #tpu.memory_space<vmem>>, vector<2x10x1x8xf32>,
    %c0_18 = arith.constant 0 : index
    %c0_19 = arith.constant 0 : index
    %c0_20 = arith.constant 0 : index
    %c0_21 = arith.constant 0 : index
    %23 = vector.load %arg1[%c0_18, %c0_19, %c0_20, %c0_21] : memref<2x8x8x8xf32, #tpu.memory_space<vmem>>, vector<2x8x8x8xf32>
    %24 = vector.shape_cast %16 : vector<1x8xf32> to vector<1x1x1x8xf32>
    %25 = vector.broadcast %24 : vector<1x1x1x8xf32> to vector<2x8x8x8xf32>
    %26 = arith.mulf %23, %25 : vector<2x8x8x8xf32>
    %27 = vector.shape_cast %19 : vector<1x8xf32> to vector<1x1x1x8xf32>
    %28 = vector.broadcast %27 : vector<1x1x1x8xf32> to vector<2x8x8x8xf32>
    %29 = arith.addf %26, %28 : vector<2x8x8x8xf32>
    %c0_22 = arith.constant 0 : index
    %c1 = arith.constant 1 : index
    %c1_23 = arith.constant 1 : index
    %c0_24 = arith.constant 0 : index
    %30 = vector.load %arg11[%c0_22, %c1, %c1_23, %c0_24] : memref<2x10x10x8xf32, #tpu.memory_space<vmem>>, vector<2x8x8x8xf32>
    tpu.vector_store %arg11[%c0_22, %c1, %c1_23, %c0_24], %29 {strides = array<i32>} : memref<2x10x10x8xf32, #tpu.memory_space<vmem>>, vector<2x8x8x8xf32>,
    %c0_i32 = arith.constant 0 : i32
    %31 = arith.cmpi sgt, %arg0, %c0_i32 : i32
    %32 = arith.extui %31 : i1 to i32
    %33 = arith.sitofp %32 : i32 to f32
    %c0_i32_25 = arith.constant 0 : i32
    %34 = arith.cmpi slt, %arg0, %c0_i32_25 : i32
    %35 = arith.extui %34 : i1 to i32
    %36 = arith.sitofp %35 : i32 to f32
    %c0_26 = arith.constant 0 : index
    %c0_27 = arith.constant 0 : index
    %c0_28 = arith.constant 0 : index
    %c0_29 = arith.constant 0 : index
    %37 = vector.load %arg2[%c0_26, %c0_27, %c0_28, %c0_29] : memref<2x1x8x8xf32, #tpu.memory_space<vmem>>, vector<2x1x8x8xf32>
    %38 = vector.shape_cast %16 : vector<1x8xf32> to vector<1x1x1x8xf32>
    %39 = vector.broadcast %38 : vector<1x1x1x8xf32> to vector<2x1x8x8xf32>
    %40 = arith.mulf %37, %39 : vector<2x1x8x8xf32>
    %41 = vector.shape_cast %19 : vector<1x8xf32> to vector<1x1x1x8xf32>
    %42 = vector.broadcast %41 : vector<1x1x1x8xf32> to vector<2x1x8x8xf32>
    %43 = arith.addf %40, %42 : vector<2x1x8x8xf32>
    %44 = vector.broadcast %33 : f32 to vector<2x1x8x8xf32>
    %45 = arith.mulf %43, %44 : vector<2x1x8x8xf32>
    %c0_30 = arith.constant 0 : index
    %c0_31 = arith.constant 0 : index
    %c1_32 = arith.constant 1 : index
    %c0_33 = arith.constant 0 : index
    %46 = vector.load %arg11[%c0_30, %c0_31, %c1_32, %c0_33] : memref<2x10x10x8xf32, #tpu.memory_space<vmem>>, vector<2x1x8x8xf32>
    tpu.vector_store %arg11[%c0_30, %c0_31, %c1_32, %c0_33], %45 {strides = array<i32>} : memref<2x10x10x8xf32, #tpu.memory_space<vmem>>, vector<2x1x8x8xf32>,
    %c0_34 = arith.constant 0 : index
    %c0_35 = arith.constant 0 : index
    %c0_36 = arith.constant 0 : index
    %c0_37 = arith.constant 0 : index
    %47 = vector.load %arg3[%c0_34, %c0_35, %c0_36, %c0_37] : memref<2x1x8x8xf32, #tpu.memory_space<vmem>>, vector<2x1x8x8xf32>
    %48 = vector.shape_cast %16 : vector<1x8xf32> to vector<1x1x1x8xf32>
    %49 = vector.broadcast %48 : vector<1x1x1x8xf32> to vector<2x1x8x8xf32>
    %50 = arith.mulf %47, %49 : vector<2x1x8x8xf32>
    %51 = vector.shape_cast %19 : vector<1x8xf32> to vector<1x1x1x8xf32>
    %52 = vector.broadcast %51 : vector<1x1x1x8xf32> to vector<2x1x8x8xf32>
    %53 = arith.addf %50, %52 : vector<2x1x8x8xf32>
    %54 = vector.broadcast %36 : f32 to vector<2x1x8x8xf32>
    %55 = arith.mulf %53, %54 : vector<2x1x8x8xf32>
    %c0_38 = arith.constant 0 : index
    %c9_39 = arith.constant 9 : index
    %c1_40 = arith.constant 1 : index
    %c0_41 = arith.constant 0 : index
    %56 = vector.load %arg11[%c0_38, %c9_39, %c1_40, %c0_41] : memref<2x10x10x8xf32, #tpu.memory_space<vmem>>, vector<2x1x8x8xf32>
    tpu.vector_store %arg11[%c0_38, %c9_39, %c1_40, %c0_41], %55 {strides = array<i32>} : memref<2x10x10x8xf32, #tpu.memory_space<vmem>>, vector<2x1x8x8xf32>,
    %c0_42 = arith.constant 0 : index
    %c0_43 = arith.constant 0 : index
    %c0_44 = arith.constant 0 : index
    %c0_45 = arith.constant 0 : index
    %57 = vector.load %arg11[%c0_42, %c0_43, %c0_44, %c0_45] : memref<2x10x10x8xf32, #tpu.memory_space<vmem>>, vector<2x8x8x8xf32>
    %c0_46 = arith.constant 0 : index
    %c0_47 = arith.constant 0 : index
    %c1_48 = arith.constant 1 : index
    %c0_49 = arith.constant 0 : index
    %58 = vector.load %arg11[%c0_46, %c0_47, %c1_48, %c0_49] : memref<2x10x10x8xf32, #tpu.memory_space<vmem>>, vector<2x8x8x8xf32>
    %c0_50 = arith.constant 0 : index
    %c0_51 = arith.constant 0 : index
    %c2 = arith.constant 2 : index
    %c0_52 = arith.constant 0 : index
    %59 = vector.load %arg11[%c0_50, %c0_51, %c2, %c0_52] : memref<2x10x10x8xf32, #tpu.memory_space<vmem>>, vector<2x8x8x8xf32>
    %c0_53 = arith.constant 0 : index
    %c1_54 = arith.constant 1 : index
    %c0_55 = arith.constant 0 : index
    %c0_56 = arith.constant 0 : index
    %60 = vector.load %arg11[%c0_53, %c1_54, %c0_55, %c0_56] : memref<2x10x10x8xf32, #tpu.memory_space<vmem>>, vector<2x8x8x8xf32>
    %c0_57 = arith.constant 0 : index
    %c1_58 = arith.constant 1 : index
    %c1_59 = arith.constant 1 : index
    %c0_60 = arith.constant 0 : index
    %61 = vector.load %arg11[%c0_57, %c1_58, %c1_59, %c0_60] : memref<2x10x10x8xf32, #tpu.memory_space<vmem>>, vector<2x8x8x8xf32>
    %c0_61 = arith.constant 0 : index
    %c1_62 = arith.constant 1 : index
    %c2_63 = arith.constant 2 : index
    %c0_64 = arith.constant 0 : index
    %62 = vector.load %arg11[%c0_61, %c1_62, %c2_63, %c0_64] : memref<2x10x10x8xf32, #tpu.memory_space<vmem>>, vector<2x8x8x8xf32>
    %c0_65 = arith.constant 0 : index
    %c2_66 = arith.constant 2 : index
    %c0_67 = arith.constant 0 : index
    %c0_68 = arith.constant 0 : index
    %63 = vector.load %arg11[%c0_65, %c2_66, %c0_67, %c0_68] : memref<2x10x10x8xf32, #tpu.memory_space<vmem>>, vector<2x8x8x8xf32>
    %c0_69 = arith.constant 0 : index
    %c2_70 = arith.constant 2 : index
    %c1_71 = arith.constant 1 : index
    %c0_72 = arith.constant 0 : index
    %64 = vector.load %arg11[%c0_69, %c2_70, %c1_71, %c0_72] : memref<2x10x10x8xf32, #tpu.memory_space<vmem>>, vector<2x8x8x8xf32>
    %c0_73 = arith.constant 0 : index
    %c2_74 = arith.constant 2 : index
    %c2_75 = arith.constant 2 : index
    %c0_76 = arith.constant 0 : index
    %65 = vector.load %arg11[%c0_73, %c2_74, %c2_75, %c0_76] : memref<2x10x10x8xf32, #tpu.memory_space<vmem>>, vector<2x8x8x8xf32>
    %66 = tpu.concatenate %57, %58, %59, %60, %61, %62, %63, %64, %65 in 3 : vector<2x8x8x8xf32>, vector<2x8x8x8xf32>, vector<2x8x8x8xf32>, vector<2x8x8x8xf32>, vector<2x8x8x8xf32>, vector<2x8x8x8xf32>, vector<2x8x8x8xf32>, vector<2x8x8x8xf32>, vector<2x8x8x8xf32> -> vector<2x8x8x72xf32>
    %67 = vector.shape_cast %66 : vector<2x8x8x72xf32> to vector<128x72xf32>
    %68 = arith.truncf %67 : vector<128x72xf32> to vector<128x72xbf16>
    %c0_77 = arith.constant 0 : index
    %c0_78 = arith.constant 0 : index
    %69 = vector.load %arg7[%c0_77, %c0_78] : memref<72x8xbf16, #tpu.memory_space<vmem>>, vector<72x8xbf16>
    %cst_79 = arith.constant dense<0.000000e+00> : vector<128x8xf32>
    %70 = tpu.matmul %68, %69, %cst_79 {dimension_numbers = #tpu.dot_dimension_numbers<[1], [0], [0], [1], [0, 0, 1, 1], [], []>} : vector<128x72xbf16>, vector<72x8xbf16>, vector<128x8xf32> -> vector<128x8xf32>
    %c0_80 = arith.constant 0 : index
    %c0_81 = arith.constant 0 : index
    %71 = vector.load %arg8[%c0_80, %c0_81] : memref<1x8xf32, #tpu.memory_space<vmem>>, vector<1x8xf32>
    %72 = vector.broadcast %71 : vector<1x8xf32> to vector<128x8xf32>
    %73 = arith.addf %70, %72 : vector<128x8xf32>
    %cst_82 = arith.constant 0.000000e+00 : f32
    %74 = vector.broadcast %cst_82 : f32 to vector<128x8xf32>
    %75 = arith.maximumf %73, %74 : vector<128x8xf32>
    %76 = vector.shape_cast %75 : vector<128x8xf32> to vector<2x8x8x8xf32>
    %c0_83 = arith.constant 0 : index
    %c0_84 = arith.constant 0 : index
    %c0_85 = arith.constant 0 : index
    %c0_86 = arith.constant 0 : index
    %77 = vector.load %arg9[%c0_83, %c0_84, %c0_85, %c0_86] : memref<2x8x8x8xf32, #tpu.memory_space<vmem>>, vector<2x8x8x8xf32>
    tpu.vector_store %arg9[%c0_83, %c0_84, %c0_85, %c0_86], %76 {strides = array<i32>} : memref<2x8x8x8xf32, #tpu.memory_space<vmem>>, vector<2x8x8x8xf32>,
    %cst_87 = arith.constant dense<0.000000e+00> : vector<8xf32>
    %78 = vector.multi_reduction <add>, %75, %cst_87 [0] : vector<128x8xf32> to vector<8xf32>
    %79 = vector.shape_cast %78 : vector<8xf32> to vector<1x8xf32>
    %80 = arith.mulf %75, %75 : vector<128x8xf32>
    %cst_88 = arith.constant dense<0.000000e+00> : vector<8xf32>
    %81 = vector.multi_reduction <add>, %80, %cst_88 [0] : vector<128x8xf32> to vector<8xf32>
    %82 = vector.shape_cast %81 : vector<8xf32> to vector<1x8xf32>
    %83 = tpu.concatenate %79, %82 in 0 : vector<1x8xf32>, vector<1x8xf32> -> vector<2x8xf32>
    %84 = vector.shape_cast %83 : vector<2x8xf32> to vector<1x2x8xf32>
    %c0_89 = arith.constant 0 : index
    %c0_90 = arith.constant 0 : index
    %c0_91 = arith.constant 0 : index
    %85 = vector.load %arg10[%c0_89, %c0_90, %c0_91] : memref<1x2x8xf32, #tpu.memory_space<vmem>>, vector<1x2x8xf32>
    tpu.vector_store %arg10[%c0_89, %c0_90, %c0_91], %84 {strides = array<i32>} : memref<1x2x8xf32, #tpu.memory_space<vmem>>, vector<1x2x8xf32>,
    return
  }
  func.func @transform_0(%arg0: i32) -> (i32, i32, i32, i32) {
    %c0_i32 = arith.constant 0 : i32
    %c0_i32_0 = arith.constant 0 : i32
    %c0_i32_1 = arith.constant 0 : i32
    %c0_i32_2 = arith.constant 0 : i32
    return %c0_i32, %arg0, %c0_i32_0, %c0_i32_1 : i32, i32, i32, i32
  }
  func.func @transform_1(%arg0: i32) -> (i32, i32, i32, i32) {
    %c8_i32 = arith.constant 8 : i32
    %0 = arith.muli %arg0, %c8_i32 : i32
    %c1_i32 = arith.constant 1 : i32
    %1 = arith.subi %0, %c1_i32 : i32
    %c0_i32 = arith.constant 0 : i32
    %2 = arith.maxsi %1, %c0_i32 : i32
    %c0_i32_0 = arith.constant 0 : i32
    %c0_i32_1 = arith.constant 0 : i32
    %c0_i32_2 = arith.constant 0 : i32
    %c0_i32_3 = arith.constant 0 : i32
    return %c0_i32_0, %2, %c0_i32_1, %c0_i32_2 : i32, i32, i32, i32
  }
  func.func @transform_2(%arg0: i32) -> (i32, i32, i32, i32) {
    %c1_i32 = arith.constant 1 : i32
    %0 = arith.addi %arg0, %c1_i32 : i32
    %c8_i32 = arith.constant 8 : i32
    %1 = arith.muli %0, %c8_i32 : i32
    %c7_i32 = arith.constant 7 : i32
    %2 = arith.minsi %1, %c7_i32 : i32
    %c0_i32 = arith.constant 0 : i32
    %c0_i32_0 = arith.constant 0 : i32
    %c0_i32_1 = arith.constant 0 : i32
    %c0_i32_2 = arith.constant 0 : i32
    return %c0_i32, %2, %c0_i32_0, %c0_i32_1 : i32, i32, i32, i32
  }
  func.func @transform_3(%arg0: i32) -> (i32, i32, i32) {
    %c0_i32 = arith.constant 0 : i32
    %c0_i32_0 = arith.constant 0 : i32
    %c0_i32_1 = arith.constant 0 : i32
    %c0_i32_2 = arith.constant 0 : i32
    return %c0_i32, %c0_i32_0, %c0_i32_1 : i32, i32, i32
  }
  func.func @transform_4(%arg0: i32) -> (i32, i32) {
    %c0_i32 = arith.constant 0 : i32
    %c0_i32_0 = arith.constant 0 : i32
    %c0_i32_1 = arith.constant 0 : i32
    return %c0_i32, %c0_i32_0 : i32, i32
  }
  func.func @transform_5(%arg0: i32) -> (i32, i32) {
    %c0_i32 = arith.constant 0 : i32
    %c0_i32_0 = arith.constant 0 : i32
    %c0_i32_1 = arith.constant 0 : i32
    return %c0_i32, %c0_i32_0 : i32, i32
  }
  func.func @transform_6(%arg0: i32) -> (i32, i32) {
    %c0_i32 = arith.constant 0 : i32
    %c0_i32_0 = arith.constant 0 : i32
    %c0_i32_1 = arith.constant 0 : i32
    return %c0_i32, %c0_i32_0 : i32, i32
  }
  func.func @transform_7(%arg0: i32) -> (i32, i32) {
    %c0_i32 = arith.constant 0 : i32
    %c0_i32_0 = arith.constant 0 : i32
    %c0_i32_1 = arith.constant 0 : i32
    return %c0_i32, %c0_i32_0 : i32, i32
  }
  func.func @transform_8(%arg0: i32) -> (i32, i32, i32, i32) {
    %c0_i32 = arith.constant 0 : i32
    %c0_i32_0 = arith.constant 0 : i32
    %c0_i32_1 = arith.constant 0 : i32
    %c0_i32_2 = arith.constant 0 : i32
    return %c0_i32, %arg0, %c0_i32_0, %c0_i32_1 : i32, i32, i32, i32
  }
  func.func @transform_9(%arg0: i32) -> (i32, i32, i32) {
    %c0_i32 = arith.constant 0 : i32
    %c0_i32_0 = arith.constant 0 : i32
    %c0_i32_1 = arith.constant 0 : i32
    return %arg0, %c0_i32, %c0_i32_0 : i32, i32, i32
  }
}

module attributes {stable_mosaic.version = 11 : i64} {
  func.func @_conv_relu_stats_kernel(%arg0: i32, %arg1: memref<2x16x8x8xf32, #tpu.memory_space<vmem>>, %arg2: memref<2x2x8x8xf32, #tpu.memory_space<vmem>>, %arg3: memref<2x2x8x8xf32, #tpu.memory_space<vmem>>, %arg4: memref<36x8xbf16, #tpu.memory_space<vmem>>, %arg5: memref<1x8xf32, #tpu.memory_space<vmem>>, %arg6: memref<2x8x8x8xf32, #tpu.memory_space<vmem>>, %arg7: memref<1x2x8xf32, #tpu.memory_space<vmem>>, %arg8: memref<2x10x10x4xf32, #tpu.memory_space<vmem>>) attributes {dimension_semantics = [#tpu.dimension_semantics<parallel>], iteration_bounds = array<i64: 1>, scalar_prefetch = 0 : i64, scratch_operands = 1 : i64, tpu.core_type = #tpu.core_type<tc>, window_params = [{transform_indices = @transform_0, window_bounds = array<i64: 2, 16, 8, 8>}, {transform_indices = @transform_1, window_bounds = array<i64: 2, 2, 8, 8>}, {transform_indices = @transform_2, window_bounds = array<i64: 2, 2, 8, 8>}, {pipeline_mode = #tpu.pipeline_mode<synchronous>, transform_indices = @transform_3, window_bounds = array<i64: 36, 8>}, {pipeline_mode = #tpu.pipeline_mode<synchronous>, transform_indices = @transform_4, window_bounds = array<i64: 1, 8>}, {transform_indices = @transform_5, window_bounds = array<i64: 2, 8, 8, 8>}, {transform_indices = @transform_6, window_bounds = array<i64: 1, 2, 8>}]} {
    %cst = arith.constant 0.000000e+00 : f32
    %0 = vector.broadcast %cst : f32 to vector<2x10x1x4xf32>
    %c0 = arith.constant 0 : index
    %c0_0 = arith.constant 0 : index
    %c0_1 = arith.constant 0 : index
    %c0_2 = arith.constant 0 : index
    %1 = vector.load %arg8[%c0, %c0_0, %c0_1, %c0_2] : memref<2x10x10x4xf32, #tpu.memory_space<vmem>>, vector<2x10x1x4xf32>
    tpu.vector_store %arg8[%c0, %c0_0, %c0_1, %c0_2], %0 {strides = array<i32>} : memref<2x10x10x4xf32, #tpu.memory_space<vmem>>, vector<2x10x1x4xf32>,
    %c0_3 = arith.constant 0 : index
    %c0_4 = arith.constant 0 : index
    %c9 = arith.constant 9 : index
    %c0_5 = arith.constant 0 : index
    %2 = vector.load %arg8[%c0_3, %c0_4, %c9, %c0_5] : memref<2x10x10x4xf32, #tpu.memory_space<vmem>>, vector<2x10x1x4xf32>
    tpu.vector_store %arg8[%c0_3, %c0_4, %c9, %c0_5], %0 {strides = array<i32>} : memref<2x10x10x4xf32, #tpu.memory_space<vmem>>, vector<2x10x1x4xf32>,
    %c0_6 = arith.constant 0 : index
    %c0_7 = arith.constant 0 : index
    %c0_8 = arith.constant 0 : index
    %c0_9 = arith.constant 0 : index
    %3 = vector.load %arg1[%c0_6, %c0_7, %c0_8, %c0_9] : memref<2x16x8x8xf32, #tpu.memory_space<vmem>>, vector<2x16x8x8xf32>
    %4 = vector.shape_cast %3 : vector<2x16x8x8xf32> to vector<2x8x2x8x8xf32>
    %cst_10 = arith.constant dense<0xFF800000> : vector<2x8x8x8xf32>
    %5 = vector.multi_reduction <maximumf>, %4, %cst_10 [2] : vector<2x8x2x8x8xf32> to vector<2x8x8x8xf32>
    %6 = vector.extract_strided_slice %5 {offsets = [0, 0, 0, 0], sizes = [2, 8, 8, 4], strides = [1, 1, 1, 1]} : vector<2x8x8x8xf32> to vector<2x8x8x4xf32>
    %7 = vector.extract_strided_slice %5 {offsets = [0, 0, 0, 4], sizes = [2, 8, 8, 4], strides = [1, 1, 1, 1]} : vector<2x8x8x8xf32> to vector<2x8x8x4xf32>
    %8 = arith.maximumf %6, %7 : vector<2x8x8x4xf32>
    %c0_11 = arith.constant 0 : index
    %c1 = arith.constant 1 : index
    %c1_12 = arith.constant 1 : index
    %c0_13 = arith.constant 0 : index
    %9 = vector.load %arg8[%c0_11, %c1, %c1_12, %c0_13] : memref<2x10x10x4xf32, #tpu.memory_space<vmem>>, vector<2x8x8x4xf32>
    tpu.vector_store %arg8[%c0_11, %c1, %c1_12, %c0_13], %8 {strides = array<i32>} : memref<2x10x10x4xf32, #tpu.memory_space<vmem>>, vector<2x8x8x4xf32>,
    %c0_i32 = arith.constant 0 : i32
    %10 = arith.cmpi sgt, %arg0, %c0_i32 : i32
    %11 = arith.extui %10 : i1 to i32
    %12 = arith.sitofp %11 : i32 to f32
    %c0_i32_14 = arith.constant 0 : i32
    %13 = arith.cmpi slt, %arg0, %c0_i32_14 : i32
    %14 = arith.extui %13 : i1 to i32
    %15 = arith.sitofp %14 : i32 to f32
    %c0_15 = arith.constant 0 : index
    %c0_16 = arith.constant 0 : index
    %c0_17 = arith.constant 0 : index
    %c0_18 = arith.constant 0 : index
    %16 = vector.load %arg2[%c0_15, %c0_16, %c0_17, %c0_18] : memref<2x2x8x8xf32, #tpu.memory_space<vmem>>, vector<2x2x8x8xf32>
    %17 = vector.shape_cast %16 : vector<2x2x8x8xf32> to vector<2x1x2x8x8xf32>
    %cst_19 = arith.constant dense<0xFF800000> : vector<2x1x8x8xf32>
    %18 = vector.multi_reduction <maximumf>, %17, %cst_19 [2] : vector<2x1x2x8x8xf32> to vector<2x1x8x8xf32>
    %19 = vector.extract_strided_slice %18 {offsets = [0, 0, 0, 0], sizes = [2, 1, 8, 4], strides = [1, 1, 1, 1]} : vector<2x1x8x8xf32> to vector<2x1x8x4xf32>
    %20 = vector.extract_strided_slice %18 {offsets = [0, 0, 0, 4], sizes = [2, 1, 8, 4], strides = [1, 1, 1, 1]} : vector<2x1x8x8xf32> to vector<2x1x8x4xf32>
    %21 = arith.maximumf %19, %20 : vector<2x1x8x4xf32>
    %22 = vector.broadcast %12 : f32 to vector<2x1x8x4xf32>
    %23 = arith.mulf %21, %22 : vector<2x1x8x4xf32>
    %c0_20 = arith.constant 0 : index
    %c0_21 = arith.constant 0 : index
    %c1_22 = arith.constant 1 : index
    %c0_23 = arith.constant 0 : index
    %24 = vector.load %arg8[%c0_20, %c0_21, %c1_22, %c0_23] : memref<2x10x10x4xf32, #tpu.memory_space<vmem>>, vector<2x1x8x4xf32>
    tpu.vector_store %arg8[%c0_20, %c0_21, %c1_22, %c0_23], %23 {strides = array<i32>} : memref<2x10x10x4xf32, #tpu.memory_space<vmem>>, vector<2x1x8x4xf32>,
    %c0_24 = arith.constant 0 : index
    %c0_25 = arith.constant 0 : index
    %c0_26 = arith.constant 0 : index
    %c0_27 = arith.constant 0 : index
    %25 = vector.load %arg3[%c0_24, %c0_25, %c0_26, %c0_27] : memref<2x2x8x8xf32, #tpu.memory_space<vmem>>, vector<2x2x8x8xf32>
    %26 = vector.shape_cast %25 : vector<2x2x8x8xf32> to vector<2x1x2x8x8xf32>
    %cst_28 = arith.constant dense<0xFF800000> : vector<2x1x8x8xf32>
    %27 = vector.multi_reduction <maximumf>, %26, %cst_28 [2] : vector<2x1x2x8x8xf32> to vector<2x1x8x8xf32>
    %28 = vector.extract_strided_slice %27 {offsets = [0, 0, 0, 0], sizes = [2, 1, 8, 4], strides = [1, 1, 1, 1]} : vector<2x1x8x8xf32> to vector<2x1x8x4xf32>
    %29 = vector.extract_strided_slice %27 {offsets = [0, 0, 0, 4], sizes = [2, 1, 8, 4], strides = [1, 1, 1, 1]} : vector<2x1x8x8xf32> to vector<2x1x8x4xf32>
    %30 = arith.maximumf %28, %29 : vector<2x1x8x4xf32>
    %31 = vector.broadcast %15 : f32 to vector<2x1x8x4xf32>
    %32 = arith.mulf %30, %31 : vector<2x1x8x4xf32>
    %c0_29 = arith.constant 0 : index
    %c9_30 = arith.constant 9 : index
    %c1_31 = arith.constant 1 : index
    %c0_32 = arith.constant 0 : index
    %33 = vector.load %arg8[%c0_29, %c9_30, %c1_31, %c0_32] : memref<2x10x10x4xf32, #tpu.memory_space<vmem>>, vector<2x1x8x4xf32>
    tpu.vector_store %arg8[%c0_29, %c9_30, %c1_31, %c0_32], %32 {strides = array<i32>} : memref<2x10x10x4xf32, #tpu.memory_space<vmem>>, vector<2x1x8x4xf32>,
    %c0_33 = arith.constant 0 : index
    %c0_34 = arith.constant 0 : index
    %c0_35 = arith.constant 0 : index
    %c0_36 = arith.constant 0 : index
    %34 = vector.load %arg8[%c0_33, %c0_34, %c0_35, %c0_36] : memref<2x10x10x4xf32, #tpu.memory_space<vmem>>, vector<2x8x8x4xf32>
    %c0_37 = arith.constant 0 : index
    %c0_38 = arith.constant 0 : index
    %c1_39 = arith.constant 1 : index
    %c0_40 = arith.constant 0 : index
    %35 = vector.load %arg8[%c0_37, %c0_38, %c1_39, %c0_40] : memref<2x10x10x4xf32, #tpu.memory_space<vmem>>, vector<2x8x8x4xf32>
    %c0_41 = arith.constant 0 : index
    %c0_42 = arith.constant 0 : index
    %c2 = arith.constant 2 : index
    %c0_43 = arith.constant 0 : index
    %36 = vector.load %arg8[%c0_41, %c0_42, %c2, %c0_43] : memref<2x10x10x4xf32, #tpu.memory_space<vmem>>, vector<2x8x8x4xf32>
    %c0_44 = arith.constant 0 : index
    %c1_45 = arith.constant 1 : index
    %c0_46 = arith.constant 0 : index
    %c0_47 = arith.constant 0 : index
    %37 = vector.load %arg8[%c0_44, %c1_45, %c0_46, %c0_47] : memref<2x10x10x4xf32, #tpu.memory_space<vmem>>, vector<2x8x8x4xf32>
    %c0_48 = arith.constant 0 : index
    %c1_49 = arith.constant 1 : index
    %c1_50 = arith.constant 1 : index
    %c0_51 = arith.constant 0 : index
    %38 = vector.load %arg8[%c0_48, %c1_49, %c1_50, %c0_51] : memref<2x10x10x4xf32, #tpu.memory_space<vmem>>, vector<2x8x8x4xf32>
    %c0_52 = arith.constant 0 : index
    %c1_53 = arith.constant 1 : index
    %c2_54 = arith.constant 2 : index
    %c0_55 = arith.constant 0 : index
    %39 = vector.load %arg8[%c0_52, %c1_53, %c2_54, %c0_55] : memref<2x10x10x4xf32, #tpu.memory_space<vmem>>, vector<2x8x8x4xf32>
    %c0_56 = arith.constant 0 : index
    %c2_57 = arith.constant 2 : index
    %c0_58 = arith.constant 0 : index
    %c0_59 = arith.constant 0 : index
    %40 = vector.load %arg8[%c0_56, %c2_57, %c0_58, %c0_59] : memref<2x10x10x4xf32, #tpu.memory_space<vmem>>, vector<2x8x8x4xf32>
    %c0_60 = arith.constant 0 : index
    %c2_61 = arith.constant 2 : index
    %c1_62 = arith.constant 1 : index
    %c0_63 = arith.constant 0 : index
    %41 = vector.load %arg8[%c0_60, %c2_61, %c1_62, %c0_63] : memref<2x10x10x4xf32, #tpu.memory_space<vmem>>, vector<2x8x8x4xf32>
    %c0_64 = arith.constant 0 : index
    %c2_65 = arith.constant 2 : index
    %c2_66 = arith.constant 2 : index
    %c0_67 = arith.constant 0 : index
    %42 = vector.load %arg8[%c0_64, %c2_65, %c2_66, %c0_67] : memref<2x10x10x4xf32, #tpu.memory_space<vmem>>, vector<2x8x8x4xf32>
    %43 = tpu.concatenate %34, %35, %36, %37, %38, %39, %40, %41, %42 in 3 : vector<2x8x8x4xf32>, vector<2x8x8x4xf32>, vector<2x8x8x4xf32>, vector<2x8x8x4xf32>, vector<2x8x8x4xf32>, vector<2x8x8x4xf32>, vector<2x8x8x4xf32>, vector<2x8x8x4xf32>, vector<2x8x8x4xf32> -> vector<2x8x8x36xf32>
    %44 = vector.shape_cast %43 : vector<2x8x8x36xf32> to vector<128x36xf32>
    %45 = arith.truncf %44 : vector<128x36xf32> to vector<128x36xbf16>
    %c0_68 = arith.constant 0 : index
    %c0_69 = arith.constant 0 : index
    %46 = vector.load %arg4[%c0_68, %c0_69] : memref<36x8xbf16, #tpu.memory_space<vmem>>, vector<36x8xbf16>
    %cst_70 = arith.constant dense<0.000000e+00> : vector<128x8xf32>
    %47 = tpu.matmul %45, %46, %cst_70 {dimension_numbers = #tpu.dot_dimension_numbers<[1], [0], [0], [1], [0, 0, 1, 1], [], []>} : vector<128x36xbf16>, vector<36x8xbf16>, vector<128x8xf32> -> vector<128x8xf32>
    %c0_71 = arith.constant 0 : index
    %c0_72 = arith.constant 0 : index
    %48 = vector.load %arg5[%c0_71, %c0_72] : memref<1x8xf32, #tpu.memory_space<vmem>>, vector<1x8xf32>
    %49 = vector.broadcast %48 : vector<1x8xf32> to vector<128x8xf32>
    %50 = arith.addf %47, %49 : vector<128x8xf32>
    %cst_73 = arith.constant 0.000000e+00 : f32
    %51 = vector.broadcast %cst_73 : f32 to vector<128x8xf32>
    %52 = arith.maximumf %50, %51 : vector<128x8xf32>
    %53 = vector.shape_cast %52 : vector<128x8xf32> to vector<2x8x8x8xf32>
    %c0_74 = arith.constant 0 : index
    %c0_75 = arith.constant 0 : index
    %c0_76 = arith.constant 0 : index
    %c0_77 = arith.constant 0 : index
    %54 = vector.load %arg6[%c0_74, %c0_75, %c0_76, %c0_77] : memref<2x8x8x8xf32, #tpu.memory_space<vmem>>, vector<2x8x8x8xf32>
    tpu.vector_store %arg6[%c0_74, %c0_75, %c0_76, %c0_77], %53 {strides = array<i32>} : memref<2x8x8x8xf32, #tpu.memory_space<vmem>>, vector<2x8x8x8xf32>,
    %cst_78 = arith.constant dense<0.000000e+00> : vector<8xf32>
    %55 = vector.multi_reduction <add>, %52, %cst_78 [0] : vector<128x8xf32> to vector<8xf32>
    %56 = vector.shape_cast %55 : vector<8xf32> to vector<1x8xf32>
    %57 = arith.mulf %52, %52 : vector<128x8xf32>
    %cst_79 = arith.constant dense<0.000000e+00> : vector<8xf32>
    %58 = vector.multi_reduction <add>, %57, %cst_79 [0] : vector<128x8xf32> to vector<8xf32>
    %59 = vector.shape_cast %58 : vector<8xf32> to vector<1x8xf32>
    %60 = tpu.concatenate %56, %59 in 0 : vector<1x8xf32>, vector<1x8xf32> -> vector<2x8xf32>
    %61 = vector.shape_cast %60 : vector<2x8xf32> to vector<1x2x8xf32>
    %c0_80 = arith.constant 0 : index
    %c0_81 = arith.constant 0 : index
    %c0_82 = arith.constant 0 : index
    %62 = vector.load %arg7[%c0_80, %c0_81, %c0_82] : memref<1x2x8xf32, #tpu.memory_space<vmem>>, vector<1x2x8xf32>
    tpu.vector_store %arg7[%c0_80, %c0_81, %c0_82], %61 {strides = array<i32>} : memref<1x2x8xf32, #tpu.memory_space<vmem>>, vector<1x2x8xf32>,
    return
  }
  func.func @transform_0(%arg0: i32) -> (i32, i32, i32, i32) {
    %c0_i32 = arith.constant 0 : i32
    %c0_i32_0 = arith.constant 0 : i32
    %c0_i32_1 = arith.constant 0 : i32
    %c0_i32_2 = arith.constant 0 : i32
    return %c0_i32, %arg0, %c0_i32_0, %c0_i32_1 : i32, i32, i32, i32
  }
  func.func @transform_1(%arg0: i32) -> (i32, i32, i32, i32) {
    %c8_i32 = arith.constant 8 : i32
    %0 = arith.muli %arg0, %c8_i32 : i32
    %c1_i32 = arith.constant 1 : i32
    %1 = arith.subi %0, %c1_i32 : i32
    %c0_i32 = arith.constant 0 : i32
    %2 = arith.maxsi %1, %c0_i32 : i32
    %c0_i32_0 = arith.constant 0 : i32
    %c0_i32_1 = arith.constant 0 : i32
    %c0_i32_2 = arith.constant 0 : i32
    %c0_i32_3 = arith.constant 0 : i32
    return %c0_i32_0, %2, %c0_i32_1, %c0_i32_2 : i32, i32, i32, i32
  }
  func.func @transform_2(%arg0: i32) -> (i32, i32, i32, i32) {
    %c1_i32 = arith.constant 1 : i32
    %0 = arith.addi %arg0, %c1_i32 : i32
    %c8_i32 = arith.constant 8 : i32
    %1 = arith.muli %0, %c8_i32 : i32
    %c7_i32 = arith.constant 7 : i32
    %2 = arith.minsi %1, %c7_i32 : i32
    %c0_i32 = arith.constant 0 : i32
    %c0_i32_0 = arith.constant 0 : i32
    %c0_i32_1 = arith.constant 0 : i32
    %c0_i32_2 = arith.constant 0 : i32
    return %c0_i32, %2, %c0_i32_0, %c0_i32_1 : i32, i32, i32, i32
  }
  func.func @transform_3(%arg0: i32) -> (i32, i32) {
    %c0_i32 = arith.constant 0 : i32
    %c0_i32_0 = arith.constant 0 : i32
    %c0_i32_1 = arith.constant 0 : i32
    return %c0_i32, %c0_i32_0 : i32, i32
  }
  func.func @transform_4(%arg0: i32) -> (i32, i32) {
    %c0_i32 = arith.constant 0 : i32
    %c0_i32_0 = arith.constant 0 : i32
    %c0_i32_1 = arith.constant 0 : i32
    return %c0_i32, %c0_i32_0 : i32, i32
  }
  func.func @transform_5(%arg0: i32) -> (i32, i32, i32, i32) {
    %c0_i32 = arith.constant 0 : i32
    %c0_i32_0 = arith.constant 0 : i32
    %c0_i32_1 = arith.constant 0 : i32
    %c0_i32_2 = arith.constant 0 : i32
    return %c0_i32, %arg0, %c0_i32_0, %c0_i32_1 : i32, i32, i32, i32
  }
  func.func @transform_6(%arg0: i32) -> (i32, i32, i32) {
    %c0_i32 = arith.constant 0 : i32
    %c0_i32_0 = arith.constant 0 : i32
    %c0_i32_1 = arith.constant 0 : i32
    return %arg0, %c0_i32, %c0_i32_0 : i32, i32, i32
  }
}

</mosaic_0001>

<llo_original>
// kernel: down_conv.5
$region0: #{down_conv.5}
  #allocation0 [shape = 'u32[]', space=smem, size = 0x4, offset = 0x4, fixed_abs, tag = 'smem constant byte address 0x4 - core index']
  #allocation1 [shape = 'u32[72,128]{1,0:T(1,128)}', space=vmem, size = 0x9000, scoped, tag = 'internal scratch']
  %s0 = inlined_call_operand.vmem [shape: f32[2,8,8,8], index: 0, kind: input, shape index: {}]
  %s1 = inlined_call_operand.vmem [shape: f32[1,2,8], index: 1, kind: input, shape index: {}]
  %s2 = inlined_call_operand.vmem [shape: f32[1,8], index: 2, kind: input, shape index: {}]
  %s3 = inlined_call_operand.vmem [shape: f32[1,8], index: 3, kind: input, shape index: {}]
  %s4 = inlined_call_operand.vmem [shape: f32[2,8,8,8], index: 4, kind: output, shape index: {}]
  %s5 = sld [smem:[#allocation0]]
  $region26: #{down_conv.5} parent=0
    _
  %s7 = ssub.s32 1, %s5
  %s8 = scalar_select 0, %s7, %s5
  // Predicated region
  $region2: #{down_conv.5} parent=0 // pred_check
    _
  $region3: #{down_conv.5} parent=0 // pred_check_branch
    %10 = sbr.rel (0) target = $region5
  $region4: #{down_conv.5} parent=0 // pred_region
    _
  $region5: #{down_conv.5} parent=0 // pred_fallthru
    _
  // Predicated region
  $region6: #{down_conv.5} parent=0 // pred_check
    _
  $region7: #{down_conv.5} parent=0 // pred_check_branch
    %12 = sbr.rel (0) target = $region9
  $region8: #{down_conv.5} parent=0 // pred_region
    _
  $region9: #{down_conv.5} parent=0 // pred_fallthru
    _
  // Predicated region
  $region10: #{down_conv.5} parent=0 // pred_check
    _
  $region11: #{down_conv.5} parent=0 // pred_check_branch
    %14 = sbr.rel (0) target = $region13
  $region12: #{down_conv.5} parent=0 // pred_region
    _
  $region13: #{down_conv.5} parent=0 // pred_fallthru
    _
  // Predicated region
  $region14: #{down_conv.5} parent=0 // pred_check
    _
  $region15: #{down_conv.5} parent=0 // pred_check_branch
    %16 = sbr.rel (0) target = $region17
  $region16: #{down_conv.5} parent=0 // pred_region
    _
  $region17: #{down_conv.5} parent=0 // pred_fallthru
    _
  %v17 = vld [vmem:[%s1] sm:$0x3]
  %v18 = vadd.f32 %v17, 0.0
  %v19 = vmul.f32 %v18, 0.0078125
  %v20 = vmul.f32 %v19, %v19
  %v22 = vrot.slane %v20, 7
  %v24 = vsub.f32 %v19, %v22
  %v25 = vmax.f32 %v24, 0.0
  %v26 = vld [vmem:[%s2] sm:$0x1]
  %v27 = vadd.f32 %v25, 1e-05
  %v28 = vrsqrt.pop %v27
  %v29 = vmul.f32 %v28, %v27
  %v30 = vmul.f32 %v29, %v28
  %v31 = vmul.f32 0.5, %v30
  %v32 = vsub.f32 1.5, %v31
  %v33 = vmul.f32 %v28, %v32
  %vm34 = vweird.f32 %v27
  %vm35 = vweird.f32 %v28
  %vm36 = vmor %vm34, %vm35
  %v37 = vsel %vm36, %v28, %v33
  %39 = vst [vmem:[#allocation1] sm:$0xff] %v37
  %s40 = scalar_lea.vmem [#allocation1], 1
  %v41 = vld [vmem:[%s40] ss:$9 sm:$0xff]
  %v43 = vmul.f32 %v26, %v41
  %v44 = vld [vmem:[%s3] sm:$0x1]
  %v45 = vmul.f32 %v19, %v43
  %v46 = vsub.f32 %v44, %v45
  %v47 = vld [vmem:[%s0] sm:$0xff]
  %v48 = vld [vmem:[%s0 + $0x8] sm:$0xff]
  %v49 = vld [vmem:[%s0 + $0x10] sm:$0xff]
  %v50 = vld [vmem:[%s0 + $0x18] sm:$0xff]
  %v51 = vld [vmem:[%s0 + $0x20] sm:$0xff]
  %v52 = vld [vmem:[%s0 + $0x28] sm:$0xff]
  %v53 = vld [vmem:[%s0 + $0x30] sm:$0xff]
  %v54 = vld [vmem:[%s0 + $0x38] sm:$0xff]
  %v55 = vld [vmem:[%s0 + $0x40] sm:$0xff]
  %v56 = vld [vmem:[%s0 + $0x48] sm:$0xff]
  %v57 = vld [vmem:[%s0 + $0x50] sm:$0xff]
  %v58 = vld [vmem:[%s0 + $0x58] sm:$0xff]
  %v59 = vld [vmem:[%s0 + $0x60] sm:$0xff]
  %v60 = vld [vmem:[%s0 + $0x68] sm:$0xff]
  %v61 = vld [vmem:[%s0 + $0x70] sm:$0xff]
  %v62 = vld [vmem:[%s0 + $0x78] sm:$0xff]
  %v64 = vperm.slane %v43, 0
  %v66 = vmul.f32 %v47, %v64
  %v67 = vmul.f32 %v48, %v64
  %v68 = vmul.f32 %v49, %v64
  %v69 = vmul.f32 %v50, %v64
  %v70 = vmul.f32 %v51, %v64
  %v71 = vmul.f32 %v52, %v64
  %v72 = vmul.f32 %v53, %v64
  %v73 = vmul.f32 %v54, %v64
  %v74 = vmul.f32 %v55, %v64
  %v75 = vmul.f32 %v56, %v64
  %v76 = vmul.f32 %v57, %v64
  %v77 = vmul.f32 %v58, %v64
  %v78 = vmul.f32 %v59, %v64
  %v79 = vmul.f32 %v60, %v64
  %v80 = vmul.f32 %v61, %v64
  %v81 = vmul.f32 %v62, %v64
  %v83 = vperm.slane %v46, 0
  %v85 = vadd.f32 %v66, %v83
  %v86 = vadd.f32 %v67, %v83
  %v87 = vadd.f32 %v68, %v83
  %v88 = vadd.f32 %v69, %v83
  %v89 = vadd.f32 %v70, %v83
  %v90 = vadd.f32 %v71, %v83
  %v91 = vadd.f32 %v72, %v83
  %v92 = vadd.f32 %v73, %v83
  %v93 = vadd.f32 %v74, %v83
  %v94 = vadd.f32 %v75, %v83
  %v95 = vadd.f32 %v76, %v83
  %v96 = vadd.f32 %v77, %v83
  %v97 = vadd.f32 %v78, %v83
  %v98 = vadd.f32 %v79, %v83
  %v99 = vadd.f32 %v80, %v83
  %v100 = vadd.f32 %v81, %v83
  %vm101 = vcmask 64512
  %102 = vst.msk [vmem:[%s4] sm:$0xff] %vm101, %v85
  %103 = vst.msk [vmem:[%s4 + $0x8] sm:$0xff] %vm101, %v86
  %104 = vst.msk [vmem:[%s4 + $0x10] sm:$0xff] %vm101, %v87
  %105 = vst.msk [vmem:[%s4 + $0x18] sm:$0xff] %vm101, %v88
  %106 = vst.msk [vmem:[%s4 + $0x20] sm:$0xff] %vm101, %v89
  %107 = vst.msk [vmem:[%s4 + $0x28] sm:$0xff] %vm101, %v90
  %108 = vst.msk [vmem:[%s4 + $0x30] sm:$0xff] %vm101, %v91
  %109 = vst.msk [vmem:[%s4 + $0x38] sm:$0xff] %vm101, %v92
  %110 = vst.msk [vmem:[%s4 + $0x40] sm:$0xff] %vm101, %v93
  %111 = vst.msk [vmem:[%s4 + $0x48] sm:$0xff] %vm101, %v94
  %112 = vst.msk [vmem:[%s4 + $0x50] sm:$0xff] %vm101, %v95
  %113 = vst.msk [vmem:[%s4 + $0x58] sm:$0xff] %vm101, %v96
  %114 = vst.msk [vmem:[%s4 + $0x60] sm:$0xff] %vm101, %v97
  %115 = vst.msk [vmem:[%s4 + $0x68] sm:$0xff] %vm101, %v98
  %116 = vst.msk [vmem:[%s4 + $0x70] sm:$0xff] %vm101, %v99
  %117 = vst.msk [vmem:[%s4 + $0x78] sm:$0xff] %vm101, %v100
  // Predicated region
  $region18: #{down_conv.5} parent=0 // pred_check
    _
  $region19: #{down_conv.5} parent=0 // pred_check_branch
    %119 = sbr.rel (0) target = $region21
  $region20: #{down_conv.5} parent=0 // pred_region
    _
  $region21: #{down_conv.5} parent=0 // pred_fallthru
    _
  // Predicated region
  $region22: #{down_conv.5} parent=0 // pred_check
    _
  $region23: #{down_conv.5} parent=0 // pred_check_branch
    %121 = sbr.rel (0) target = $region25
  $region24: #{down_conv.5} parent=0 // pred_region
    _
  $region25: #{down_conv.5} parent=0 // pred_fallthru
    _

// kernel: down_conv.4
$region0: #{down_conv.4}
  #allocation0 [shape = 'u32[]', space=smem, size = 0x4, offset = 0x4, fixed_abs, tag = 'smem constant byte address 0x4 - core index']
  #allocation1 [shape = 'u32[72,128]{1,0:T(1,128)}', space=vmem, size = 0x9000, scoped, tag = 'internal scratch']
  #allocation2 [shape = 'f32[2,10,10,8]{3,2,1,0:T(8,128)}', space=vmem, size = 0x28000, scoped, tag = 'scratch operand']
  %s0 = inlined_call_operand.vmem [shape: f32[2,8,8,8], index: 0, kind: input, shape index: {}, may-alias: {0,1,2}]
  %s1 = inlined_call_operand.vmem [shape: f32[2,8,8,8], index: 1, kind: input, shape index: {}, may-alias: {0,1,2}]
  %s2 = inlined_call_operand.vmem [shape: f32[2,8,8,8], index: 2, kind: input, shape index: {}, may-alias: {0,1,2}]
  %s3 = inlined_call_operand.vmem [shape: f32[1,2,8], index: 3, kind: input, shape index: {}]
  %s4 = inlined_call_operand.vmem [shape: f32[1,8], index: 4, kind: input, shape index: {}]
  %s5 = inlined_call_operand.vmem [shape: f32[1,8], index: 5, kind: input, shape index: {}]
  %s6 = inlined_call_operand.vmem [shape: bf16[72,8], index: 6, kind: input, shape index: {}]
  %s7 = inlined_call_operand.vmem [shape: f32[1,8], index: 7, kind: input, shape index: {}]
  %s8 = inlined_call_operand.vmem [shape: f32[2,8,8,8], index: 8, kind: output, shape index: {0}]
  %s9 = inlined_call_operand.vmem [shape: f32[1,2,8], index: 9, kind: output, shape index: {1}]
  %10 = xla_tuple %s8, %s9
  %s11 = sld [smem:[#allocation0]]
  $region126: #{down_conv.4} parent=0
    _
  %s13 = ssub.s32 1, %s11
  %s14 = scalar_select 0, %s13, %s11
  $region1: #{down_conv.4} parent=0
    #allocation3 [shape = 'u8[8192]{0}', space=vmem, size = 0x2000, scoped, tag = 'input window, operand 1, single buffered']
    #allocation4 [shape = 'u8[8192]{0}', space=vmem, size = 0x2000, scoped, tag = 'input window, operand 2, single buffered']
    // Predicated region
    $region2: #{down_conv.4} parent=1 // pred_check
      _
    $region3: #{down_conv.4} parent=1 // pred_check_branch
      %16 = sbr.rel (0) target = $region5
    $region4: #{down_conv.4} parent=1 // pred_region
      _
    $region5: #{down_conv.4} parent=1 // pred_fallthru
      _
    // Predicated region
    $region6: #{down_conv.4} parent=1 // pred_check
      _
    $region7: #{down_conv.4} parent=1 // pred_check_branch
      %18 = sbr.rel (0) target = $region9
    $region8: #{down_conv.4} parent=1 // pred_region
      %s19 = smul.u32 0, 8
      %s20 = ssub.s32 %s19, 1
      %p21 = scmp.gt.s32.totalorder %s20, 0
      %s22 = scalar_select %p21, %s20, 0
      %s23 = smul.addr %s22, 8
      %s24 = scalar_lea.vmem %s1, %s23
      // Predicated region
      $region10: #{down_conv.4} parent=8 // pred_check
        _
      $region11: #{down_conv.4} parent=8 // pred_check_branch
        %26 = sbr.rel (0) target = $region13
      $region12: #{down_conv.4} parent=8 // pred_region
        // Predicated region
        $region14: #{down_conv.4} parent=12 // pred_check
          _
        $region15: #{down_conv.4} parent=12 // pred_check_branch
          %28 = sbr.rel (0) target = $region17
        $region16: #{down_conv.4} parent=12 // pred_region
          // Predicated region
          $region29: #{down_conv.4} parent=16 // pred_check
            _
          $region30: #{down_conv.4} parent=16 // pred_check_branch
            %46 = sbr.rel (0) target = $region32
          $region31: #{down_conv.4} parent=16 // pred_region
            loop: start=0, step=1, limit=1
            $region33: #{down_conv.4} parent=31 // loop_pre_header
              _
            $region34: #{down_conv.4} parent=31 // loop_header
              %s48 = sphi 0, %s52
              %p49 = scmp.ge.s32.totalorder %s48, 1
              %s53 = sphi %s24, %s24
              %s54 = sphi [#allocation3], [#allocation3]
            $region35: #{down_conv.4} parent=31 // loop_header_branch
              %51 = sbr.rel (%p49) target = $region39
            $region36: #{down_conv.4} parent=31 // loop_body
              %v55 = vld [vmem:[%s53] sm:$0xff]
              %56 = vst [vmem:[%s54] sm:$0xff] %v55
              %v57 = vld [vmem:[%s53 + $0x40] sm:$0xff]
              %58 = vst [vmem:[%s54 + $0x8] sm:$0xff] %v57
            $region37: #{down_conv.4} parent=31 // loop_footer
              %s52 = sadd.s32 1, %s48
            $region38: #{down_conv.4} parent=31 // loop_footer_branch
              %47 = sbr.rel target = $region34
            $region39: #{down_conv.4} parent=31 // loop_exit
              _
          $region32: #{down_conv.4} parent=16 // pred_fallthru
            _
          // Predicated region
          $region40: #{down_conv.4} parent=16 // pred_check
            _
          $region41: #{down_conv.4} parent=16 // pred_check_branch
            %60 = sbr.rel target = $region43
          $region42: #{down_conv.4} parent=16 // pred_region
            _
          $region43: #{down_conv.4} parent=16 // pred_fallthru
            _
        $region17: #{down_conv.4} parent=12 // pred_fallthru
          _
        // Predicated region
        $region18: #{down_conv.4} parent=12 // pred_check
          _
        $region19: #{down_conv.4} parent=12 // pred_check_branch
          %30 = sbr.rel target = $region21
        $region20: #{down_conv.4} parent=12 // pred_region
          %s32 = ssub.s32 256, 1
          loop: start=0, step=1, limit=1
          $region22: #{down_conv.4} parent=20 // loop_pre_header
            _
          $region23: #{down_conv.4} parent=20 // loop_header
            %s34 = sphi 0, %s38
            %p35 = scmp.ge.s32.totalorder %s34, 1
            %s39 = sphi %s24, %s24
            %s40 = sphi [#allocation3], [#allocation3]
          $region24: #{down_conv.4} parent=20 // loop_header_branch
            %37 = sbr.rel (%p35) target = $region28
          $region25: #{down_conv.4} parent=20 // loop_body
            %v41 = vld [vmem:[%s39] sm:%s32]
            %42 = vst [vmem:[%s40] sm:%s32] %v41
            %v43 = vld [vmem:[%s39 + $0x40] sm:%s32]
            %44 = vst [vmem:[%s40 + $0x8] sm:%s32] %v43
          $region26: #{down_conv.4} parent=20 // loop_footer
            %s38 = sadd.s32 1, %s34
          $region27: #{down_conv.4} parent=20 // loop_footer_branch
            %33 = sbr.rel target = $region23
          $region28: #{down_conv.4} parent=20 // loop_exit
            _
        $region21: #{down_conv.4} parent=12 // pred_fallthru
          _
      $region13: #{down_conv.4} parent=8 // pred_fallthru
        _
      %61 = vnop
    $region9: #{down_conv.4} parent=1 // pred_fallthru
      _
    // Predicated region
    $region44: #{down_conv.4} parent=1 // pred_check
      _
    $region45: #{down_conv.4} parent=1 // pred_check_branch
      %63 = sbr.rel (0) target = $region47
    $region46: #{down_conv.4} parent=1 // pred_region
      %s64 = sadd.s32 0, 1
      %s65 = smul.u32 %s64, 8
      %p66 = scmp.lt.s32.totalorder %s65, 7
      %s67 = scalar_select %p66, %s65, 7
      %s68 = smul.addr %s67, 8
      %s69 = scalar_lea.vmem %s2, %s68
      // Predicated region
      $region48: #{down_conv.4} parent=46 // pred_check
        _
      $region49: #{down_conv.4} parent=46 // pred_check_branch
        %71 = sbr.rel (0) target = $region51
      $region50: #{down_conv.4} parent=46 // pred_region
        // Predicated region
        $region52: #{down_conv.4} parent=50 // pred_check
          _
        $region53: #{down_conv.4} parent=50 // pred_check_branch
          %73 = sbr.rel (0) target = $region55
        $region54: #{down_conv.4} parent=50 // pred_region
          // Predicated region
          $region67: #{down_conv.4} parent=54 // pred_check
            _
          $region68: #{down_conv.4} parent=54 // pred_check_branch
            %91 = sbr.rel (0) target = $region70
          $region69: #{down_conv.4} parent=54 // pred_region
            loop: start=0, step=1, limit=1
            $region71: #{down_conv.4} parent=69 // loop_pre_header
              _
            $region72: #{down_conv.4} parent=69 // loop_header
              %s93 = sphi 0, %s97
              %p94 = scmp.ge.s32.totalorder %s93, 1
              %s98 = sphi %s69, %s69
              %s99 = sphi [#allocation4], [#allocation4]
            $region73: #{down_conv.4} parent=69 // loop_header_branch
              %96 = sbr.rel (%p94) target = $region77
            $region74: #{down_conv.4} parent=69 // loop_body
              %v100 = vld [vmem:[%s98] sm:$0xff]
              %101 = vst [vmem:[%s99] sm:$0xff] %v100
              %v102 = vld [vmem:[%s98 + $0x40] sm:$0xff]
              %103 = vst [vmem:[%s99 + $0x8] sm:$0xff] %v102
            $region75: #{down_conv.4} parent=69 // loop_footer
              %s97 = sadd.s32 1, %s93
            $region76: #{down_conv.4} parent=69 // loop_footer_branch
              %92 = sbr.rel target = $region72
            $region77: #{down_conv.4} parent=69 // loop_exit
              _
          $region70: #{down_conv.4} parent=54 // pred_fallthru
            _
          // Predicated region
          $region78: #{down_conv.4} parent=54 // pred_check
            _
          $region79: #{down_conv.4} parent=54 // pred_check_branch
            %105 = sbr.rel target = $region81
          $region80: #{down_conv.4} parent=54 // pred_region
            _
          $region81: #{down_conv.4} parent=54 // pred_fallthru
            _
        $region55: #{down_conv.4} parent=50 // pred_fallthru
          _
        // Predicated region
        $region56: #{down_conv.4} parent=50 // pred_check
          _
        $region57: #{down_conv.4} parent=50 // pred_check_branch
          %75 = sbr.rel target = $region59
        $region58: #{down_conv.4} parent=50 // pred_region
          %s77 = ssub.s32 256, 1
          loop: start=0, step=1, limit=1
          $region60: #{down_conv.4} parent=58 // loop_pre_header
            _
          $region61: #{down_conv.4} parent=58 // loop_header
            %s79 = sphi 0, %s83
            %p80 = scmp.ge.s32.totalorder %s79, 1
            %s84 = sphi %s69, %s69
            %s85 = sphi [#allocation4], [#allocation4]
          $region62: #{down_conv.4} parent=58 // loop_header_branch
            %82 = sbr.rel (%p80) target = $region66
          $region63: #{down_conv.4} parent=58 // loop_body
            %v86 = vld [vmem:[%s84] sm:%s77]
            %87 = vst [vmem:[%s85] sm:%s77] %v86
            %v88 = vld [vmem:[%s84 + $0x40] sm:%s77]
            %89 = vst [vmem:[%s85 + $0x8] sm:%s77] %v88
          $region64: #{down_conv.4} parent=58 // loop_footer
            %s83 = sadd.s32 1, %s79
          $region65: #{down_conv.4} parent=58 // loop_footer_branch
            %78 = sbr.rel target = $region61
          $region66: #{down_conv.4} parent=58 // loop_exit
            _
        $region59: #{down_conv.4} parent=50 // pred_fallthru
          _
      $region51: #{down_conv.4} parent=46 // pred_fallthru
        _
      %106 = vnop
    $region47: #{down_conv.4} parent=1 // pred_fallthru
      _
    // Predicated region
    $region82: #{down_conv.4} parent=1 // pred_check
      _
    $region83: #{down_conv.4} parent=1 // pred_check_branch
      %108 = sbr.rel (0) target = $region85
    $region84: #{down_conv.4} parent=1 // pred_region
      _
    $region85: #{down_conv.4} parent=1 // pred_fallthru
      _
    // Predicated region
    $region86: #{down_conv.4} parent=1 // pred_check
      _
    $region87: #{down_conv.4} parent=1 // pred_check_branch
      %110 = sbr.rel (0) target = $region89
    $region88: #{down_conv.4} parent=1 // pred_region
      _
    $region89: #{down_conv.4} parent=1 // pred_fallthru
      _
    // Predicated region
    $region90: #{down_conv.4} parent=1 // pred_check
      _
    $region91: #{down_conv.4} parent=1 // pred_check_branch
      %112 = sbr.rel (0) target = $region93
    $region92: #{down_conv.4} parent=1 // pred_region
      _
    $region93: #{down_conv.4} parent=1 // pred_fallthru
      _
    // Predicated region
    $region94: #{down_conv.4} parent=1 // pred_check
      _
    $region95: #{down_conv.4} parent=1 // pred_check_branch
      %114 = sbr.rel (0) target = $region97
    $region96: #{down_conv.4} parent=1 // pred_region
      _
    $region97: #{down_conv.4} parent=1 // pred_fallthru
      _
    // Predicated region
    $region98: #{down_conv.4} parent=1 // pred_check
      _
    $region99: #{down_conv.4} parent=1 // pred_check_branch
      %116 = sbr.rel (0) target = $region101
    $region100: #{down_conv.4} parent=1 // pred_region
      _
    $region101: #{down_conv.4} parent=1 // pred_fallthru
      _
    // Predicated region
    $region102: #{down_conv.4} parent=1 // pred_check
      _
    $region103: #{down_conv.4} parent=1 // pred_check_branch
      %118 = sbr.rel (0) target = $region105
    $region104: #{down_conv.4} parent=1 // pred_region
      _
    $region105: #{down_conv.4} parent=1 // pred_fallthru
      _
    // Predicated region
    $region106: #{down_conv.4} parent=1 // pred_check
      _
    $region107: #{down_conv.4} parent=1 // pred_check_branch
      %120 = sbr.rel (0) target = $region109
    $region108: #{down_conv.4} parent=1 // pred_region
      _
    $region109: #{down_conv.4} parent=1 // pred_fallthru
      _
    %s121 = smul.u32 0, 8
    %s122 = ssub.s32 %s121, 1
    %p123 = scmp.gt.s32.totalorder %s122, 0
    %s124 = scalar_select %p123, %s122, 0
    %s125 = sadd.s32 0, 1
    %s126 = smul.u32 %s125, 8
    %p127 = scmp.lt.s32.totalorder %s126, 7
    %s128 = scalar_select %p127, %s126, 7
    %v130 = vld [vmem:[%s3] sm:$0x3]
    %v131 = vadd.f32 %v130, 0.0
    %v132 = vmul.f32 %v131, 0.0078125
    %v133 = vmul.f32 %v132, %v132
    %v135 = vrot.slane %v133, 7
    %v137 = vsub.f32 %v132, %v135
    %v138 = vmax.f32 %v137, 0.0
    %v139 = vld [vmem:[%s4] sm:$0x1]
    %v140 = vadd.f32 %v138, 1e-05
    %v141 = vrsqrt.pop %v140
    %v142 = vmul.f32 %v141, %v140
    %v143 = vmul.f32 %v142, %v141
    %v144 = vmul.f32 0.5, %v143
    %v145 = vsub.f32 1.5, %v144
    %v146 = vmul.f32 %v141, %v145
    %vm147 = vweird.f32 %v140
    %vm148 = vweird.f32 %v141
    %vm149 = vmor %vm147, %vm148
    %v150 = vsel %vm149, %v141, %v146
    %152 = vst [vmem:[#allocation1] sm:$0xff] %v150
    %s153 = scalar_lea.vmem [#allocation1], 1
    %v154 = vld [vmem:[%s153] ss:$9 sm:$0xff]
    %v156 = vmul.f32 %v139, %v154
    %v157 = vld [vmem:[%s5] sm:$0x1]
    %v158 = vmul.f32 %v132, %v156
    %v159 = vsub.f32 %v157, %v158
    %vm160 = vcmask 57344
    %161 = vst.msk [vmem:[#allocation2] sm:$0x1] %vm160, 0.0
    %162 = vst.msk [vmem:[#allocation2 + $0x10] sm:$0x1] %vm160, 0.0
    %163 = vst.msk [vmem:[#allocation2 + $0x20] sm:$0x1] %vm160, 0.0
    %164 = vst.msk [vmem:[#allocation2 + $0x30] sm:$0x1] %vm160, 0.0
    %165 = vst.msk [vmem:[#allocation2 + $0x40] sm:$0x1] %vm160, 0.0
    %166 = vst.msk [vmem:[#allocation2 + $0x50] sm:$0x1] %vm160, 0.0
    %167 = vst.msk [vmem:[#allocation2 + $0x60] sm:$0x1] %vm160, 0.0
    %168 = vst.msk [vmem:[#allocation2 + $0x70] sm:$0x1] %vm160, 0.0
    %169 = vst.msk [vmem:[#allocation2 + $0x80] sm:$0x1] %vm160, 0.0
    %170 = vst.msk [vmem:[#allocation2 + $0x90] sm:$0x1] %vm160, 0.0
    %171 = vst.msk [vmem:[#allocation2 + $0xa0] sm:$0x1] %vm160, 0.0
    %172 = vst.msk [vmem:[#allocation2 + $0xb0] sm:$0x1] %vm160, 0.0
    %173 = vst.msk [vmem:[#allocation2 + $0xc0] sm:$0x1] %vm160, 0.0
    %174 = vst.msk [vmem:[#allocation2 + $0xd0] sm:$0x1] %vm160, 0.0
    %175 = vst.msk [vmem:[#allocation2 + $0xe0] sm:$0x1] %vm160, 0.0
    %176 = vst.msk [vmem:[#allocation2 + $0xf0] sm:$0x1] %vm160, 0.0
    %177 = vst.msk [vmem:[#allocation2 + $0x100] sm:$0x1] %vm160, 0.0
    %178 = vst.msk [vmem:[#allocation2 + $0x110] sm:$0x1] %vm160, 0.0
    %179 = vst.msk [vmem:[#allocation2 + $0x120] sm:$0x1] %vm160, 0.0
    %180 = vst.msk [vmem:[#allocation2 + $0x130] sm:$0x1] %vm160, 0.0
    %181 = vst.msk [vmem:[#allocation2 + $0x9] sm:$0x1] %vm160, 0.0
    %182 = vst.msk [vmem:[#allocation2 + $0x19] sm:$0x1] %vm160, 0.0
    %183 = vst.msk [vmem:[#allocation2 + $0x29] sm:$0x1] %vm160, 0.0
    %184 = vst.msk [vmem:[#allocation2 + $0x39] sm:$0x1] %vm160, 0.0
    %185 = vst.msk [vmem:[#allocation2 + $0x49] sm:$0x1] %vm160, 0.0
    %186 = vst.msk [vmem:[#allocation2 + $0x59] sm:$0x1] %vm160, 0.0
    %187 = vst.msk [vmem:[#allocation2 + $0x69] sm:$0x1] %vm160, 0.0
    %188 = vst.msk [vmem:[#allocation2 + $0x79] sm:$0x1] %vm160, 0.0
    %189 = vst.msk [vmem:[#allocation2 + $0x89] sm:$0x1] %vm160, 0.0
    %190 = vst.msk [vmem:[#allocation2 + $0x99] sm:$0x1] %vm160, 0.0
    %191 = vst.msk [vmem:[#allocation2 + $0xa9] sm:$0x1] %vm160, 0.0
    %192 = vst.msk [vmem:[#allocation2 + $0xb9] sm:$0x1] %vm160, 0.0
    %193 = vst.msk [vmem:[#allocation2 + $0xc9] sm:$0x1] %vm160, 0.0
    %194 = vst.msk [vmem:[#allocation2 + $0xd9] sm:$0x1] %vm160, 0.0
    %195 = vst.msk [vmem:[#allocation2 + $0xe9] sm:$0x1] %vm160, 0.0
    %196 = vst.msk [vmem:[#allocation2 + $0xf9] sm:$0x1] %vm160, 0.0
    %197 = vst.msk [vmem:[#allocation2 + $0x109] sm:$0x1] %vm160, 0.0
    %198 = vst.msk [vmem:[#allocation2 + $0x119] sm:$0x1] %vm160, 0.0
    %199 = vst.msk [vmem:[#allocation2 + $0x129] sm:$0x1] %vm160, 0.0
    %200 = vst.msk [vmem:[#allocation2 + $0x139] sm:$0x1] %vm160, 0.0
    %v201 = vld [vmem:[%s0] sm:$0xff]
    %v202 = vld [vmem:[%s0 + $0x8] sm:$0xff]
    %v203 = vld [vmem:[%s0 + $0x10] sm:$0xff]
    %v204 = vld [vmem:[%s0 + $0x18] sm:$0xff]
    %v205 = vld [vmem:[%s0 + $0x20] sm:$0xff]
    %v206 = vld [vmem:[%s0 + $0x28] sm:$0xff]
    %v207 = vld [vmem:[%s0 + $0x30] sm:$0xff]
    %v208 = vld [vmem:[%s0 + $0x38] sm:$0xff]
    %v209 = vld [vmem:[%s0 + $0x40] sm:$0xff]
    %v210 = vld [vmem:[%s0 + $0x48] sm:$0xff]
    %v211 = vld [vmem:[%s0 + $0x50] sm:$0xff]
    %v212 = vld [vmem:[%s0 + $0x58] sm:$0xff]
    %v213 = vld [vmem:[%s0 + $0x60] sm:$0xff]
    %v214 = vld [vmem:[%s0 + $0x68] sm:$0xff]
    %v215 = vld [vmem:[%s0 + $0x70] sm:$0xff]
    %v216 = vld [vmem:[%s0 + $0x78] sm:$0xff]
    %v218 = vperm.slane %v156, 0
    %v220 = vmul.f32 %v201, %v218
    %v221 = vmul.f32 %v202, %v218
    %v222 = vmul.f32 %v203, %v218
    %v223 = vmul.f32 %v204, %v218
    %v224 = vmul.f32 %v205, %v218
    %v225 = vmul.f32 %v206, %v218
    %v226 = vmul.f32 %v207, %v218
    %v227 = vmul.f32 %v208, %v218
    %v228 = vmul.f32 %v209, %v218
    %v229 = vmul.f32 %v210, %v218
    %v230 = vmul.f32 %v211, %v218
    %v231 = vmul.f32 %v212, %v218
    %v232 = vmul.f32 %v213, %v218
    %v233 = vmul.f32 %v214, %v218
    %v234 = vmul.f32 %v215, %v218
    %v235 = vmul.f32 %v216, %v218
    %v237 = vperm.slane %v159, 0
    %v239 = vadd.f32 %v220, %v237
    %v240 = vadd.f32 %v221, %v237
    %v241 = vadd.f32 %v222, %v237
    %v242 = vadd.f32 %v223, %v237
    %v243 = vadd.f32 %v224, %v237
    %v244 = vadd.f32 %v225, %v237
    %v245 = vadd.f32 %v226, %v237
    %v246 = vadd.f32 %v227, %v237
    %v247 = vadd.f32 %v228, %v237
    %v248 = vadd.f32 %v229, %v237
    %v249 = vadd.f32 %v230, %v237
    %v250 = vadd.f32 %v231, %v237
    %v251 = vadd.f32 %v232, %v237
    %v252 = vadd.f32 %v233, %v237
    %v253 = vadd.f32 %v234, %v237
    %v254 = vadd.f32 %v235, %v237
    %s255 = scalar_lea.vmem [#allocation2], 16
    %vm256 = vcmask 64512
    %257 = vst.msk [vmem:[%s255 + $0x1] sm:$0xff] %vm256, %v239
    %258 = vst.msk [vmem:[%s255 + $0x11] sm:$0xff] %vm256, %v240
    %259 = vst.msk [vmem:[%s255 + $0x21] sm:$0xff] %vm256, %v241
    %260 = vst.msk [vmem:[%s255 + $0x31] sm:$0xff] %vm256, %v242
    %261 = vst.msk [vmem:[%s255 + $0x41] sm:$0xff] %vm256, %v243
    %262 = vst.msk [vmem:[%s255 + $0x51] sm:$0xff] %vm256, %v244
    %263 = vst.msk [vmem:[%s255 + $0x61] sm:$0xff] %vm256, %v245
    %264 = vst.msk [vmem:[%s255 + $0x71] sm:$0xff] %vm256, %v246
    %265 = vst.msk [vmem:[%s255 + $0xa1] sm:$0xff] %vm256, %v247
    %266 = vst.msk [vmem:[%s255 + $0xb1] sm:$0xff] %vm256, %v248
    %267 = vst.msk [vmem:[%s255 + $0xc1] sm:$0xff] %vm256, %v249
    %268 = vst.msk [vmem:[%s255 + $0xd1] sm:$0xff] %vm256, %v250
    %269 = vst.msk [vmem:[%s255 + $0xe1] sm:$0xff] %vm256, %v251
    %270 = vst.msk [vmem:[%s255 + $0xf1] sm:$0xff] %vm256, %v252
    %271 = vst.msk [vmem:[%s255 + $0x101] sm:$0xff] %vm256, %v253
    %272 = vst.msk [vmem:[%s255 + $0x111] sm:$0xff] %vm256, %v254
    %p273 = scmp.gt.s32.totalorder 0, 0
    %s274 = scalar_select %p273, 1, 0
    %s275 = scvt.s32.f32 %s274
    %p276 = scmp.lt.s32.totalorder 0, 0
    %s277 = scalar_select %p276, 1, 0
    %s278 = scvt.s32.f32 %s277
    %v279 = vld [vmem:[#allocation3] sm:$0xff]
    %v280 = vld [vmem:[#allocation3 + $0x8] sm:$0xff]
    %v281 = vmul.f32 %v279, %v218
    %v282 = vmul.f32 %v280, %v218
    %v283 = vadd.f32 %v281, %v237
    %v284 = vadd.f32 %v282, %v237
    %v285 = vstv %s275
    %v286 = vmul.f32 %v283, %v285
    %v287 = vmul.f32 %v284, %v285
    %288 = vst.msk [vmem:[#allocation2 + $0x1] sm:$0xff] %vm256, %v286
    %289 = vst.msk [vmem:[#allocation2 + $0xa1] sm:$0xff] %vm256, %v287
    %v290 = vld [vmem:[#allocation4] sm:$0xff]
    %v291 = vld [vmem:[#allocation4 + $0x8] sm:$0xff]
    %v292 = vmul.f32 %v290, %v218
    %v293 = vmul.f32 %v291, %v218
    %v294 = vadd.f32 %v292, %v237
    %v295 = vadd.f32 %v293, %v237
    %v296 = vstv %s278
    %v297 = vmul.f32 %v294, %v296
    %v298 = vmul.f32 %v295, %v296
    %s299 = scalar_lea.vmem [#allocation2], 144
    %300 = vst.msk [vmem:[%s299 + $0x1] sm:$0xff] %vm256, %v297
    %301 = vst.msk [vmem:[%s299 + $0xa1] sm:$0xff] %vm256, %v298
    %v302 = vld [vmem:[#allocation2] sm:$0xff]
    %v303 = vld [vmem:[#allocation2 + $0x10] sm:$0xff]
    %v304 = vld [vmem:[#allocation2 + $0x20] sm:$0xff]
    %v305 = vld [vmem:[#allocation2 + $0x30] sm:$0xff]
    %v306 = vld [vmem:[#allocation2 + $0x40] sm:$0xff]
    %v307 = vld [vmem:[#allocation2 + $0x50] sm:$0xff]
    %v308 = vld [vmem:[#allocation2 + $0x60] sm:$0xff]
    %v309 = vld [vmem:[#allocation2 + $0x70] sm:$0xff]
    %v310 = vld [vmem:[#allocation2 + $0xa0] sm:$0xff]
    %v311 = vld [vmem:[#allocation2 + $0xb0] sm:$0xff]
    %v312 = vld [vmem:[#allocation2 + $0xc0] sm:$0xff]
    %v313 = vld [vmem:[#allocation2 + $0xd0] sm:$0xff]
    %v314 = vld [vmem:[#allocation2 + $0xe0] sm:$0xff]
    %v315 = vld [vmem:[#allocation2 + $0xf0] sm:$0xff]
    %v316 = vld [vmem:[#allocation2 + $0x100] sm:$0xff]
    %v317 = vld [vmem:[#allocation2 + $0x110] sm:$0xff]
    %v318 = vld [vmem:[#allocation2 + $0x1] sm:$0xff]
    %v319 = vld [vmem:[#allocation2 + $0x11] sm:$0xff]
    %v320 = vld [vmem:[#allocation2 + $0x21] sm:$0xff]
    %v321 = vld [vmem:[#allocation2 + $0x31] sm:$0xff]
    %v322 = vld [vmem:[#allocation2 + $0x41] sm:$0xff]
    %v323 = vld [vmem:[#allocation2 + $0x51] sm:$0xff]
    %v324 = vld [vmem:[#allocation2 + $0x61] sm:$0xff]
    %v325 = vld [vmem:[#allocation2 + $0x71] sm:$0xff]
    %v326 = vld [vmem:[#allocation2 + $0xa1] sm:$0xff]
    %v327 = vld [vmem:[#allocation2 + $0xb1] sm:$0xff]
    %v328 = vld [vmem:[#allocation2 + $0xc1] sm:$0xff]
    %v329 = vld [vmem:[#allocation2 + $0xd1] sm:$0xff]
    %v330 = vld [vmem:[#allocation2 + $0xe1] sm:$0xff]
    %v331 = vld [vmem:[#allocation2 + $0xf1] sm:$0xff]
    %v332 = vld [vmem:[#allocation2 + $0x101] sm:$0xff]
    %v333 = vld [vmem:[#allocation2 + $0x111] sm:$0xff]
    %v334 = vld [vmem:[#allocation2 + $0x2] sm:$0xff]
    %v335 = vld [vmem:[#allocation2 + $0x12] sm:$0xff]
    %v336 = vld [vmem:[#allocation2 + $0x22] sm:$0xff]
    %v337 = vld [vmem:[#allocation2 + $0x32] sm:$0xff]
    %v338 = vld [vmem:[#allocation2 + $0x42] sm:$0xff]
    %v339 = vld [vmem:[#allocation2 + $0x52] sm:$0xff]
    %v340 = vld [vmem:[#allocation2 + $0x62] sm:$0xff]
    %v341 = vld [vmem:[#allocation2 + $0x72] sm:$0xff]
    %v342 = vld [vmem:[#allocation2 + $0xa2] sm:$0xff]
    %v343 = vld [vmem:[#allocation2 + $0xb2] sm:$0xff]
    %v344 = vld [vmem:[#allocation2 + $0xc2] sm:$0xff]
    %v345 = vld [vmem:[#allocation2 + $0xd2] sm:$0xff]
    %v346 = vld [vmem:[#allocation2 + $0xe2] sm:$0xff]
    %v347 = vld [vmem:[#allocation2 + $0xf2] sm:$0xff]
    %v348 = vld [vmem:[#allocation2 + $0x102] sm:$0xff]
    %v349 = vld [vmem:[#allocation2 + $0x112] sm:$0xff]
    %v350 = vld [vmem:[%s255] sm:$0xff]
    %v351 = vld [vmem:[%s255 + $0x10] sm:$0xff]
    %v352 = vld [vmem:[%s255 + $0x20] sm:$0xff]
    %v353 = vld [vmem:[%s255 + $0x30] sm:$0xff]
    %v354 = vld [vmem:[%s255 + $0x40] sm:$0xff]
    %v355 = vld [vmem:[%s255 + $0x50] sm:$0xff]
    %v356 = vld [vmem:[%s255 + $0x60] sm:$0xff]
    %v357 = vld [vmem:[%s255 + $0x70] sm:$0xff]
    %v358 = vld [vmem:[%s255 + $0xa0] sm:$0xff]
    %v359 = vld [vmem:[%s255 + $0xb0] sm:$0xff]
    %v360 = vld [vmem:[%s255 + $0xc0] sm:$0xff]
    %v361 = vld [vmem:[%s255 + $0xd0] sm:$0xff]
    %v362 = vld [vmem:[%s255 + $0xe0] sm:$0xff]
    %v363 = vld [vmem:[%s255 + $0xf0] sm:$0xff]
    %v364 = vld [vmem:[%s255 + $0x100] sm:$0xff]
    %v365 = vld [vmem:[%s255 + $0x110] sm:$0xff]
    %v366 = vld [vmem:[%s255 + $0x1] sm:$0xff]
    %v367 = vld [vmem:[%s255 + $0x11] sm:$0xff]
    %v368 = vld [vmem:[%s255 + $0x21] sm:$0xff]
    %v369 = vld [vmem:[%s255 + $0x31] sm:$0xff]
    %v370 = vld [vmem:[%s255 + $0x41] sm:$0xff]
    %v371 = vld [vmem:[%s255 + $0x51] sm:$0xff]
    %v372 = vld [vmem:[%s255 + $0x61] sm:$0xff]
    %v373 = vld [vmem:[%s255 + $0x71] sm:$0xff]
    %v374 = vld [vmem:[%s255 + $0xa1] sm:$0xff]
    %v375 = vld [vmem:[%s255 + $0xb1] sm:$0xff]
    %v376 = vld [vmem:[%s255 + $0xc1] sm:$0xff]
    %v377 = vld [vmem:[%s255 + $0xd1] sm:$0xff]
    %v378 = vld [vmem:[%s255 + $0xe1] sm:$0xff]
    %v379 = vld [vmem:[%s255 + $0xf1] sm:$0xff]
    %v380 = vld [vmem:[%s255 + $0x101] sm:$0xff]
    %v381 = vld [vmem:[%s255 + $0x111] sm:$0xff]
    %v382 = vld [vmem:[%s255 + $0x2] sm:$0xff]
    %v383 = vld [vmem:[%s255 + $0x12] sm:$0xff]
    %v384 = vld [vmem:[%s255 + $0x22] sm:$0xff]
    %v385 = vld [vmem:[%s255 + $0x32] sm:$0xff]
    %v386 = vld [vmem:[%s255 + $0x42] sm:$0xff]
    %v387 = vld [vmem:[%s255 + $0x52] sm:$0xff]
    %v388 = vld [vmem:[%s255 + $0x62] sm:$0xff]
    %v389 = vld [vmem:[%s255 + $0x72] sm:$0xff]
    %v390 = vld [vmem:[%s255 + $0xa2] sm:$0xff]
    %v391 = vld [vmem:[%s255 + $0xb2] sm:$0xff]
    %v392 = vld [vmem:[%s255 + $0xc2] sm:$0xff]
    %v393 = vld [vmem:[%s255 + $0xd2] sm:$0xff]
    %v394 = vld [vmem:[%s255 + $0xe2] sm:$0xff]
    %v395 = vld [vmem:[%s255 + $0xf2] sm:$0xff]
    %v396 = vld [vmem:[%s255 + $0x102] sm:$0xff]
    %v397 = vld [vmem:[%s255 + $0x112] sm:$0xff]
    %s398 = scalar_lea.vmem [#allocation2], 32
    %v399 = vld [vmem:[%s398] sm:$0xff]
    %v400 = vld [vmem:[%s398 + $0x10] sm:$0xff]
    %v401 = vld [vmem:[%s398 + $0x20] sm:$0xff]
    %v402 = vld [vmem:[%s398 + $0x30] sm:$0xff]
    %v403 = vld [vmem:[%s398 + $0x40] sm:$0xff]
    %v404 = vld [vmem:[%s398 + $0x50] sm:$0xff]
    %v405 = vld [vmem:[%s398 + $0x60] sm:$0xff]
    %v406 = vld [vmem:[%s398 + $0x70] sm:$0xff]
    %v407 = vld [vmem:[%s398 + $0xa0] sm:$0xff]
    %v408 = vld [vmem:[%s398 + $0xb0] sm:$0xff]
    %v409 = vld [vmem:[%s398 + $0xc0] sm:$0xff]
    %v410 = vld [vmem:[%s398 + $0xd0] sm:$0xff]
    %v411 = vld [vmem:[%s398 + $0xe0] sm:$0xff]
    %v412 = vld [vmem:[%s398 + $0xf0] sm:$0xff]
    %v413 = vld [vmem:[%s398 + $0x100] sm:$0xff]
    %v414 = vld [vmem:[%s398 + $0x110] sm:$0xff]
    %v415 = vld [vmem:[%s398 + $0x1] sm:$0xff]
    %v416 = vld [vmem:[%s398 + $0x11] sm:$0xff]
    %v417 = vld [vmem:[%s398 + $0x21] sm:$0xff]
    %v418 = vld [vmem:[%s398 + $0x31] sm:$0xff]
    %v419 = vld [vmem:[%s398 + $0x41] sm:$0xff]
    %v420 = vld [vmem:[%s398 + $0x51] sm:$0xff]
    %v421 = vld [vmem:[%s398 + $0x61] sm:$0xff]
    %v422 = vld [vmem:[%s398 + $0x71] sm:$0xff]
    %v423 = vld [vmem:[%s398 + $0xa1] sm:$0xff]
    %v424 = vld [vmem:[%s398 + $0xb1] sm:$0xff]
    %v425 = vld [vmem:[%s398 + $0xc1] sm:$0xff]
    %v426 = vld [vmem:[%s398 + $0xd1] sm:$0xff]
    %v427 = vld [vmem:[%s398 + $0xe1] sm:$0xff]
    %v428 = vld [vmem:[%s398 + $0xf1] sm:$0xff]
    %v429 = vld [vmem:[%s398 + $0x101] sm:$0xff]
    %v430 = vld [vmem:[%s398 + $0x111] sm:$0xff]
    %v431 = vld [vmem:[%s398 + $0x2] sm:$0xff]
    %v432 = vld [vmem:[%s398 + $0x12] sm:$0xff]
    %v433 = vld [vmem:[%s398 + $0x22] sm:$0xff]
    %v434 = vld [vmem:[%s398 + $0x32] sm:$0xff]
    %v435 = vld [vmem:[%s398 + $0x42] sm:$0xff]
    %v436 = vld [vmem:[%s398 + $0x52] sm:$0xff]
    %v437 = vld [vmem:[%s398 + $0x62] sm:$0xff]
    %v438 = vld [vmem:[%s398 + $0x72] sm:$0xff]
    %v439 = vld [vmem:[%s398 + $0xa2] sm:$0xff]
    %v440 = vld [vmem:[%s398 + $0xb2] sm:$0xff]
    %v441 = vld [vmem:[%s398 + $0xc2] sm:$0xff]
    %v442 = vld [vmem:[%s398 + $0xd2] sm:$0xff]
    %v443 = vld [vmem:[%s398 + $0xe2] sm:$0xff]
    %v444 = vld [vmem:[%s398 + $0xf2] sm:$0xff]
    %v445 = vld [vmem:[%s398 + $0x102] sm:$0xff]
    %v446 = vld [vmem:[%s398 + $0x112] sm:$0xff]
    %463 = vrot.lane.b32.xlu0 %v318, 8
    %v464 = vpop.permute.xlu0 %463
    %465 = vrot.lane.b32.xlu0 %v319, 8
    %v466 = vpop.permute.xlu0 %465
    %467 = vrot.lane.b32.xlu0 %v320, 8
    %v468 = vpop.permute.xlu0 %467
    %469 = vrot.lane.b32.xlu0 %v321, 8
    %v470 = vpop.permute.xlu0 %469
    %471 = vrot.lane.b32.xlu0 %v322, 8
    %v472 = vpop.permute.xlu0 %471
    %473 = vrot.lane.b32.xlu0 %v323, 8
    %v474 = vpop.permute.xlu0 %473
    %475 = vrot.lane.b32.xlu0 %v324, 8
    %v476 = vpop.permute.xlu0 %475
    %477 = vrot.lane.b32.xlu0 %v325, 8
    %v478 = vpop.permute.xlu0 %477
    %479 = vrot.lane.b32.xlu0 %v326, 8
    %v480 = vpop.permute.xlu0 %479
    %481 = vrot.lane.b32.xlu0 %v327, 8
    %v482 = vpop.permute.xlu0 %481
    %483 = vrot.lane.b32.xlu0 %v328, 8
    %v484 = vpop.permute.xlu0 %483
    %485 = vrot.lane.b32.xlu0 %v329, 8
    %v486 = vpop.permute.xlu0 %485
    %487 = vrot.lane.b32.xlu0 %v330, 8
    %v488 = vpop.permute.xlu0 %487
    %489 = vrot.lane.b32.xlu0 %v331, 8
    %v490 = vpop.permute.xlu0 %489
    %491 = vrot.lane.b32.xlu0 %v332, 8
    %v492 = vpop.permute.xlu0 %491
    %493 = vrot.lane.b32.xlu0 %v333, 8
    %v494 = vpop.permute.xlu0 %493
    %527 = vrot.lane.b32.xlu0 %v334, 16
    %v528 = vpop.permute.xlu0 %527
    %529 = vrot.lane.b32.xlu0 %v335, 16
    %v530 = vpop.permute.xlu0 %529
    %531 = vrot.lane.b32.xlu0 %v336, 16
    %v532 = vpop.permute.xlu0 %531
    %533 = vrot.lane.b32.xlu0 %v337, 16
    %v534 = vpop.permute.xlu0 %533
    %535 = vrot.lane.b32.xlu0 %v338, 16
    %v536 = vpop.permute.xlu0 %535
    %537 = vrot.lane.b32.xlu0 %v339, 16
    %v538 = vpop.permute.xlu0 %537
    %539 = vrot.lane.b32.xlu0 %v340, 16
    %v540 = vpop.permute.xlu0 %539
    %541 = vrot.lane.b32.xlu0 %v341, 16
    %v542 = vpop.permute.xlu0 %541
    %543 = vrot.lane.b32.xlu0 %v342, 16
    %v544 = vpop.permute.xlu0 %543
    %545 = vrot.lane.b32.xlu0 %v343, 16
    %v546 = vpop.permute.xlu0 %545
    %547 = vrot.lane.b32.xlu0 %v344, 16
    %v548 = vpop.permute.xlu0 %547
    %549 = vrot.lane.b32.xlu0 %v345, 16
    %v550 = vpop.permute.xlu0 %549
    %551 = vrot.lane.b32.xlu0 %v346, 16
    %v552 = vpop.permute.xlu0 %551
    %553 = vrot.lane.b32.xlu0 %v347, 16
    %v554 = vpop.permute.xlu0 %553
    %555 = vrot.lane.b32.xlu0 %v348, 16
    %v556 = vpop.permute.xlu0 %555
    %557 = vrot.lane.b32.xlu0 %v349, 16
    %v558 = vpop.permute.xlu0 %557
    %591 = vrot.lane.b32.xlu0 %v350, 24
    %v592 = vpop.permute.xlu0 %591
    %593 = vrot.lane.b32.xlu0 %v351, 24
    %v594 = vpop.permute.xlu0 %593
    %595 = vrot.lane.b32.xlu0 %v352, 24
    %v596 = vpop.permute.xlu0 %595
    %597 = vrot.lane.b32.xlu0 %v353, 24
    %v598 = vpop.permute.xlu0 %597
    %599 = vrot.lane.b32.xlu0 %v354, 24
    %v600 = vpop.permute.xlu0 %599
    %601 = vrot.lane.b32.xlu0 %v355, 24
    %v602 = vpop.permute.xlu0 %601
    %603 = vrot.lane.b32.xlu0 %v356, 24
    %v604 = vpop.permute.xlu0 %603
    %605 = vrot.lane.b32.xlu0 %v357, 24
    %v606 = vpop.permute.xlu0 %605
    %607 = vrot.lane.b32.xlu0 %v358, 24
    %v608 = vpop.permute.xlu0 %607
    %609 = vrot.lane.b32.xlu0 %v359, 24
    %v610 = vpop.permute.xlu0 %609
    %611 = vrot.lane.b32.xlu0 %v360, 24
    %v612 = vpop.permute.xlu0 %611
    %613 = vrot.lane.b32.xlu0 %v361, 24
    %v614 = vpop.permute.xlu0 %613
    %615 = vrot.lane.b32.xlu0 %v362, 24
    %v616 = vpop.permute.xlu0 %615
    %617 = vrot.lane.b32.xlu0 %v363, 24
    %v618 = vpop.permute.xlu0 %617
    %619 = vrot.lane.b32.xlu0 %v364, 24
    %v620 = vpop.permute.xlu0 %619
    %621 = vrot.lane.b32.xlu0 %v365, 24
    %v622 = vpop.permute.xlu0 %621
    %655 = vrot.lane.b32.xlu0 %v366, 32
    %v656 = vpop.permute.xlu0 %655
    %657 = vrot.lane.b32.xlu0 %v367, 32
    %v658 = vpop.permute.xlu0 %657
    %659 = vrot.lane.b32.xlu0 %v368, 32
    %v660 = vpop.permute.xlu0 %659
    %661 = vrot.lane.b32.xlu0 %v369, 32
    %v662 = vpop.permute.xlu0 %661
    %663 = vrot.lane.b32.xlu0 %v370, 32
    %v664 = vpop.permute.xlu0 %663
    %665 = vrot.lane.b32.xlu0 %v371, 32
    %v666 = vpop.permute.xlu0 %665
    %667 = vrot.lane.b32.xlu0 %v372, 32
    %v668 = vpop.permute.xlu0 %667
    %669 = vrot.lane.b32.xlu0 %v373, 32
    %v670 = vpop.permute.xlu0 %669
    %671 = vrot.lane.b32.xlu0 %v374, 32
    %v672 = vpop.permute.xlu0 %671
    %673 = vrot.lane.b32.xlu0 %v375, 32
    %v674 = vpop.permute.xlu0 %673
    %675 = vrot.lane.b32.xlu0 %v376, 32
    %v676 = vpop.permute.xlu0 %675
    %677 = vrot.lane.b32.xlu0 %v377, 32
    %v678 = vpop.permute.xlu0 %677
    %679 = vrot.lane.b32.xlu0 %v378, 32
    %v680 = vpop.permute.xlu0 %679
    %681 = vrot.lane.b32.xlu0 %v379, 32
    %v682 = vpop.permute.xlu0 %681
    %683 = vrot.lane.b32.xlu0 %v380, 32
    %v684 = vpop.permute.xlu0 %683
    %685 = vrot.lane.b32.xlu0 %v381, 32
    %v686 = vpop.permute.xlu0 %685
    %719 = vrot.lane.b32.xlu0 %v382, 40
    %v720 = vpop.permute.xlu0 %719
    %721 = vrot.lane.b32.xlu0 %v383, 40
    %v722 = vpop.permute.xlu0 %721
    %723 = vrot.lane.b32.xlu0 %v384, 40
    %v724 = vpop.permute.xlu0 %723
    %725 = vrot.lane.b32.xlu0 %v385, 40
    %v726 = vpop.permute.xlu0 %725
    %727 = vrot.lane.b32.xlu0 %v386, 40
    %v728 = vpop.permute.xlu0 %727
    %729 = vrot.lane.b32.xlu0 %v387, 40
    %v730 = vpop.permute.xlu0 %729
    %731 = vrot.lane.b32.xlu0 %v388, 40
    %v732 = vpop.permute.xlu0 %731
    %733 = vrot.lane.b32.xlu0 %v389, 40
    %v734 = vpop.permute.xlu0 %733
    %735 = vrot.lane.b32.xlu0 %v390, 40
    %v736 = vpop.permute.xlu0 %735
    %737 = vrot.lane.b32.xlu0 %v391, 40
    %v738 = vpop.permute.xlu0 %737
    %739 = vrot.lane.b32.xlu0 %v392, 40
    %v740 = vpop.permute.xlu0 %739
    %741 = vrot.lane.b32.xlu0 %v393, 40
    %v742 = vpop.permute.xlu0 %741
    %743 = vrot.lane.b32.xlu0 %v394, 40
    %v744 = vpop.permute.xlu0 %743
    %745 = vrot.lane.b32.xlu0 %v395, 40
    %v746 = vpop.permute.xlu0 %745
    %747 = vrot.lane.b32.xlu0 %v396, 40
    %v748 = vpop.permute.xlu0 %747
    %749 = vrot.lane.b32.xlu0 %v397, 40
    %v750 = vpop.permute.xlu0 %749
    %783 = vrot.lane.b32.xlu0 %v399, 48
    %v784 = vpop.permute.xlu0 %783
    %785 = vrot.lane.b32.xlu0 %v400, 48
    %v786 = vpop.permute.xlu0 %785
    %787 = vrot.lane.b32.xlu0 %v401, 48
    %v788 = vpop.permute.xlu0 %787
    %789 = vrot.lane.b32.xlu0 %v402, 48
    %v790 = vpop.permute.xlu0 %789
    %791 = vrot.lane.b32.xlu0 %v403, 48
    %v792 = vpop.permute.xlu0 %791
    %793 = vrot.lane.b32.xlu0 %v404, 48
    %v794 = vpop.permute.xlu0 %793
    %795 = vrot.lane.b32.xlu0 %v405, 48
    %v796 = vpop.permute.xlu0 %795
    %797 = vrot.lane.b32.xlu0 %v406, 48
    %v798 = vpop.permute.xlu0 %797
    %799 = vrot.lane.b32.xlu0 %v407, 48
    %v800 = vpop.permute.xlu0 %799
    %801 = vrot.lane.b32.xlu0 %v408, 48
    %v802 = vpop.permute.xlu0 %801
    %803 = vrot.lane.b32.xlu0 %v409, 48
    %v804 = vpop.permute.xlu0 %803
    %805 = vrot.lane.b32.xlu0 %v410, 48
    %v806 = vpop.permute.xlu0 %805
    %807 = vrot.lane.b32.xlu0 %v411, 48
    %v808 = vpop.permute.xlu0 %807
    %809 = vrot.lane.b32.xlu0 %v412, 48
    %v810 = vpop.permute.xlu0 %809
    %811 = vrot.lane.b32.xlu0 %v413, 48
    %v812 = vpop.permute.xlu0 %811
    %813 = vrot.lane.b32.xlu0 %v414, 48
    %v814 = vpop.permute.xlu0 %813
    %847 = vrot.lane.b32.xlu0 %v415, 56
    %v848 = vpop.permute.xlu0 %847
    %849 = vrot.lane.b32.xlu0 %v416, 56
    %v850 = vpop.permute.xlu0 %849
    %851 = vrot.lane.b32.xlu0 %v417, 56
    %v852 = vpop.permute.xlu0 %851
    %853 = vrot.lane.b32.xlu0 %v418, 56
    %v854 = vpop.permute.xlu0 %853
    %855 = vrot.lane.b32.xlu0 %v419, 56
    %v856 = vpop.permute.xlu0 %855
    %857 = vrot.lane.b32.xlu0 %v420, 56
    %v858 = vpop.permute.xlu0 %857
    %859 = vrot.lane.b32.xlu0 %v421, 56
    %v860 = vpop.permute.xlu0 %859
    %861 = vrot.lane.b32.xlu0 %v422, 56
    %v862 = vpop.permute.xlu0 %861
    %863 = vrot.lane.b32.xlu0 %v423, 56
    %v864 = vpop.permute.xlu0 %863
    %865 = vrot.lane.b32.xlu0 %v424, 56
    %v866 = vpop.permute.xlu0 %865
    %867 = vrot.lane.b32.xlu0 %v425, 56
    %v868 = vpop.permute.xlu0 %867
    %869 = vrot.lane.b32.xlu0 %v426, 56
    %v870 = vpop.permute.xlu0 %869
    %871 = vrot.lane.b32.xlu0 %v427, 56
    %v872 = vpop.permute.xlu0 %871
    %873 = vrot.lane.b32.xlu0 %v428, 56
    %v874 = vpop.permute.xlu0 %873
    %875 = vrot.lane.b32.xlu0 %v429, 56
    %v876 = vpop.permute.xlu0 %875
    %877 = vrot.lane.b32.xlu0 %v430, 56
    %v878 = vpop.permute.xlu0 %877
    %911 = vrot.lane.b32.xlu0 %v431, 64
    %v912 = vpop.permute.xlu0 %911
    %913 = vrot.lane.b32.xlu0 %v432, 64
    %v914 = vpop.permute.xlu0 %913
    %915 = vrot.lane.b32.xlu0 %v433, 64
    %v916 = vpop.permute.xlu0 %915
    %917 = vrot.lane.b32.xlu0 %v434, 64
    %v918 = vpop.permute.xlu0 %917
    %919 = vrot.lane.b32.xlu0 %v435, 64
    %v920 = vpop.permute.xlu0 %919
    %921 = vrot.lane.b32.xlu0 %v436, 64
    %v922 = vpop.permute.xlu0 %921
    %923 = vrot.lane.b32.xlu0 %v437, 64
    %v924 = vpop.permute.xlu0 %923
    %925 = vrot.lane.b32.xlu0 %v438, 64
    %v926 = vpop.permute.xlu0 %925
    %927 = vrot.lane.b32.xlu0 %v439, 64
    %v928 = vpop.permute.xlu0 %927
    %929 = vrot.lane.b32.xlu0 %v440, 64
    %v930 = vpop.permute.xlu0 %929
    %931 = vrot.lane.b32.xlu0 %v441, 64
    %v932 = vpop.permute.xlu0 %931
    %933 = vrot.lane.b32.xlu0 %v442, 64
    %v934 = vpop.permute.xlu0 %933
    %935 = vrot.lane.b32.xlu0 %v443, 64
    %v936 = vpop.permute.xlu0 %935
    %937 = vrot.lane.b32.xlu0 %v444, 64
    %v938 = vpop.permute.xlu0 %937
    %939 = vrot.lane.b32.xlu0 %v445, 64
    %v940 = vpop.permute.xlu0 %939
    %941 = vrot.lane.b32.xlu0 %v446, 64
    %v942 = vpop.permute.xlu0 %941
    %v959 = vsel %vm256, %v302, %v464
    %v960 = vsel %vm256, %v303, %v466
    %v961 = vsel %vm256, %v304, %v468
    %v962 = vsel %vm256, %v305, %v470
    %v963 = vsel %vm256, %v306, %v472
    %v964 = vsel %vm256, %v307, %v474
    %v965 = vsel %vm256, %v308, %v476
    %v966 = vsel %vm256, %v309, %v478
    %v967 = vsel %vm256, %v310, %v480
    %v968 = vsel %vm256, %v311, %v482
    %v969 = vsel %vm256, %v312, %v484
    %v970 = vsel %vm256, %v313, %v486
    %v971 = vsel %vm256, %v314, %v488
    %v972 = vsel %vm256, %v315, %v490
    %v973 = vsel %vm256, %v316, %v492
    %v974 = vsel %vm256, %v317, %v494
    %vm975 = vcmask 130048
    %v976 = vsel %vm975, %v959, %v528
    %v977 = vsel %vm975, %v960, %v530
    %v978 = vsel %vm975, %v961, %v532
    %v979 = vsel %vm975, %v962, %v534
    %v980 = vsel %vm975, %v963, %v536
    %v981 = vsel %vm975, %v964, %v538
    %v982 = vsel %vm975, %v965, %v540
    %v983 = vsel %vm975, %v966, %v542
    %v984 = vsel %vm975, %v967, %v544
    %v985 = vsel %vm975, %v968, %v546
    %v986 = vsel %vm975, %v969, %v548
    %v987 = vsel %vm975, %v970, %v550
    %v988 = vsel %vm975, %v971, %v552
    %v989 = vsel %vm975, %v972, %v554
    %v990 = vsel %vm975, %v973, %v556
    %v991 = vsel %vm975, %v974, %v558
    %vm992 = vcmask 195584
    %v993 = vsel %vm992, %v976, %v592
    %v994 = vsel %vm992, %v977, %v594
    %v995 = vsel %vm992, %v978, %v596
    %v996 = vsel %vm992, %v979, %v598
    %v997 = vsel %vm992, %v980, %v600
    %v998 = vsel %vm992, %v981, %v602
    %v999 = vsel %vm992, %v982, %v604
    %v1000 = vsel %vm992, %v983, %v606
    %v1001 = vsel %vm992, %v984, %v608
    %v1002 = vsel %vm992, %v985, %v610
    %v1003 = vsel %vm992, %v986, %v612
    %v1004 = vsel %vm992, %v987, %v614
    %v1005 = vsel %vm992, %v988, %v616
    %v1006 = vsel %vm992, %v989, %v618
    %v1007 = vsel %vm992, %v990, %v620
    %v1008 = vsel %vm992, %v991, %v622
    %vm1009 = vcmask 261120
    %v1010 = vsel %vm1009, %v993, %v656
    %v1011 = vsel %vm1009, %v994, %v658
    %v1012 = vsel %vm1009, %v995, %v660
    %v1013 = vsel %vm1009, %v996, %v662
    %v1014 = vsel %vm1009, %v997, %v664
    %v1015 = vsel %vm1009, %v998, %v666
    %v1016 = vsel %vm1009, %v999, %v668
    %v1017 = vsel %vm1009, %v1000, %v670
    %v1018 = vsel %vm1009, %v1001, %v672
    %v1019 = vsel %vm1009, %v1002, %v674
    %v1020 = vsel %vm1009, %v1003, %v676
    %v1021 = vsel %vm1009, %v1004, %v678
    %v1022 = vsel %vm1009, %v1005, %v680
    %v1023 = vsel %vm1009, %v1006, %v682
    %v1024 = vsel %vm1009, %v1007, %v684
    %v1025 = vsel %vm1009, %v1008, %v686
    %vm1026 = vcmask 326656
    %v1027 = vsel %vm1026, %v1010, %v720
    %v1028 = vsel %vm1026, %v1011, %v722
    %v1029 = vsel %vm1026, %v1012, %v724
    %v1030 = vsel %vm1026, %v1013, %v726
    %v1031 = vsel %vm1026, %v1014, %v728
    %v1032 = vsel %vm1026, %v1015, %v730
    %v1033 = vsel %vm1026, %v1016, %v732
    %v1034 = vsel %vm1026, %v1017, %v734
    %v1035 = vsel %vm1026, %v1018, %v736
    %v1036 = vsel %vm1026, %v1019, %v738
    %v1037 = vsel %vm1026, %v1020, %v740
    %v1038 = vsel %vm1026, %v1021, %v742
    %v1039 = vsel %vm1026, %v1022, %v744
    %v1040 = vsel %vm1026, %v1023, %v746
    %v1041 = vsel %vm1026, %v1024, %v748
    %v1042 = vsel %vm1026, %v1025, %v750
    %vm1043 = vcmask 392192
    %v1044 = vsel %vm1043, %v1027, %v784
    %v1045 = vsel %vm1043, %v1028, %v786
    %v1046 = vsel %vm1043, %v1029, %v788
    %v1047 = vsel %vm1043, %v1030, %v790
    %v1048 = vsel %vm1043, %v1031, %v792
    %v1049 = vsel %vm1043, %v1032, %v794
    %v1050 = vsel %vm1043, %v1033, %v796
    %v1051 = vsel %vm1043, %v1034, %v798
    %v1052 = vsel %vm1043, %v1035, %v800
    %v1053 = vsel %vm1043, %v1036, %v802
    %v1054 = vsel %vm1043, %v1037, %v804
    %v1055 = vsel %vm1043, %v1038, %v806
    %v1056 = vsel %vm1043, %v1039, %v808
    %v1057 = vsel %vm1043, %v1040, %v810
    %v1058 = vsel %vm1043, %v1041, %v812
    %v1059 = vsel %vm1043, %v1042, %v814
    %vm1060 = vcmask 457728
    %v1061 = vsel %vm1060, %v1044, %v848
    %v1062 = vsel %vm1060, %v1045, %v850
    %v1063 = vsel %vm1060, %v1046, %v852
    %v1064 = vsel %vm1060, %v1047, %v854
    %v1065 = vsel %vm1060, %v1048, %v856
    %v1066 = vsel %vm1060, %v1049, %v858
    %v1067 = vsel %vm1060, %v1050, %v860
    %v1068 = vsel %vm1060, %v1051, %v862
    %v1069 = vsel %vm1060, %v1052, %v864
    %v1070 = vsel %vm1060, %v1053, %v866
    %v1071 = vsel %vm1060, %v1054, %v868
    %v1072 = vsel %vm1060, %v1055, %v870
    %v1073 = vsel %vm1060, %v1056, %v872
    %v1074 = vsel %vm1060, %v1057, %v874
    %v1075 = vsel %vm1060, %v1058, %v876
    %v1076 = vsel %vm1060, %v1059, %v878
    %vm1077 = vcmask 523264
    %v1078 = vsel %vm1077, %v1061, %v912
    %v1079 = vsel %vm1077, %v1062, %v914
    %v1080 = vsel %vm1077, %v1063, %v916
    %v1081 = vsel %vm1077, %v1064, %v918
    %v1082 = vsel %vm1077, %v1065, %v920
    %v1083 = vsel %vm1077, %v1066, %v922
    %v1084 = vsel %vm1077, %v1067, %v924
    %v1085 = vsel %vm1077, %v1068, %v926
    %v1086 = vsel %vm1077, %v1069, %v928
    %v1087 = vsel %vm1077, %v1070, %v930
    %v1088 = vsel %vm1077, %v1071, %v932
    %v1089 = vsel %vm1077, %v1072, %v934
    %v1090 = vsel %vm1077, %v1073, %v936
    %v1091 = vsel %vm1077, %v1074, %v938
    %v1092 = vsel %vm1077, %v1075, %v940
    %v1093 = vsel %vm1077, %v1076, %v942
    %v1094 = vpack.c.bf16 %v1079, %v1078
    %v1095 = vpack.c.bf16 %v1081, %v1080
    %v1096 = vpack.c.bf16 %v1083, %v1082
    %v1097 = vpack.c.bf16 %v1085, %v1084
    %v1098 = vpack.c.bf16 %v1087, %v1086
    %v1099 = vpack.c.bf16 %v1089, %v1088
    %v1100 = vpack.c.bf16 %v1091, %v1090
    %v1101 = vpack.c.bf16 %v1093, %v1092
    %v1102 = vld [vmem:[%s6] sm:$0xf]
    %v1103 = vld [vmem:[%s6 + $0x4] sm:$0xf]
    %v1104 = vld [vmem:[%s6 + $0x8] sm:$0xf]
    %v1105 = vld [vmem:[%s6 + $0xc] sm:$0xf]
    %v1106 = vld [vmem:[%s6 + $0x10] sm:$0xf]
    %v1107 = vld [vmem:[%s6 + $0x14] sm:$0xf]
    %v1108 = vld [vmem:[%s6 + $0x18] sm:$0xf]
    %v1109 = vld [vmem:[%s6 + $0x1c] sm:$0xf]
    %v1110 = vld [vmem:[%s6 + $0x20] sm:$0xf]
    %v1111 = vld [vmem:[%s7] sm:$0x1]
    %v1113 = vperm.slane %v1111, 0
    %v1124 = vunpack.c.l.b16 %v1102
    %v1125 = vunpack.c.l.b16 %v1103
    %v1126 = vunpack.c.l.b16 %v1104
    %v1127 = vunpack.c.l.b16 %v1105
    %v1128 = vunpack.c.l.b16 %v1106
    %v1129 = vunpack.c.l.b16 %v1107
    %v1130 = vunpack.c.l.b16 %v1108
    %v1131 = vunpack.c.l.b16 %v1109
    %v1132 = vunpack.c.l.b16 %v1110
    %v1133 = vpack.c.b16 %v1125, %v1124
    %v1134 = vpack.c.b16 %v1127, %v1126
    %v1135 = vpack.c.b16 %v1129, %v1128
    %v1136 = vpack.c.b16 %v1131, %v1130
    %v1137 = vpack.c.b16 %v1132, %v1132
    %vm1142 = vcmask 588800
    %v1144 = vsel %vm1142, %v1094, 0
    %v1147 = vsel %vm1142, %v1095, 0
    %v1150 = vsel %vm1142, %v1096, 0
    %v1153 = vsel %vm1142, %v1097, 0
    %v1156 = vsel %vm1142, %v1098, 0
    %v1159 = vsel %vm1142, %v1099, 0
    %v1162 = vsel %vm1142, %v1100, 0
    %v1165 = vsel %vm1142, %v1101, 0
    %vm1167 = vcmask 1043456
    %v1169 = vsel %vm1167, %v1137, 0
    %1171 = vmatpush.bf16.msra.mxu0 0
    %1172 = vmatpush.bf16.msra.mxu0 0
    %1173 = vmatpush.bf16.msra.mxu0 0
    %1174 = vmatpush.bf16.msra.mxu0 %v1169
    %1175 = vmatpush.bf16.msra.mxu0 %v1136
    %1176 = vmatpush.bf16.msra.mxu0 %v1135
    %1177 = vmatpush.bf16.msra.mxu0 %v1134
    %1178 = vmatpush.bf16.msra.mxu0 %v1133
    %1179 = vmatmul.bf16.gmra.mxu0 %v1144
    %v1180 = vpop.f32.mrf.mxu0
    %v1181 = vadd.f32 %v1113, %v1180
    %v1182 = vpop.f32.mrf.mxu0
    %v1183 = vadd.f32 %v1113, %v1182
    %1184 = vmatmul.bf16.gmra.mxu0 %v1147
    %v1185 = vpop.f32.mrf.mxu0
    %v1186 = vadd.f32 %v1113, %v1185
    %v1187 = vpop.f32.mrf.mxu0
    %v1188 = vadd.f32 %v1113, %v1187
    %1189 = vmatmul.bf16.gmra.mxu0 %v1150
    %v1190 = vpop.f32.mrf.mxu0
    %v1191 = vadd.f32 %v1113, %v1190
    %v1192 = vpop.f32.mrf.mxu0
    %v1193 = vadd.f32 %v1113, %v1192
    %1194 = vmatmul.bf16.gmra.mxu0 %v1153
    %v1195 = vpop.f32.mrf.mxu0
    %v1196 = vadd.f32 %v1113, %v1195
    %v1197 = vpop.f32.mrf.mxu0
    %v1198 = vadd.f32 %v1113, %v1197
    %1199 = vmatmul.bf16.gmra.mxu0 %v1156
    %v1200 = vpop.f32.mrf.mxu0
    %v1201 = vadd.f32 %v1113, %v1200
    %v1202 = vpop.f32.mrf.mxu0
    %v1203 = vadd.f32 %v1113, %v1202
    %1204 = vmatmul.bf16.gmra.mxu0 %v1159
    %v1205 = vpop.f32.mrf.mxu0
    %v1206 = vadd.f32 %v1113, %v1205
    %v1207 = vpop.f32.mrf.mxu0
    %v1208 = vadd.f32 %v1113, %v1207
    %1209 = vmatmul.bf16.gmra.mxu0 %v1162
    %v1210 = vpop.f32.mrf.mxu0
    %v1211 = vadd.f32 %v1113, %v1210
    %v1212 = vpop.f32.mrf.mxu0
    %v1213 = vadd.f32 %v1113, %v1212
    %1214 = vmatmul.bf16.gmra.mxu0 %v1165
    %v1215 = vpop.f32.mrf.mxu0
    %v1216 = vadd.f32 %v1113, %v1215
    %v1217 = vpop.f32.mrf.mxu0
    %v1218 = vadd.f32 %v1113, %v1217
    %1219 = vdwg.mxu0
    %v1220 = vmax.f32 %v1181, 0.0
    %v1221 = vmax.f32 %v1183, 0.0
    %v1222 = vmax.f32 %v1186, 0.0
    %v1223 = vmax.f32 %v1188, 0.0
    %v1224 = vmax.f32 %v1191, 0.0
    %v1225 = vmax.f32 %v1193, 0.0
    %v1226 = vmax.f32 %v1196, 0.0
    %v1227 = vmax.f32 %v1198, 0.0
    %v1228 = vmax.f32 %v1201, 0.0
    %v1229 = vmax.f32 %v1203, 0.0
    %v1230 = vmax.f32 %v1206, 0.0
    %v1231 = vmax.f32 %v1208, 0.0
    %v1232 = vmax.f32 %v1211, 0.0
    %v1233 = vmax.f32 %v1213, 0.0
    %v1234 = vmax.f32 %v1216, 0.0
    %v1235 = vmax.f32 %v1218, 0.0
    %1236 = vst.msk [vmem:[%s8] sm:$0xff] %vm256, %v1220
    %1237 = vst.msk [vmem:[%s8 + $0x8] sm:$0xff] %vm256, %v1221
    %1238 = vst.msk [vmem:[%s8 + $0x10] sm:$0xff] %vm256, %v1222
    %1239 = vst.msk [vmem:[%s8 + $0x18] sm:$0xff] %vm256, %v1223
    %1240 = vst.msk [vmem:[%s8 + $0x20] sm:$0xff] %vm256, %v1224
    %1241 = vst.msk [vmem:[%s8 + $0x28] sm:$0xff] %vm256, %v1225
    %1242 = vst.msk [vmem:[%s8 + $0x30] sm:$0xff] %vm256, %v1226
    %1243 = vst.msk [vmem:[%s8 + $0x38] sm:$0xff] %vm256, %v1227
    %1244 = vst.msk [vmem:[%s8 + $0x40] sm:$0xff] %vm256, %v1228
    %1245 = vst.msk [vmem:[%s8 + $0x48] sm:$0xff] %vm256, %v1229
    %1246 = vst.msk [vmem:[%s8 + $0x50] sm:$0xff] %vm256, %v1230
    %1247 = vst.msk [vmem:[%s8 + $0x58] sm:$0xff] %vm256, %v1231
    %1248 = vst.msk [vmem:[%s8 + $0x60] sm:$0xff] %vm256, %v1232
    %1249 = vst.msk [vmem:[%s8 + $0x68] sm:$0xff] %vm256, %v1233
    %1250 = vst.msk [vmem:[%s8 + $0x70] sm:$0xff] %vm256, %v1234
    %1251 = vst.msk [vmem:[%s8 + $0x78] sm:$0xff] %vm256, %v1235
    %v1252 = vsel %vm256, %v1220, 0.0
    %v1253 = vsel %vm256, %v1221, 0.0
    %v1254 = vadd.f32 %v1252, %v1253
    %v1255 = vsel %vm256, %v1222, 0.0
    %v1256 = vadd.f32 %v1254, %v1255
    %v1257 = vsel %vm256, %v1223, 0.0
    %v1258 = vadd.f32 %v1256, %v1257
    %v1259 = vsel %vm256, %v1224, 0.0
    %v1260 = vadd.f32 %v1258, %v1259
    %v1261 = vsel %vm256, %v1225, 0.0
    %v1262 = vadd.f32 %v1260, %v1261
    %v1263 = vsel %vm256, %v1226, 0.0
    %v1264 = vadd.f32 %v1262, %v1263
    %v1265 = vsel %vm256, %v1227, 0.0
    %v1266 = vadd.f32 %v1264, %v1265
    %v1267 = vsel %vm256, %v1228, 0.0
    %v1268 = vadd.f32 %v1266, %v1267
    %v1269 = vsel %vm256, %v1229, 0.0
    %v1270 = vadd.f32 %v1268, %v1269
    %v1271 = vsel %vm256, %v1230, 0.0
    %v1272 = vadd.f32 %v1270, %v1271
    %v1273 = vsel %vm256, %v1231, 0.0
    %v1274 = vadd.f32 %v1272, %v1273
    %v1275 = vsel %vm256, %v1232, 0.0
    %v1276 = vadd.f32 %v1274, %v1275
    %v1277 = vsel %vm256, %v1233, 0.0
    %v1278 = vadd.f32 %v1276, %v1277
    %v1279 = vsel %vm256, %v1234, 0.0
    %v1280 = vadd.f32 %v1278, %v1279
    %v1281 = vsel %vm256, %v1235, 0.0
    %v1282 = vadd.f32 %v1280, %v1281
    %v1283 = vrot.slane %v1282, 4
    %v1284 = vadd.f32 %v1282, %v1283
    %v1285 = vrot.slane %v1284, 2
    %v1286 = vadd.f32 %v1284, %v1285
    %v1287 = vrot.slane %v1286, 1
    %v1288 = vadd.f32 %v1286, %v1287
    %v1289 = vmul.f32 %v1220, %v1220
    %v1290 = vmul.f32 %v1221, %v1221
    %v1291 = vmul.f32 %v1222, %v1222
    %v1292 = vmul.f32 %v1223, %v1223
    %v1293 = vmul.f32 %v1224, %v1224
    %v1294 = vmul.f32 %v1225, %v1225
    %v1295 = vmul.f32 %v1226, %v1226
    %v1296 = vmul.f32 %v1227, %v1227
    %v1297 = vmul.f32 %v1228, %v1228
    %v1298 = vmul.f32 %v1229, %v1229
    %v1299 = vmul.f32 %v1230, %v1230
    %v1300 = vmul.f32 %v1231, %v1231
    %v1301 = vmul.f32 %v1232, %v1232
    %v1302 = vmul.f32 %v1233, %v1233
    %v1303 = vmul.f32 %v1234, %v1234
    %v1304 = vmul.f32 %v1235, %v1235
    %v1305 = vsel %vm256, %v1289, 0.0
    %v1306 = vsel %vm256, %v1290, 0.0
    %v1307 = vadd.f32 %v1305, %v1306
    %v1308 = vsel %vm256, %v1291, 0.0
    %v1309 = vadd.f32 %v1307, %v1308
    %v1310 = vsel %vm256, %v1292, 0.0
    %v1311 = vadd.f32 %v1309, %v1310
    %v1312 = vsel %vm256, %v1293, 0.0
    %v1313 = vadd.f32 %v1311, %v1312
    %v1314 = vsel %vm256, %v1294, 0.0
    %v1315 = vadd.f32 %v1313, %v1314
    %v1316 = vsel %vm256, %v1295, 0.0
    %v1317 = vadd.f32 %v1315, %v1316
    %v1318 = vsel %vm256, %v1296, 0.0
    %v1319 = vadd.f32 %v1317, %v1318
    %v1320 = vsel %vm256, %v1297, 0.0
    %v1321 = vadd.f32 %v1319, %v1320
    %v1322 = vsel %vm256, %v1298, 0.0
    %v1323 = vadd.f32 %v1321, %v1322
    %v1324 = vsel %vm256, %v1299, 0.0
    %v1325 = vadd.f32 %v1323, %v1324
    %v1326 = vsel %vm256, %v1300, 0.0
    %v1327 = vadd.f32 %v1325, %v1326
    %v1328 = vsel %vm256, %v1301, 0.0
    %v1329 = vadd.f32 %v1327, %v1328
    %v1330 = vsel %vm256, %v1302, 0.0
    %v1331 = vadd.f32 %v1329, %v1330
    %v1332 = vsel %vm256, %v1303, 0.0
    %v1333 = vadd.f32 %v1331, %v1332
    %v1334 = vsel %vm256, %v1304, 0.0
    %v1335 = vadd.f32 %v1333, %v1334
    %v1336 = vrot.slane %v1335, 4
    %v1337 = vadd.f32 %v1335, %v1336
    %v1338 = vrot.slane %v1337, 2
    %v1339 = vadd.f32 %v1337, %v1338
    %v1340 = vrot.slane %v1339, 1
    %v1341 = vadd.f32 %v1339, %v1340
    %vm1342 = vcmask 1040384
    %v1343 = vsel %vm1342, %v1288, %v1341
    %vm1344 = vcmask 58368
    %1345 = vst.msk [vmem:[%s9] sm:$0x3] %vm1344, %v1343
    // Predicated region
    $region110: #{down_conv.4} parent=1 // pred_check
      _
    $region111: #{down_conv.4} parent=1 // pred_check_branch
      %1347 = sbr.rel (0) target = $region113
    $region112: #{down_conv.4} parent=1 // pred_region
      _
    $region113: #{down_conv.4} parent=1 // pred_fallthru
      _
    // Predicated region
    $region114: #{down_conv.4} parent=1 // pred_check
      _
    $region115: #{down_conv.4} parent=1 // pred_check_branch
      %1349 = sbr.rel (0) target = $region117
    $region116: #{down_conv.4} parent=1 // pred_region
      _
    $region117: #{down_conv.4} parent=1 // pred_fallthru
      _
    // Predicated region
    $region118: #{down_conv.4} parent=1 // pred_check
      _
    $region119: #{down_conv.4} parent=1 // pred_check_branch
      %1351 = sbr.rel (0) target = $region121
    $region120: #{down_conv.4} parent=1 // pred_region
      _
    $region121: #{down_conv.4} parent=1 // pred_fallthru
      _
    // Predicated region
    $region122: #{down_conv.4} parent=1 // pred_check
      _
    $region123: #{down_conv.4} parent=1 // pred_check_branch
      %1353 = sbr.rel (0) target = $region125
    $region124: #{down_conv.4} parent=1 // pred_region
      _
    $region125: #{down_conv.4} parent=1 // pred_fallthru
      _

// kernel: down_conv.3
$region0: #{down_conv.3}
  #allocation0 [shape = 'u32[]', space=smem, size = 0x4, offset = 0x4, fixed_abs, tag = 'smem constant byte address 0x4 - core index']
  #allocation1 [shape = 'u32[72,128]{1,0:T(1,128)}', space=vmem, size = 0x9000, scoped, tag = 'internal scratch']
  #allocation2 [shape = 'f32[2,10,10,4]{3,2,1,0:T(8,128)}', space=vmem, size = 0x28000, scoped, tag = 'scratch operand']
  %s0 = inlined_call_operand.vmem [shape: f32[2,16,8,8], index: 0, kind: input, shape index: {}, may-alias: {0,1,2}]
  %s1 = inlined_call_operand.vmem [shape: f32[2,16,8,8], index: 1, kind: input, shape index: {}, may-alias: {0,1,2}]
  %s2 = inlined_call_operand.vmem [shape: f32[2,16,8,8], index: 2, kind: input, shape index: {}, may-alias: {0,1,2}]
  %s3 = inlined_call_operand.vmem [shape: bf16[36,8], index: 3, kind: input, shape index: {}]
  %s4 = inlined_call_operand.vmem [shape: f32[1,8], index: 4, kind: input, shape index: {}]
  %s5 = inlined_call_operand.vmem [shape: f32[2,8,8,8], index: 5, kind: output, shape index: {0}]
  %s6 = inlined_call_operand.vmem [shape: f32[1,2,8], index: 6, kind: output, shape index: {1}]
  %7 = xla_tuple %s5, %s6
  %s8 = sld [smem:[#allocation0]]
  $region114: #{down_conv.3} parent=0
    _
  %s10 = ssub.s32 1, %s8
  %s11 = scalar_select 0, %s10, %s8
  $region1: #{down_conv.3} parent=0
    #allocation3 [shape = 'u8[16384]{0}', space=vmem, size = 0x4000, scoped, tag = 'input window, operand 1, single buffered']
    #allocation4 [shape = 'u8[16384]{0}', space=vmem, size = 0x4000, scoped, tag = 'input window, operand 2, single buffered']
    // Predicated region
    $region2: #{down_conv.3} parent=1 // pred_check
      _
    $region3: #{down_conv.3} parent=1 // pred_check_branch
      %13 = sbr.rel (0) target = $region5
    $region4: #{down_conv.3} parent=1 // pred_region
      _
    $region5: #{down_conv.3} parent=1 // pred_fallthru
      _
    // Predicated region
    $region6: #{down_conv.3} parent=1 // pred_check
      _
    $region7: #{down_conv.3} parent=1 // pred_check_branch
      %15 = sbr.rel (0) target = $region9
    $region8: #{down_conv.3} parent=1 // pred_region
      %s16 = smul.u32 0, 8
      %s17 = ssub.s32 %s16, 1
      %p18 = scmp.gt.s32.totalorder %s17, 0
      %s19 = scalar_select %p18, %s17, 0
      %s20 = smul.u32 2, %s19
      %s21 = smul.addr %s20, 8
      %s22 = scalar_lea.vmem %s1, %s21
      // Predicated region
      $region10: #{down_conv.3} parent=8 // pred_check
        _
      $region11: #{down_conv.3} parent=8 // pred_check_branch
        %24 = sbr.rel (0) target = $region13
      $region12: #{down_conv.3} parent=8 // pred_region
        // Predicated region
        $region14: #{down_conv.3} parent=12 // pred_check
          _
        $region15: #{down_conv.3} parent=12 // pred_check_branch
          %26 = sbr.rel (0) target = $region17
        $region16: #{down_conv.3} parent=12 // pred_region
          // Predicated region
          $region29: #{down_conv.3} parent=16 // pred_check
            _
          $region30: #{down_conv.3} parent=16 // pred_check_branch
            %48 = sbr.rel (0) target = $region32
          $region31: #{down_conv.3} parent=16 // pred_region
            loop: start=0, step=1, limit=1
            $region33: #{down_conv.3} parent=31 // loop_pre_header
              _
            $region34: #{down_conv.3} parent=31 // loop_header
              %s50 = sphi 0, %s54
              %p51 = scmp.ge.s32.totalorder %s50, 1
              %s55 = sphi %s22, %s22
              %s56 = sphi [#allocation3], [#allocation3]
            $region35: #{down_conv.3} parent=31 // loop_header_branch
              %53 = sbr.rel (%p51) target = $region39
            $region36: #{down_conv.3} parent=31 // loop_body
              %v57 = vld [vmem:[%s55] sm:$0xff]
              %58 = vst [vmem:[%s56] sm:$0xff] %v57
              %v59 = vld [vmem:[%s55 + $0x8] sm:$0xff]
              %60 = vst [vmem:[%s56 + $0x8] sm:$0xff] %v59
              %v61 = vld [vmem:[%s55 + $0x80] sm:$0xff]
              %62 = vst [vmem:[%s56 + $0x10] sm:$0xff] %v61
              %v63 = vld [vmem:[%s55 + $0x88] sm:$0xff]
              %64 = vst [vmem:[%s56 + $0x18] sm:$0xff] %v63
            $region37: #{down_conv.3} parent=31 // loop_footer
              %s54 = sadd.s32 1, %s50
            $region38: #{down_conv.3} parent=31 // loop_footer_branch
              %49 = sbr.rel target = $region34
            $region39: #{down_conv.3} parent=31 // loop_exit
              _
          $region32: #{down_conv.3} parent=16 // pred_fallthru
            _
          // Predicated region
          $region40: #{down_conv.3} parent=16 // pred_check
            _
          $region41: #{down_conv.3} parent=16 // pred_check_branch
            %66 = sbr.rel target = $region43
          $region42: #{down_conv.3} parent=16 // pred_region
            _
          $region43: #{down_conv.3} parent=16 // pred_fallthru
            _
        $region17: #{down_conv.3} parent=12 // pred_fallthru
          _
        // Predicated region
        $region18: #{down_conv.3} parent=12 // pred_check
          _
        $region19: #{down_conv.3} parent=12 // pred_check_branch
          %28 = sbr.rel target = $region21
        $region20: #{down_conv.3} parent=12 // pred_region
          %s30 = ssub.s32 256, 1
          loop: start=0, step=1, limit=1
          $region22: #{down_conv.3} parent=20 // loop_pre_header
            _
          $region23: #{down_conv.3} parent=20 // loop_header
            %s32 = sphi 0, %s36
            %p33 = scmp.ge.s32.totalorder %s32, 1
            %s37 = sphi %s22, %s22
            %s38 = sphi [#allocation3], [#allocation3]
          $region24: #{down_conv.3} parent=20 // loop_header_branch
            %35 = sbr.rel (%p33) target = $region28
          $region25: #{down_conv.3} parent=20 // loop_body
            %v39 = vld [vmem:[%s37] sm:%s30]
            %40 = vst [vmem:[%s38] sm:%s30] %v39
            %v41 = vld [vmem:[%s37 + $0x8] sm:%s30]
            %42 = vst [vmem:[%s38 + $0x8] sm:%s30] %v41
            %v43 = vld [vmem:[%s37 + $0x80] sm:%s30]
            %44 = vst [vmem:[%s38 + $0x10] sm:%s30] %v43
            %v45 = vld [vmem:[%s37 + $0x88] sm:%s30]
            %46 = vst [vmem:[%s38 + $0x18] sm:%s30] %v45
          $region26: #{down_conv.3} parent=20 // loop_footer
            %s36 = sadd.s32 1, %s32
          $region27: #{down_conv.3} parent=20 // loop_footer_branch
            %31 = sbr.rel target = $region23
          $region28: #{down_conv.3} parent=20 // loop_exit
            _
        $region21: #{down_conv.3} parent=12 // pred_fallthru
          _
      $region13: #{down_conv.3} parent=8 // pred_fallthru
        _
      %67 = vnop
    $region9: #{down_conv.3} parent=1 // pred_fallthru
      _
    // Predicated region
    $region44: #{down_conv.3} parent=1 // pred_check
      _
    $region45: #{down_conv.3} parent=1 // pred_check_branch
      %69 = sbr.rel (0) target = $region47
    $region46: #{down_conv.3} parent=1 // pred_region
      %s70 = sadd.s32 0, 1
      %s71 = smul.u32 %s70, 8
      %p72 = scmp.lt.s32.totalorder %s71, 7
      %s73 = scalar_select %p72, %s71, 7
      %s74 = smul.u32 2, %s73
      %s75 = smul.addr %s74, 8
      %s76 = scalar_lea.vmem %s2, %s75
      // Predicated region
      $region48: #{down_conv.3} parent=46 // pred_check
        _
      $region49: #{down_conv.3} parent=46 // pred_check_branch
        %78 = sbr.rel (0) target = $region51
      $region50: #{down_conv.3} parent=46 // pred_region
        // Predicated region
        $region52: #{down_conv.3} parent=50 // pred_check
          _
        $region53: #{down_conv.3} parent=50 // pred_check_branch
          %80 = sbr.rel (0) target = $region55
        $region54: #{down_conv.3} parent=50 // pred_region
          // Predicated region
          $region67: #{down_conv.3} parent=54 // pred_check
            _
          $region68: #{down_conv.3} parent=54 // pred_check_branch
            %102 = sbr.rel (0) target = $region70
          $region69: #{down_conv.3} parent=54 // pred_region
            loop: start=0, step=1, limit=1
            $region71: #{down_conv.3} parent=69 // loop_pre_header
              _
            $region72: #{down_conv.3} parent=69 // loop_header
              %s104 = sphi 0, %s108
              %p105 = scmp.ge.s32.totalorder %s104, 1
              %s109 = sphi %s76, %s76
              %s110 = sphi [#allocation4], [#allocation4]
            $region73: #{down_conv.3} parent=69 // loop_header_branch
              %107 = sbr.rel (%p105) target = $region77
            $region74: #{down_conv.3} parent=69 // loop_body
              %v111 = vld [vmem:[%s109] sm:$0xff]
              %112 = vst [vmem:[%s110] sm:$0xff] %v111
              %v113 = vld [vmem:[%s109 + $0x8] sm:$0xff]
              %114 = vst [vmem:[%s110 + $0x8] sm:$0xff] %v113
              %v115 = vld [vmem:[%s109 + $0x80] sm:$0xff]
              %116 = vst [vmem:[%s110 + $0x10] sm:$0xff] %v115
              %v117 = vld [vmem:[%s109 + $0x88] sm:$0xff]
              %118 = vst [vmem:[%s110 + $0x18] sm:$0xff] %v117
            $region75: #{down_conv.3} parent=69 // loop_footer
              %s108 = sadd.s32 1, %s104
            $region76: #{down_conv.3} parent=69 // loop_footer_branch
              %103 = sbr.rel target = $region72
            $region77: #{down_conv.3} parent=69 // loop_exit
              _
          $region70: #{down_conv.3} parent=54 // pred_fallthru
            _
          // Predicated region
          $region78: #{down_conv.3} parent=54 // pred_check
            _
          $region79: #{down_conv.3} parent=54 // pred_check_branch
            %120 = sbr.rel target = $region81
          $region80: #{down_conv.3} parent=54 // pred_region
            _
          $region81: #{down_conv.3} parent=54 // pred_fallthru
            _
        $region55: #{down_conv.3} parent=50 // pred_fallthru
          _
        // Predicated region
        $region56: #{down_conv.3} parent=50 // pred_check
          _
        $region57: #{down_conv.3} parent=50 // pred_check_branch
          %82 = sbr.rel target = $region59
        $region58: #{down_conv.3} parent=50 // pred_region
          %s84 = ssub.s32 256, 1
          loop: start=0, step=1, limit=1
          $region60: #{down_conv.3} parent=58 // loop_pre_header
            _
          $region61: #{down_conv.3} parent=58 // loop_header
            %s86 = sphi 0, %s90
            %p87 = scmp.ge.s32.totalorder %s86, 1
            %s91 = sphi %s76, %s76
            %s92 = sphi [#allocation4], [#allocation4]
          $region62: #{down_conv.3} parent=58 // loop_header_branch
            %89 = sbr.rel (%p87) target = $region66
          $region63: #{down_conv.3} parent=58 // loop_body
            %v93 = vld [vmem:[%s91] sm:%s84]
            %94 = vst [vmem:[%s92] sm:%s84] %v93
            %v95 = vld [vmem:[%s91 + $0x8] sm:%s84]
            %96 = vst [vmem:[%s92 + $0x8] sm:%s84] %v95
            %v97 = vld [vmem:[%s91 + $0x80] sm:%s84]
            %98 = vst [vmem:[%s92 + $0x10] sm:%s84] %v97
            %v99 = vld [vmem:[%s91 + $0x88] sm:%s84]
            %100 = vst [vmem:[%s92 + $0x18] sm:%s84] %v99
          $region64: #{down_conv.3} parent=58 // loop_footer
            %s90 = sadd.s32 1, %s86
          $region65: #{down_conv.3} parent=58 // loop_footer_branch
            %85 = sbr.rel target = $region61
          $region66: #{down_conv.3} parent=58 // loop_exit
            _
        $region59: #{down_conv.3} parent=50 // pred_fallthru
          _
      $region51: #{down_conv.3} parent=46 // pred_fallthru
        _
      %121 = vnop
    $region47: #{down_conv.3} parent=1 // pred_fallthru
      _
    // Predicated region
    $region82: #{down_conv.3} parent=1 // pred_check
      _
    $region83: #{down_conv.3} parent=1 // pred_check_branch
      %123 = sbr.rel (0) target = $region85
    $region84: #{down_conv.3} parent=1 // pred_region
      _
    $region85: #{down_conv.3} parent=1 // pred_fallthru
      _
    // Predicated region
    $region86: #{down_conv.3} parent=1 // pred_check
      _
    $region87: #{down_conv.3} parent=1 // pred_check_branch
      %125 = sbr.rel (0) target = $region89
    $region88: #{down_conv.3} parent=1 // pred_region
      _
    $region89: #{down_conv.3} parent=1 // pred_fallthru
      _
    // Predicated region
    $region90: #{down_conv.3} parent=1 // pred_check
      _
    $region91: #{down_conv.3} parent=1 // pred_check_branch
      %127 = sbr.rel (0) target = $region93
    $region92: #{down_conv.3} parent=1 // pred_region
      _
    $region93: #{down_conv.3} parent=1 // pred_fallthru
      _
    // Predicated region
    $region94: #{down_conv.3} parent=1 // pred_check
      _
    $region95: #{down_conv.3} parent=1 // pred_check_branch
      %129 = sbr.rel (0) target = $region97
    $region96: #{down_conv.3} parent=1 // pred_region
      _
    $region97: #{down_conv.3} parent=1 // pred_fallthru
      _
    %s130 = smul.u32 0, 8
    %s131 = ssub.s32 %s130, 1
    %p132 = scmp.gt.s32.totalorder %s131, 0
    %s133 = scalar_select %p132, %s131, 0
    %s134 = smul.u32 2, %s133
    %s135 = sadd.s32 0, 1
    %s136 = smul.u32 %s135, 8
    %p137 = scmp.lt.s32.totalorder %s136, 7
    %s138 = scalar_select %p137, %s136, 7
    %s139 = smul.u32 2, %s138
    %vm141 = vcmask 24576
    %142 = vst.msk [vmem:[#allocation2] sm:$0x1] %vm141, 0.0
    %143 = vst.msk [vmem:[#allocation2 + $0x10] sm:$0x1] %vm141, 0.0
    %144 = vst.msk [vmem:[#allocation2 + $0x20] sm:$0x1] %vm141, 0.0
    %145 = vst.msk [vmem:[#allocation2 + $0x30] sm:$0x1] %vm141, 0.0
    %146 = vst.msk [vmem:[#allocation2 + $0x40] sm:$0x1] %vm141, 0.0
    %147 = vst.msk [vmem:[#allocation2 + $0x50] sm:$0x1] %vm141, 0.0
    %148 = vst.msk [vmem:[#allocation2 + $0x60] sm:$0x1] %vm141, 0.0
    %149 = vst.msk [vmem:[#allocation2 + $0x70] sm:$0x1] %vm141, 0.0
    %150 = vst.msk [vmem:[#allocation2 + $0x80] sm:$0x1] %vm141, 0.0
    %151 = vst.msk [vmem:[#allocation2 + $0x90] sm:$0x1] %vm141, 0.0
    %152 = vst.msk [vmem:[#allocation2 + $0xa0] sm:$0x1] %vm141, 0.0
    %153 = vst.msk [vmem:[#allocation2 + $0xb0] sm:$0x1] %vm141, 0.0
    %154 = vst.msk [vmem:[#allocation2 + $0xc0] sm:$0x1] %vm141, 0.0
    %155 = vst.msk [vmem:[#allocation2 + $0xd0] sm:$0x1] %vm141, 0.0
    %156 = vst.msk [vmem:[#allocation2 + $0xe0] sm:$0x1] %vm141, 0.0
    %157 = vst.msk [vmem:[#allocation2 + $0xf0] sm:$0x1] %vm141, 0.0
    %158 = vst.msk [vmem:[#allocation2 + $0x100] sm:$0x1] %vm141, 0.0
    %159 = vst.msk [vmem:[#allocation2 + $0x110] sm:$0x1] %vm141, 0.0
    %160 = vst.msk [vmem:[#allocation2 + $0x120] sm:$0x1] %vm141, 0.0
    %161 = vst.msk [vmem:[#allocation2 + $0x130] sm:$0x1] %vm141, 0.0
    %162 = vst.msk [vmem:[#allocation2 + $0x9] sm:$0x1] %vm141, 0.0
    %163 = vst.msk [vmem:[#allocation2 + $0x19] sm:$0x1] %vm141, 0.0
    %164 = vst.msk [vmem:[#allocation2 + $0x29] sm:$0x1] %vm141, 0.0
    %165 = vst.msk [vmem:[#allocation2 + $0x39] sm:$0x1] %vm141, 0.0
    %166 = vst.msk [vmem:[#allocation2 + $0x49] sm:$0x1] %vm141, 0.0
    %167 = vst.msk [vmem:[#allocation2 + $0x59] sm:$0x1] %vm141, 0.0
    %168 = vst.msk [vmem:[#allocation2 + $0x69] sm:$0x1] %vm141, 0.0
    %169 = vst.msk [vmem:[#allocation2 + $0x79] sm:$0x1] %vm141, 0.0
    %170 = vst.msk [vmem:[#allocation2 + $0x89] sm:$0x1] %vm141, 0.0
    %171 = vst.msk [vmem:[#allocation2 + $0x99] sm:$0x1] %vm141, 0.0
    %172 = vst.msk [vmem:[#allocation2 + $0xa9] sm:$0x1] %vm141, 0.0
    %173 = vst.msk [vmem:[#allocation2 + $0xb9] sm:$0x1] %vm141, 0.0
    %174 = vst.msk [vmem:[#allocation2 + $0xc9] sm:$0x1] %vm141, 0.0
    %175 = vst.msk [vmem:[#allocation2 + $0xd9] sm:$0x1] %vm141, 0.0
    %176 = vst.msk [vmem:[#allocation2 + $0xe9] sm:$0x1] %vm141, 0.0
    %177 = vst.msk [vmem:[#allocation2 + $0xf9] sm:$0x1] %vm141, 0.0
    %178 = vst.msk [vmem:[#allocation2 + $0x109] sm:$0x1] %vm141, 0.0
    %179 = vst.msk [vmem:[#allocation2 + $0x119] sm:$0x1] %vm141, 0.0
    %180 = vst.msk [vmem:[#allocation2 + $0x129] sm:$0x1] %vm141, 0.0
    %181 = vst.msk [vmem:[#allocation2 + $0x139] sm:$0x1] %vm141, 0.0
    %v182 = vld [vmem:[%s0] sm:$0xff]
    %v183 = vld [vmem:[%s0 + $0x8] sm:$0xff]
    %v184 = vld [vmem:[%s0 + $0x10] sm:$0xff]
    %v185 = vld [vmem:[%s0 + $0x18] sm:$0xff]
    %v186 = vld [vmem:[%s0 + $0x20] sm:$0xff]
    %v187 = vld [vmem:[%s0 + $0x28] sm:$0xff]
    %v188 = vld [vmem:[%s0 + $0x30] sm:$0xff]
    %v189 = vld [vmem:[%s0 + $0x38] sm:$0xff]
    %v190 = vld [vmem:[%s0 + $0x40] sm:$0xff]
    %v191 = vld [vmem:[%s0 + $0x48] sm:$0xff]
    %v192 = vld [vmem:[%s0 + $0x50] sm:$0xff]
    %v193 = vld [vmem:[%s0 + $0x58] sm:$0xff]
    %v194 = vld [vmem:[%s0 + $0x60] sm:$0xff]
    %v195 = vld [vmem:[%s0 + $0x68] sm:$0xff]
    %v196 = vld [vmem:[%s0 + $0x70] sm:$0xff]
    %v197 = vld [vmem:[%s0 + $0x78] sm:$0xff]
    %v198 = vld [vmem:[%s0 + $0x80] sm:$0xff]
    %v199 = vld [vmem:[%s0 + $0x88] sm:$0xff]
    %v200 = vld [vmem:[%s0 + $0x90] sm:$0xff]
    %v201 = vld [vmem:[%s0 + $0x98] sm:$0xff]
    %v202 = vld [vmem:[%s0 + $0xa0] sm:$0xff]
    %v203 = vld [vmem:[%s0 + $0xa8] sm:$0xff]
    %v204 = vld [vmem:[%s0 + $0xb0] sm:$0xff]
    %v205 = vld [vmem:[%s0 + $0xb8] sm:$0xff]
    %v206 = vld [vmem:[%s0 + $0xc0] sm:$0xff]
    %v207 = vld [vmem:[%s0 + $0xc8] sm:$0xff]
    %v208 = vld [vmem:[%s0 + $0xd0] sm:$0xff]
    %v209 = vld [vmem:[%s0 + $0xd8] sm:$0xff]
    %v210 = vld [vmem:[%s0 + $0xe0] sm:$0xff]
    %v211 = vld [vmem:[%s0 + $0xe8] sm:$0xff]
    %v212 = vld [vmem:[%s0 + $0xf0] sm:$0xff]
    %v213 = vld [vmem:[%s0 + $0xf8] sm:$0xff]
    %vm214 = vcmask 64512
    %v215 = vsel %vm214, %v182, -inf
    %v216 = vsel %vm214, %v183, -inf
    %v217 = vmax.f32 %v215, %v216
    %v218 = vsel %vm214, %v184, -inf
    %v219 = vsel %vm214, %v185, -inf
    %v220 = vmax.f32 %v218, %v219
    %v221 = vsel %vm214, %v186, -inf
    %v222 = vsel %vm214, %v187, -inf
    %v223 = vmax.f32 %v221, %v222
    %v224 = vsel %vm214, %v188, -inf
    %v225 = vsel %vm214, %v189, -inf
    %v226 = vmax.f32 %v224, %v225
    %v227 = vsel %vm214, %v190, -inf
    %v228 = vsel %vm214, %v191, -inf
    %v229 = vmax.f32 %v227, %v228
    %v230 = vsel %vm214, %v192, -inf
    %v231 = vsel %vm214, %v193, -inf
    %v232 = vmax.f32 %v230, %v231
    %v233 = vsel %vm214, %v194, -inf
    %v234 = vsel %vm214, %v195, -inf
    %v235 = vmax.f32 %v233, %v234
    %v236 = vsel %vm214, %v196, -inf
    %v237 = vsel %vm214, %v197, -inf
    %v238 = vmax.f32 %v236, %v237
    %v239 = vsel %vm214, %v198, -inf
    %v240 = vsel %vm214, %v199, -inf
    %v241 = vmax.f32 %v239, %v240
    %v242 = vsel %vm214, %v200, -inf
    %v243 = vsel %vm214, %v201, -inf
    %v244 = vmax.f32 %v242, %v243
    %v245 = vsel %vm214, %v202, -inf
    %v246 = vsel %vm214, %v203, -inf
    %v247 = vmax.f32 %v245, %v246
    %v248 = vsel %vm214, %v204, -inf
    %v249 = vsel %vm214, %v205, -inf
    %v250 = vmax.f32 %v248, %v249
    %v251 = vsel %vm214, %v206, -inf
    %v252 = vsel %vm214, %v207, -inf
    %v253 = vmax.f32 %v251, %v252
    %v254 = vsel %vm214, %v208, -inf
    %v255 = vsel %vm214, %v209, -inf
    %v256 = vmax.f32 %v254, %v255
    %v257 = vsel %vm214, %v210, -inf
    %v258 = vsel %vm214, %v211, -inf
    %v259 = vmax.f32 %v257, %v258
    %v260 = vsel %vm214, %v212, -inf
    %v261 = vsel %vm214, %v213, -inf
    %v262 = vmax.f32 %v260, %v261
    %279 = vrot.lane.b32.xlu0 %v217, 124
    %v280 = vpop.permute.xlu0 %279
    %281 = vrot.lane.b32.xlu0 %v220, 124
    %v282 = vpop.permute.xlu0 %281
    %283 = vrot.lane.b32.xlu0 %v223, 124
    %v284 = vpop.permute.xlu0 %283
    %285 = vrot.lane.b32.xlu0 %v226, 124
    %v286 = vpop.permute.xlu0 %285
    %287 = vrot.lane.b32.xlu0 %v229, 124
    %v288 = vpop.permute.xlu0 %287
    %289 = vrot.lane.b32.xlu0 %v232, 124
    %v290 = vpop.permute.xlu0 %289
    %291 = vrot.lane.b32.xlu0 %v235, 124
    %v292 = vpop.permute.xlu0 %291
    %293 = vrot.lane.b32.xlu0 %v238, 124
    %v294 = vpop.permute.xlu0 %293
    %295 = vrot.lane.b32.xlu0 %v241, 124
    %v296 = vpop.permute.xlu0 %295
    %297 = vrot.lane.b32.xlu0 %v244, 124
    %v298 = vpop.permute.xlu0 %297
    %299 = vrot.lane.b32.xlu0 %v247, 124
    %v300 = vpop.permute.xlu0 %299
    %301 = vrot.lane.b32.xlu0 %v250, 124
    %v302 = vpop.permute.xlu0 %301
    %303 = vrot.lane.b32.xlu0 %v253, 124
    %v304 = vpop.permute.xlu0 %303
    %305 = vrot.lane.b32.xlu0 %v256, 124
    %v306 = vpop.permute.xlu0 %305
    %307 = vrot.lane.b32.xlu0 %v259, 124
    %v308 = vpop.permute.xlu0 %307
    %309 = vrot.lane.b32.xlu0 %v262, 124
    %v310 = vpop.permute.xlu0 %309
    %v327 = vmax.f32 %v217, %v280
    %v328 = vmax.f32 %v220, %v282
    %v329 = vmax.f32 %v223, %v284
    %v330 = vmax.f32 %v226, %v286
    %v331 = vmax.f32 %v229, %v288
    %v332 = vmax.f32 %v232, %v290
    %v333 = vmax.f32 %v235, %v292
    %v334 = vmax.f32 %v238, %v294
    %v335 = vmax.f32 %v241, %v296
    %v336 = vmax.f32 %v244, %v298
    %v337 = vmax.f32 %v247, %v300
    %v338 = vmax.f32 %v250, %v302
    %v339 = vmax.f32 %v253, %v304
    %v340 = vmax.f32 %v256, %v306
    %v341 = vmax.f32 %v259, %v308
    %v342 = vmax.f32 %v262, %v310
    %s343 = scalar_lea.vmem [#allocation2], 16
    %vm344 = vcmask 31744
    %345 = vst.msk [vmem:[%s343 + $0x1] sm:$0xff] %vm344, %v327
    %346 = vst.msk [vmem:[%s343 + $0x11] sm:$0xff] %vm344, %v328
    %347 = vst.msk [vmem:[%s343 + $0x21] sm:$0xff] %vm344, %v329
    %348 = vst.msk [vmem:[%s343 + $0x31] sm:$0xff] %vm344, %v330
    %349 = vst.msk [vmem:[%s343 + $0x41] sm:$0xff] %vm344, %v331
    %350 = vst.msk [vmem:[%s343 + $0x51] sm:$0xff] %vm344, %v332
    %351 = vst.msk [vmem:[%s343 + $0x61] sm:$0xff] %vm344, %v333
    %352 = vst.msk [vmem:[%s343 + $0x71] sm:$0xff] %vm344, %v334
    %353 = vst.msk [vmem:[%s343 + $0xa1] sm:$0xff] %vm344, %v335
    %354 = vst.msk [vmem:[%s343 + $0xb1] sm:$0xff] %vm344, %v336
    %355 = vst.msk [vmem:[%s343 + $0xc1] sm:$0xff] %vm344, %v337
    %356 = vst.msk [vmem:[%s343 + $0xd1] sm:$0xff] %vm344, %v338
    %357 = vst.msk [vmem:[%s343 + $0xe1] sm:$0xff] %vm344, %v339
    %358 = vst.msk [vmem:[%s343 + $0xf1] sm:$0xff] %vm344, %v340
    %359 = vst.msk [vmem:[%s343 + $0x101] sm:$0xff] %vm344, %v341
    %360 = vst.msk [vmem:[%s343 + $0x111] sm:$0xff] %vm344, %v342
    %p361 = scmp.gt.s32.totalorder 0, 0
    %s362 = scalar_select %p361, 1, 0
    %s363 = scvt.s32.f32 %s362
    %p364 = scmp.lt.s32.totalorder 0, 0
    %s365 = scalar_select %p364, 1, 0
    %s366 = scvt.s32.f32 %s365
    %v367 = vld [vmem:[#allocation3] sm:$0xff]
    %v368 = vld [vmem:[#allocation3 + $0x8] sm:$0xff]
    %v369 = vld [vmem:[#allocation3 + $0x10] sm:$0xff]
    %v370 = vld [vmem:[#allocation3 + $0x18] sm:$0xff]
    %v371 = vsel %vm214, %v367, -inf
    %v372 = vsel %vm214, %v368, -inf
    %v373 = vmax.f32 %v371, %v372
    %v374 = vsel %vm214, %v369, -inf
    %v375 = vsel %vm214, %v370, -inf
    %v376 = vmax.f32 %v374, %v375
    %379 = vrot.lane.b32.xlu0 %v373, 124
    %v380 = vpop.permute.xlu0 %379
    %381 = vrot.lane.b32.xlu0 %v376, 124
    %v382 = vpop.permute.xlu0 %381
    %v385 = vmax.f32 %v373, %v380
    %v386 = vmax.f32 %v376, %v382
    %v387 = vstv %s363
    %v388 = vmul.f32 %v385, %v387
    %v389 = vmul.f32 %v386, %v387
    %390 = vst.msk [vmem:[#allocation2 + $0x1] sm:$0xff] %vm344, %v388
    %391 = vst.msk [vmem:[#allocation2 + $0xa1] sm:$0xff] %vm344, %v389
    %v392 = vld [vmem:[#allocation4] sm:$0xff]
    %v393 = vld [vmem:[#allocation4 + $0x8] sm:$0xff]
    %v394 = vld [vmem:[#allocation4 + $0x10] sm:$0xff]
    %v395 = vld [vmem:[#allocation4 + $0x18] sm:$0xff]
    %v396 = vsel %vm214, %v392, -inf
    %v397 = vsel %vm214, %v393, -inf
    %v398 = vmax.f32 %v396, %v397
    %v399 = vsel %vm214, %v394, -inf
    %v400 = vsel %vm214, %v395, -inf
    %v401 = vmax.f32 %v399, %v400
    %404 = vrot.lane.b32.xlu0 %v398, 124
    %v405 = vpop.permute.xlu0 %404
    %406 = vrot.lane.b32.xlu0 %v401, 124
    %v407 = vpop.permute.xlu0 %406
    %v410 = vmax.f32 %v398, %v405
    %v411 = vmax.f32 %v401, %v407
    %v412 = vstv %s366
    %v413 = vmul.f32 %v410, %v412
    %v414 = vmul.f32 %v411, %v412
    %s415 = scalar_lea.vmem [#allocation2], 144
    %416 = vst.msk [vmem:[%s415 + $0x1] sm:$0xff] %vm344, %v413
    %417 = vst.msk [vmem:[%s415 + $0xa1] sm:$0xff] %vm344, %v414
    %v418 = vld [vmem:[#allocation2] sm:$0xff]
    %v419 = vld [vmem:[#allocation2 + $0x10] sm:$0xff]
    %v420 = vld [vmem:[#allocation2 + $0x20] sm:$0xff]
    %v421 = vld [vmem:[#allocation2 + $0x30] sm:$0xff]
    %v422 = vld [vmem:[#allocation2 + $0x40] sm:$0xff]
    %v423 = vld [vmem:[#allocation2 + $0x50] sm:$0xff]
    %v424 = vld [vmem:[#allocation2 + $0x60] sm:$0xff]
    %v425 = vld [vmem:[#allocation2 + $0x70] sm:$0xff]
    %v426 = vld [vmem:[#allocation2 + $0xa0] sm:$0xff]
    %v427 = vld [vmem:[#allocation2 + $0xb0] sm:$0xff]
    %v428 = vld [vmem:[#allocation2 + $0xc0] sm:$0xff]
    %v429 = vld [vmem:[#allocation2 + $0xd0] sm:$0xff]
    %v430 = vld [vmem:[#allocation2 + $0xe0] sm:$0xff]
    %v431 = vld [vmem:[#allocation2 + $0xf0] sm:$0xff]
    %v432 = vld [vmem:[#allocation2 + $0x100] sm:$0xff]
    %v433 = vld [vmem:[#allocation2 + $0x110] sm:$0xff]
    %v434 = vld [vmem:[#allocation2 + $0x1] sm:$0xff]
    %v435 = vld [vmem:[#allocation2 + $0x11] sm:$0xff]
    %v436 = vld [vmem:[#allocation2 + $0x21] sm:$0xff]
    %v437 = vld [vmem:[#allocation2 + $0x31] sm:$0xff]
    %v438 = vld [vmem:[#allocation2 + $0x41] sm:$0xff]
    %v439 = vld [vmem:[#allocation2 + $0x51] sm:$0xff]
    %v440 = vld [vmem:[#allocation2 + $0x61] sm:$0xff]
    %v441 = vld [vmem:[#allocation2 + $0x71] sm:$0xff]
    %v442 = vld [vmem:[#allocation2 + $0xa1] sm:$0xff]
    %v443 = vld [vmem:[#allocation2 + $0xb1] sm:$0xff]
    %v444 = vld [vmem:[#allocation2 + $0xc1] sm:$0xff]
    %v445 = vld [vmem:[#allocation2 + $0xd1] sm:$0xff]
    %v446 = vld [vmem:[#allocation2 + $0xe1] sm:$0xff]
    %v447 = vld [vmem:[#allocation2 + $0xf1] sm:$0xff]
    %v448 = vld [vmem:[#allocation2 + $0x101] sm:$0xff]
    %v449 = vld [vmem:[#allocation2 + $0x111] sm:$0xff]
    %v450 = vld [vmem:[#allocation2 + $0x2] sm:$0xff]
    %v451 = vld [vmem:[#allocation2 + $0x12] sm:$0xff]
    %v452 = vld [vmem:[#allocation2 + $0x22] sm:$0xff]
    %v453 = vld [vmem:[#allocation2 + $0x32] sm:$0xff]
    %v454 = vld [vmem:[#allocation2 + $0x42] sm:$0xff]
    %v455 = vld [vmem:[#allocation2 + $0x52] sm:$0xff]
    %v456 = vld [vmem:[#allocation2 + $0x62] sm:$0xff]
    %v457 = vld [vmem:[#allocation2 + $0x72] sm:$0xff]
    %v458 = vld [vmem:[#allocation2 + $0xa2] sm:$0xff]
    %v459 = vld [vmem:[#allocation2 + $0xb2] sm:$0xff]
    %v460 = vld [vmem:[#allocation2 + $0xc2] sm:$0xff]
    %v461 = vld [vmem:[#allocation2 + $0xd2] sm:$0xff]
    %v462 = vld [vmem:[#allocation2 + $0xe2] sm:$0xff]
    %v463 = vld [vmem:[#allocation2 + $0xf2] sm:$0xff]
    %v464 = vld [vmem:[#allocation2 + $0x102] sm:$0xff]
    %v465 = vld [vmem:[#allocation2 + $0x112] sm:$0xff]
    %v466 = vld [vmem:[%s343] sm:$0xff]
    %v467 = vld [vmem:[%s343 + $0x10] sm:$0xff]
    %v468 = vld [vmem:[%s343 + $0x20] sm:$0xff]
    %v469 = vld [vmem:[%s343 + $0x30] sm:$0xff]
    %v470 = vld [vmem:[%s343 + $0x40] sm:$0xff]
    %v471 = vld [vmem:[%s343 + $0x50] sm:$0xff]
    %v472 = vld [vmem:[%s343 + $0x60] sm:$0xff]
    %v473 = vld [vmem:[%s343 + $0x70] sm:$0xff]
    %v474 = vld [vmem:[%s343 + $0xa0] sm:$0xff]
    %v475 = vld [vmem:[%s343 + $0xb0] sm:$0xff]
    %v476 = vld [vmem:[%s343 + $0xc0] sm:$0xff]
    %v477 = vld [vmem:[%s343 + $0xd0] sm:$0xff]
    %v478 = vld [vmem:[%s343 + $0xe0] sm:$0xff]
    %v479 = vld [vmem:[%s343 + $0xf0] sm:$0xff]
    %v480 = vld [vmem:[%s343 + $0x100] sm:$0xff]
    %v481 = vld [vmem:[%s343 + $0x110] sm:$0xff]
    %v482 = vld [vmem:[%s343 + $0x1] sm:$0xff]
    %v483 = vld [vmem:[%s343 + $0x11] sm:$0xff]
    %v484 = vld [vmem:[%s343 + $0x21] sm:$0xff]
    %v485 = vld [vmem:[%s343 + $0x31] sm:$0xff]
    %v486 = vld [vmem:[%s343 + $0x41] sm:$0xff]
    %v487 = vld [vmem:[%s343 + $0x51] sm:$0xff]
    %v488 = vld [vmem:[%s343 + $0x61] sm:$0xff]
    %v489 = vld [vmem:[%s343 + $0x71] sm:$0xff]
    %v490 = vld [vmem:[%s343 + $0xa1] sm:$0xff]
    %v491 = vld [vmem:[%s343 + $0xb1] sm:$0xff]
    %v492 = vld [vmem:[%s343 + $0xc1] sm:$0xff]
    %v493 = vld [vmem:[%s343 + $0xd1] sm:$0xff]
    %v494 = vld [vmem:[%s343 + $0xe1] sm:$0xff]
    %v495 = vld [vmem:[%s343 + $0xf1] sm:$0xff]
    %v496 = vld [vmem:[%s343 + $0x101] sm:$0xff]
    %v497 = vld [vmem:[%s343 + $0x111] sm:$0xff]
    %v498 = vld [vmem:[%s343 + $0x2] sm:$0xff]
    %v499 = vld [vmem:[%s343 + $0x12] sm:$0xff]
    %v500 = vld [vmem:[%s343 + $0x22] sm:$0xff]
    %v501 = vld [vmem:[%s343 + $0x32] sm:$0xff]
    %v502 = vld [vmem:[%s343 + $0x42] sm:$0xff]
    %v503 = vld [vmem:[%s343 + $0x52] sm:$0xff]
    %v504 = vld [vmem:[%s343 + $0x62] sm:$0xff]
    %v505 = vld [vmem:[%s343 + $0x72] sm:$0xff]
    %v506 = vld [vmem:[%s343 + $0xa2] sm:$0xff]
    %v507 = vld [vmem:[%s343 + $0xb2] sm:$0xff]
    %v508 = vld [vmem:[%s343 + $0xc2] sm:$0xff]
    %v509 = vld [vmem:[%s343 + $0xd2] sm:$0xff]
    %v510 = vld [vmem:[%s343 + $0xe2] sm:$0xff]
    %v511 = vld [vmem:[%s343 + $0xf2] sm:$0xff]
    %v512 = vld [vmem:[%s343 + $0x102] sm:$0xff]
    %v513 = vld [vmem:[%s343 + $0x112] sm:$0xff]
    %s514 = scalar_lea.vmem [#allocation2], 32
    %v515 = vld [vmem:[%s514] sm:$0xff]
    %v516 = vld [vmem:[%s514 + $0x10] sm:$0xff]
    %v517 = vld [vmem:[%s514 + $0x20] sm:$0xff]
    %v518 = vld [vmem:[%s514 + $0x30] sm:$0xff]
    %v519 = vld [vmem:[%s514 + $0x40] sm:$0xff]
    %v520 = vld [vmem:[%s514 + $0x50] sm:$0xff]
    %v521 = vld [vmem:[%s514 + $0x60] sm:$0xff]
    %v522 = vld [vmem:[%s514 + $0x70] sm:$0xff]
    %v523 = vld [vmem:[%s514 + $0xa0] sm:$0xff]
    %v524 = vld [vmem:[%s514 + $0xb0] sm:$0xff]
    %v525 = vld [vmem:[%s514 + $0xc0] sm:$0xff]
    %v526 = vld [vmem:[%s514 + $0xd0] sm:$0xff]
    %v527 = vld [vmem:[%s514 + $0xe0] sm:$0xff]
    %v528 = vld [vmem:[%s514 + $0xf0] sm:$0xff]
    %v529 = vld [vmem:[%s514 + $0x100] sm:$0xff]
    %v530 = vld [vmem:[%s514 + $0x110] sm:$0xff]
    %v531 = vld [vmem:[%s514 + $0x1] sm:$0xff]
    %v532 = vld [vmem:[%s514 + $0x11] sm:$0xff]
    %v533 = vld [vmem:[%s514 + $0x21] sm:$0xff]
    %v534 = vld [vmem:[%s514 + $0x31] sm:$0xff]
    %v535 = vld [vmem:[%s514 + $0x41] sm:$0xff]
    %v536 = vld [vmem:[%s514 + $0x51] sm:$0xff]
    %v537 = vld [vmem:[%s514 + $0x61] sm:$0xff]
    %v538 = vld [vmem:[%s514 + $0x71] sm:$0xff]
    %v539 = vld [vmem:[%s514 + $0xa1] sm:$0xff]
    %v540 = vld [vmem:[%s514 + $0xb1] sm:$0xff]
    %v541 = vld [vmem:[%s514 + $0xc1] sm:$0xff]
    %v542 = vld [vmem:[%s514 + $0xd1] sm:$0xff]
    %v543 = vld [vmem:[%s514 + $0xe1] sm:$0xff]
    %v544 = vld [vmem:[%s514 + $0xf1] sm:$0xff]
    %v545 = vld [vmem:[%s514 + $0x101] sm:$0xff]
    %v546 = vld [vmem:[%s514 + $0x111] sm:$0xff]
    %v547 = vld [vmem:[%s514 + $0x2] sm:$0xff]
    %v548 = vld [vmem:[%s514 + $0x12] sm:$0xff]
    %v549 = vld [vmem:[%s514 + $0x22] sm:$0xff]
    %v550 = vld [vmem:[%s514 + $0x32] sm:$0xff]
    %v551 = vld [vmem:[%s514 + $0x42] sm:$0xff]
    %v552 = vld [vmem:[%s514 + $0x52] sm:$0xff]
    %v553 = vld [vmem:[%s514 + $0x62] sm:$0xff]
    %v554 = vld [vmem:[%s514 + $0x72] sm:$0xff]
    %v555 = vld [vmem:[%s514 + $0xa2] sm:$0xff]
    %v556 = vld [vmem:[%s514 + $0xb2] sm:$0xff]
    %v557 = vld [vmem:[%s514 + $0xc2] sm:$0xff]
    %v558 = vld [vmem:[%s514 + $0xd2] sm:$0xff]
    %v559 = vld [vmem:[%s514 + $0xe2] sm:$0xff]
    %v560 = vld [vmem:[%s514 + $0xf2] sm:$0xff]
    %v561 = vld [vmem:[%s514 + $0x102] sm:$0xff]
    %v562 = vld [vmem:[%s514 + $0x112] sm:$0xff]
    %579 = vrot.lane.b32.xlu0 %v434, 4
    %v580 = vpop.permute.xlu0 %579
    %581 = vrot.lane.b32.xlu0 %v435, 4
    %v582 = vpop.permute.xlu0 %581
    %583 = vrot.lane.b32.xlu0 %v436, 4
    %v584 = vpop.permute.xlu0 %583
    %585 = vrot.lane.b32.xlu0 %v437, 4
    %v586 = vpop.permute.xlu0 %585
    %587 = vrot.lane.b32.xlu0 %v438, 4
    %v588 = vpop.permute.xlu0 %587
    %589 = vrot.lane.b32.xlu0 %v439, 4
    %v590 = vpop.permute.xlu0 %589
    %591 = vrot.lane.b32.xlu0 %v440, 4
    %v592 = vpop.permute.xlu0 %591
    %593 = vrot.lane.b32.xlu0 %v441, 4
    %v594 = vpop.permute.xlu0 %593
    %595 = vrot.lane.b32.xlu0 %v442, 4
    %v596 = vpop.permute.xlu0 %595
    %597 = vrot.lane.b32.xlu0 %v443, 4
    %v598 = vpop.permute.xlu0 %597
    %599 = vrot.lane.b32.xlu0 %v444, 4
    %v600 = vpop.permute.xlu0 %599
    %601 = vrot.lane.b32.xlu0 %v445, 4
    %v602 = vpop.permute.xlu0 %601
    %603 = vrot.lane.b32.xlu0 %v446, 4
    %v604 = vpop.permute.xlu0 %603
    %605 = vrot.lane.b32.xlu0 %v447, 4
    %v606 = vpop.permute.xlu0 %605
    %607 = vrot.lane.b32.xlu0 %v448, 4
    %v608 = vpop.permute.xlu0 %607
    %609 = vrot.lane.b32.xlu0 %v449, 4
    %v610 = vpop.permute.xlu0 %609
    %643 = vrot.lane.b32.xlu0 %v450, 8
    %v644 = vpop.permute.xlu0 %643
    %645 = vrot.lane.b32.xlu0 %v451, 8
    %v646 = vpop.permute.xlu0 %645
    %647 = vrot.lane.b32.xlu0 %v452, 8
    %v648 = vpop.permute.xlu0 %647
    %649 = vrot.lane.b32.xlu0 %v453, 8
    %v650 = vpop.permute.xlu0 %649
    %651 = vrot.lane.b32.xlu0 %v454, 8
    %v652 = vpop.permute.xlu0 %651
    %653 = vrot.lane.b32.xlu0 %v455, 8
    %v654 = vpop.permute.xlu0 %653
    %655 = vrot.lane.b32.xlu0 %v456, 8
    %v656 = vpop.permute.xlu0 %655
    %657 = vrot.lane.b32.xlu0 %v457, 8
    %v658 = vpop.permute.xlu0 %657
    %659 = vrot.lane.b32.xlu0 %v458, 8
    %v660 = vpop.permute.xlu0 %659
    %661 = vrot.lane.b32.xlu0 %v459, 8
    %v662 = vpop.permute.xlu0 %661
    %663 = vrot.lane.b32.xlu0 %v460, 8
    %v664 = vpop.permute.xlu0 %663
    %665 = vrot.lane.b32.xlu0 %v461, 8
    %v666 = vpop.permute.xlu0 %665
    %667 = vrot.lane.b32.xlu0 %v462, 8
    %v668 = vpop.permute.xlu0 %667
    %669 = vrot.lane.b32.xlu0 %v463, 8
    %v670 = vpop.permute.xlu0 %669
    %671 = vrot.lane.b32.xlu0 %v464, 8
    %v672 = vpop.permute.xlu0 %671
    %673 = vrot.lane.b32.xlu0 %v465, 8
    %v674 = vpop.permute.xlu0 %673
    %707 = vrot.lane.b32.xlu0 %v466, 12
    %v708 = vpop.permute.xlu0 %707
    %709 = vrot.lane.b32.xlu0 %v467, 12
    %v710 = vpop.permute.xlu0 %709
    %711 = vrot.lane.b32.xlu0 %v468, 12
    %v712 = vpop.permute.xlu0 %711
    %713 = vrot.lane.b32.xlu0 %v469, 12
    %v714 = vpop.permute.xlu0 %713
    %715 = vrot.lane.b32.xlu0 %v470, 12
    %v716 = vpop.permute.xlu0 %715
    %717 = vrot.lane.b32.xlu0 %v471, 12
    %v718 = vpop.permute.xlu0 %717
    %719 = vrot.lane.b32.xlu0 %v472, 12
    %v720 = vpop.permute.xlu0 %719
    %721 = vrot.lane.b32.xlu0 %v473, 12
    %v722 = vpop.permute.xlu0 %721
    %723 = vrot.lane.b32.xlu0 %v474, 12
    %v724 = vpop.permute.xlu0 %723
    %725 = vrot.lane.b32.xlu0 %v475, 12
    %v726 = vpop.permute.xlu0 %725
    %727 = vrot.lane.b32.xlu0 %v476, 12
    %v728 = vpop.permute.xlu0 %727
    %729 = vrot.lane.b32.xlu0 %v477, 12
    %v730 = vpop.permute.xlu0 %729
    %731 = vrot.lane.b32.xlu0 %v478, 12
    %v732 = vpop.permute.xlu0 %731
    %733 = vrot.lane.b32.xlu0 %v479, 12
    %v734 = vpop.permute.xlu0 %733
    %735 = vrot.lane.b32.xlu0 %v480, 12
    %v736 = vpop.permute.xlu0 %735
    %737 = vrot.lane.b32.xlu0 %v481, 12
    %v738 = vpop.permute.xlu0 %737
    %771 = vrot.lane.b32.xlu0 %v482, 16
    %v772 = vpop.permute.xlu0 %771
    %773 = vrot.lane.b32.xlu0 %v483, 16
    %v774 = vpop.permute.xlu0 %773
    %775 = vrot.lane.b32.xlu0 %v484, 16
    %v776 = vpop.permute.xlu0 %775
    %777 = vrot.lane.b32.xlu0 %v485, 16
    %v778 = vpop.permute.xlu0 %777
    %779 = vrot.lane.b32.xlu0 %v486, 16
    %v780 = vpop.permute.xlu0 %779
    %781 = vrot.lane.b32.xlu0 %v487, 16
    %v782 = vpop.permute.xlu0 %781
    %783 = vrot.lane.b32.xlu0 %v488, 16
    %v784 = vpop.permute.xlu0 %783
    %785 = vrot.lane.b32.xlu0 %v489, 16
    %v786 = vpop.permute.xlu0 %785
    %787 = vrot.lane.b32.xlu0 %v490, 16
    %v788 = vpop.permute.xlu0 %787
    %789 = vrot.lane.b32.xlu0 %v491, 16
    %v790 = vpop.permute.xlu0 %789
    %791 = vrot.lane.b32.xlu0 %v492, 16
    %v792 = vpop.permute.xlu0 %791
    %793 = vrot.lane.b32.xlu0 %v493, 16
    %v794 = vpop.permute.xlu0 %793
    %795 = vrot.lane.b32.xlu0 %v494, 16
    %v796 = vpop.permute.xlu0 %795
    %797 = vrot.lane.b32.xlu0 %v495, 16
    %v798 = vpop.permute.xlu0 %797
    %799 = vrot.lane.b32.xlu0 %v496, 16
    %v800 = vpop.permute.xlu0 %799
    %801 = vrot.lane.b32.xlu0 %v497, 16
    %v802 = vpop.permute.xlu0 %801
    %835 = vrot.lane.b32.xlu0 %v498, 20
    %v836 = vpop.permute.xlu0 %835
    %837 = vrot.lane.b32.xlu0 %v499, 20
    %v838 = vpop.permute.xlu0 %837
    %839 = vrot.lane.b32.xlu0 %v500, 20
    %v840 = vpop.permute.xlu0 %839
    %841 = vrot.lane.b32.xlu0 %v501, 20
    %v842 = vpop.permute.xlu0 %841
    %843 = vrot.lane.b32.xlu0 %v502, 20
    %v844 = vpop.permute.xlu0 %843
    %845 = vrot.lane.b32.xlu0 %v503, 20
    %v846 = vpop.permute.xlu0 %845
    %847 = vrot.lane.b32.xlu0 %v504, 20
    %v848 = vpop.permute.xlu0 %847
    %849 = vrot.lane.b32.xlu0 %v505, 20
    %v850 = vpop.permute.xlu0 %849
    %851 = vrot.lane.b32.xlu0 %v506, 20
    %v852 = vpop.permute.xlu0 %851
    %853 = vrot.lane.b32.xlu0 %v507, 20
    %v854 = vpop.permute.xlu0 %853
    %855 = vrot.lane.b32.xlu0 %v508, 20
    %v856 = vpop.permute.xlu0 %855
    %857 = vrot.lane.b32.xlu0 %v509, 20
    %v858 = vpop.permute.xlu0 %857
    %859 = vrot.lane.b32.xlu0 %v510, 20
    %v860 = vpop.permute.xlu0 %859
    %861 = vrot.lane.b32.xlu0 %v511, 20
    %v862 = vpop.permute.xlu0 %861
    %863 = vrot.lane.b32.xlu0 %v512, 20
    %v864 = vpop.permute.xlu0 %863
    %865 = vrot.lane.b32.xlu0 %v513, 20
    %v866 = vpop.permute.xlu0 %865
    %899 = vrot.lane.b32.xlu0 %v515, 24
    %v900 = vpop.permute.xlu0 %899
    %901 = vrot.lane.b32.xlu0 %v516, 24
    %v902 = vpop.permute.xlu0 %901
    %903 = vrot.lane.b32.xlu0 %v517, 24
    %v904 = vpop.permute.xlu0 %903
    %905 = vrot.lane.b32.xlu0 %v518, 24
    %v906 = vpop.permute.xlu0 %905
    %907 = vrot.lane.b32.xlu0 %v519, 24
    %v908 = vpop.permute.xlu0 %907
    %909 = vrot.lane.b32.xlu0 %v520, 24
    %v910 = vpop.permute.xlu0 %909
    %911 = vrot.lane.b32.xlu0 %v521, 24
    %v912 = vpop.permute.xlu0 %911
    %913 = vrot.lane.b32.xlu0 %v522, 24
    %v914 = vpop.permute.xlu0 %913
    %915 = vrot.lane.b32.xlu0 %v523, 24
    %v916 = vpop.permute.xlu0 %915
    %917 = vrot.lane.b32.xlu0 %v524, 24
    %v918 = vpop.permute.xlu0 %917
    %919 = vrot.lane.b32.xlu0 %v525, 24
    %v920 = vpop.permute.xlu0 %919
    %921 = vrot.lane.b32.xlu0 %v526, 24
    %v922 = vpop.permute.xlu0 %921
    %923 = vrot.lane.b32.xlu0 %v527, 24
    %v924 = vpop.permute.xlu0 %923
    %925 = vrot.lane.b32.xlu0 %v528, 24
    %v926 = vpop.permute.xlu0 %925
    %927 = vrot.lane.b32.xlu0 %v529, 24
    %v928 = vpop.permute.xlu0 %927
    %929 = vrot.lane.b32.xlu0 %v530, 24
    %v930 = vpop.permute.xlu0 %929
    %963 = vrot.lane.b32.xlu0 %v531, 28
    %v964 = vpop.permute.xlu0 %963
    %965 = vrot.lane.b32.xlu0 %v532, 28
    %v966 = vpop.permute.xlu0 %965
    %967 = vrot.lane.b32.xlu0 %v533, 28
    %v968 = vpop.permute.xlu0 %967
    %969 = vrot.lane.b32.xlu0 %v534, 28
    %v970 = vpop.permute.xlu0 %969
    %971 = vrot.lane.b32.xlu0 %v535, 28
    %v972 = vpop.permute.xlu0 %971
    %973 = vrot.lane.b32.xlu0 %v536, 28
    %v974 = vpop.permute.xlu0 %973
    %975 = vrot.lane.b32.xlu0 %v537, 28
    %v976 = vpop.permute.xlu0 %975
    %977 = vrot.lane.b32.xlu0 %v538, 28
    %v978 = vpop.permute.xlu0 %977
    %979 = vrot.lane.b32.xlu0 %v539, 28
    %v980 = vpop.permute.xlu0 %979
    %981 = vrot.lane.b32.xlu0 %v540, 28
    %v982 = vpop.permute.xlu0 %981
    %983 = vrot.lane.b32.xlu0 %v541, 28
    %v984 = vpop.permute.xlu0 %983
    %985 = vrot.lane.b32.xlu0 %v542, 28
    %v986 = vpop.permute.xlu0 %985
    %987 = vrot.lane.b32.xlu0 %v543, 28
    %v988 = vpop.permute.xlu0 %987
    %989 = vrot.lane.b32.xlu0 %v544, 28
    %v990 = vpop.permute.xlu0 %989
    %991 = vrot.lane.b32.xlu0 %v545, 28
    %v992 = vpop.permute.xlu0 %991
    %993 = vrot.lane.b32.xlu0 %v546, 28
    %v994 = vpop.permute.xlu0 %993
    %1027 = vrot.lane.b32.xlu0 %v547, 32
    %v1028 = vpop.permute.xlu0 %1027
    %1029 = vrot.lane.b32.xlu0 %v548, 32
    %v1030 = vpop.permute.xlu0 %1029
    %1031 = vrot.lane.b32.xlu0 %v549, 32
    %v1032 = vpop.permute.xlu0 %1031
    %1033 = vrot.lane.b32.xlu0 %v550, 32
    %v1034 = vpop.permute.xlu0 %1033
    %1035 = vrot.lane.b32.xlu0 %v551, 32
    %v1036 = vpop.permute.xlu0 %1035
    %1037 = vrot.lane.b32.xlu0 %v552, 32
    %v1038 = vpop.permute.xlu0 %1037
    %1039 = vrot.lane.b32.xlu0 %v553, 32
    %v1040 = vpop.permute.xlu0 %1039
    %1041 = vrot.lane.b32.xlu0 %v554, 32
    %v1042 = vpop.permute.xlu0 %1041
    %1043 = vrot.lane.b32.xlu0 %v555, 32
    %v1044 = vpop.permute.xlu0 %1043
    %1045 = vrot.lane.b32.xlu0 %v556, 32
    %v1046 = vpop.permute.xlu0 %1045
    %1047 = vrot.lane.b32.xlu0 %v557, 32
    %v1048 = vpop.permute.xlu0 %1047
    %1049 = vrot.lane.b32.xlu0 %v558, 32
    %v1050 = vpop.permute.xlu0 %1049
    %1051 = vrot.lane.b32.xlu0 %v559, 32
    %v1052 = vpop.permute.xlu0 %1051
    %1053 = vrot.lane.b32.xlu0 %v560, 32
    %v1054 = vpop.permute.xlu0 %1053
    %1055 = vrot.lane.b32.xlu0 %v561, 32
    %v1056 = vpop.permute.xlu0 %1055
    %1057 = vrot.lane.b32.xlu0 %v562, 32
    %v1058 = vpop.permute.xlu0 %1057
    %v1075 = vsel %vm344, %v418, %v580
    %v1076 = vsel %vm344, %v419, %v582
    %v1077 = vsel %vm344, %v420, %v584
    %v1078 = vsel %vm344, %v421, %v586
    %v1079 = vsel %vm344, %v422, %v588
    %v1080 = vsel %vm344, %v423, %v590
    %v1081 = vsel %vm344, %v424, %v592
    %v1082 = vsel %vm344, %v425, %v594
    %v1083 = vsel %vm344, %v426, %v596
    %v1084 = vsel %vm344, %v427, %v598
    %v1085 = vsel %vm344, %v428, %v600
    %v1086 = vsel %vm344, %v429, %v602
    %v1087 = vsel %vm344, %v430, %v604
    %v1088 = vsel %vm344, %v431, %v606
    %v1089 = vsel %vm344, %v432, %v608
    %v1090 = vsel %vm344, %v433, %v610
    %v1091 = vsel %vm214, %v1075, %v644
    %v1092 = vsel %vm214, %v1076, %v646
    %v1093 = vsel %vm214, %v1077, %v648
    %v1094 = vsel %vm214, %v1078, %v650
    %v1095 = vsel %vm214, %v1079, %v652
    %v1096 = vsel %vm214, %v1080, %v654
    %v1097 = vsel %vm214, %v1081, %v656
    %v1098 = vsel %vm214, %v1082, %v658
    %v1099 = vsel %vm214, %v1083, %v660
    %v1100 = vsel %vm214, %v1084, %v662
    %v1101 = vsel %vm214, %v1085, %v664
    %v1102 = vsel %vm214, %v1086, %v666
    %v1103 = vsel %vm214, %v1087, %v668
    %v1104 = vsel %vm214, %v1088, %v670
    %v1105 = vsel %vm214, %v1089, %v672
    %v1106 = vsel %vm214, %v1090, %v674
    %vm1107 = vcmask 97280
    %v1108 = vsel %vm1107, %v1091, %v708
    %v1109 = vsel %vm1107, %v1092, %v710
    %v1110 = vsel %vm1107, %v1093, %v712
    %v1111 = vsel %vm1107, %v1094, %v714
    %v1112 = vsel %vm1107, %v1095, %v716
    %v1113 = vsel %vm1107, %v1096, %v718
    %v1114 = vsel %vm1107, %v1097, %v720
    %v1115 = vsel %vm1107, %v1098, %v722
    %v1116 = vsel %vm1107, %v1099, %v724
    %v1117 = vsel %vm1107, %v1100, %v726
    %v1118 = vsel %vm1107, %v1101, %v728
    %v1119 = vsel %vm1107, %v1102, %v730
    %v1120 = vsel %vm1107, %v1103, %v732
    %v1121 = vsel %vm1107, %v1104, %v734
    %v1122 = vsel %vm1107, %v1105, %v736
    %v1123 = vsel %vm1107, %v1106, %v738
    %vm1124 = vcmask 130048
    %v1125 = vsel %vm1124, %v1108, %v772
    %v1126 = vsel %vm1124, %v1109, %v774
    %v1127 = vsel %vm1124, %v1110, %v776
    %v1128 = vsel %vm1124, %v1111, %v778
    %v1129 = vsel %vm1124, %v1112, %v780
    %v1130 = vsel %vm1124, %v1113, %v782
    %v1131 = vsel %vm1124, %v1114, %v784
    %v1132 = vsel %vm1124, %v1115, %v786
    %v1133 = vsel %vm1124, %v1116, %v788
    %v1134 = vsel %vm1124, %v1117, %v790
    %v1135 = vsel %vm1124, %v1118, %v792
    %v1136 = vsel %vm1124, %v1119, %v794
    %v1137 = vsel %vm1124, %v1120, %v796
    %v1138 = vsel %vm1124, %v1121, %v798
    %v1139 = vsel %vm1124, %v1122, %v800
    %v1140 = vsel %vm1124, %v1123, %v802
    %vm1141 = vcmask 162816
    %v1142 = vsel %vm1141, %v1125, %v836
    %v1143 = vsel %vm1141, %v1126, %v838
    %v1144 = vsel %vm1141, %v1127, %v840
    %v1145 = vsel %vm1141, %v1128, %v842
    %v1146 = vsel %vm1141, %v1129, %v844
    %v1147 = vsel %vm1141, %v1130, %v846
    %v1148 = vsel %vm1141, %v1131, %v848
    %v1149 = vsel %vm1141, %v1132, %v850
    %v1150 = vsel %vm1141, %v1133, %v852
    %v1151 = vsel %vm1141, %v1134, %v854
    %v1152 = vsel %vm1141, %v1135, %v856
    %v1153 = vsel %vm1141, %v1136, %v858
    %v1154 = vsel %vm1141, %v1137, %v860
    %v1155 = vsel %vm1141, %v1138, %v862
    %v1156 = vsel %vm1141, %v1139, %v864
    %v1157 = vsel %vm1141, %v1140, %v866
    %vm1158 = vcmask 195584
    %v1159 = vsel %vm1158, %v1142, %v900
    %v1160 = vsel %vm1158, %v1143, %v902
    %v1161 = vsel %vm1158, %v1144, %v904
    %v1162 = vsel %vm1158, %v1145, %v906
    %v1163 = vsel %vm1158, %v1146, %v908
    %v1164 = vsel %vm1158, %v1147, %v910
    %v1165 = vsel %vm1158, %v1148, %v912
    %v1166 = vsel %vm1158, %v1149, %v914
    %v1167 = vsel %vm1158, %v1150, %v916
    %v1168 = vsel %vm1158, %v1151, %v918
    %v1169 = vsel %vm1158, %v1152, %v920
    %v1170 = vsel %vm1158, %v1153, %v922
    %v1171 = vsel %vm1158, %v1154, %v924
    %v1172 = vsel %vm1158, %v1155, %v926
    %v1173 = vsel %vm1158, %v1156, %v928
    %v1174 = vsel %vm1158, %v1157, %v930
    %vm1175 = vcmask 228352
    %v1176 = vsel %vm1175, %v1159, %v964
    %v1177 = vsel %vm1175, %v1160, %v966
    %v1178 = vsel %vm1175, %v1161, %v968
    %v1179 = vsel %vm1175, %v1162, %v970
    %v1180 = vsel %vm1175, %v1163, %v972
    %v1181 = vsel %vm1175, %v1164, %v974
    %v1182 = vsel %vm1175, %v1165, %v976
    %v1183 = vsel %vm1175, %v1166, %v978
    %v1184 = vsel %vm1175, %v1167, %v980
    %v1185 = vsel %vm1175, %v1168, %v982
    %v1186 = vsel %vm1175, %v1169, %v984
    %v1187 = vsel %vm1175, %v1170, %v986
    %v1188 = vsel %vm1175, %v1171, %v988
    %v1189 = vsel %vm1175, %v1172, %v990
    %v1190 = vsel %vm1175, %v1173, %v992
    %v1191 = vsel %vm1175, %v1174, %v994
    %vm1192 = vcmask 261120
    %v1193 = vsel %vm1192, %v1176, %v1028
    %v1194 = vsel %vm1192, %v1177, %v1030
    %v1195 = vsel %vm1192, %v1178, %v1032
    %v1196 = vsel %vm1192, %v1179, %v1034
    %v1197 = vsel %vm1192, %v1180, %v1036
    %v1198 = vsel %vm1192, %v1181, %v1038
    %v1199 = vsel %vm1192, %v1182, %v1040
    %v1200 = vsel %vm1192, %v1183, %v1042
    %v1201 = vsel %vm1192, %v1184, %v1044
    %v1202 = vsel %vm1192, %v1185, %v1046
    %v1203 = vsel %vm1192, %v1186, %v1048
    %v1204 = vsel %vm1192, %v1187, %v1050
    %v1205 = vsel %vm1192, %v1188, %v1052
    %v1206 = vsel %vm1192, %v1189, %v1054
    %v1207 = vsel %vm1192, %v1190, %v1056
    %v1208 = vsel %vm1192, %v1191, %v1058
    %v1209 = vpack.c.bf16 %v1194, %v1193
    %v1210 = vpack.c.bf16 %v1196, %v1195
    %v1211 = vpack.c.bf16 %v1198, %v1197
    %v1212 = vpack.c.bf16 %v1200, %v1199
    %v1213 = vpack.c.bf16 %v1202, %v1201
    %v1214 = vpack.c.bf16 %v1204, %v1203
    %v1215 = vpack.c.bf16 %v1206, %v1205
    %v1216 = vpack.c.bf16 %v1208, %v1207
    %v1217 = vld [vmem:[%s3] sm:$0xf]
    %v1218 = vld [vmem:[%s3 + $0x4] sm:$0xf]
    %v1219 = vld [vmem:[%s3 + $0x8] sm:$0xf]
    %v1220 = vld [vmem:[%s3 + $0xc] sm:$0xf]
    %v1221 = vld [vmem:[%s3 + $0x10] sm:$0x3]
    %v1222 = vld [vmem:[%s4] sm:$0x1]
    %v1224 = vperm.slane %v1222, 0
    %v1231 = vunpack.c.l.b16 %v1217
    %v1232 = vunpack.c.l.b16 %v1218
    %v1233 = vunpack.c.l.b16 %v1219
    %v1234 = vunpack.c.l.b16 %v1220
    %v1235 = vunpack.c.l.b16 %v1221
    %v1236 = vpack.c.b16 %v1232, %v1231
    %v1237 = vpack.c.b16 %v1234, %v1233
    %v1238 = vpack.c.b16 %v1235, %v1235
    %vm1241 = vcmask 293888
    %v1243 = vsel %vm1241, %v1209, 0
    %v1246 = vsel %vm1241, %v1210, 0
    %v1249 = vsel %vm1241, %v1211, 0
    %v1252 = vsel %vm1241, %v1212, 0
    %v1255 = vsel %vm1241, %v1213, 0
    %v1258 = vsel %vm1241, %v1214, 0
    %v1261 = vsel %vm1241, %v1215, 0
    %v1264 = vsel %vm1241, %v1216, 0
    %vm1266 = vcmask 1041408
    %v1268 = vsel %vm1266, %v1238, 0
    %1270 = vmatpush.bf16.msra.mxu0 0
    %1271 = vmatpush.bf16.msra.mxu0 0
    %1272 = vmatpush.bf16.msra.mxu0 0
    %1273 = vmatpush.bf16.msra.mxu0 0
    %1274 = vmatpush.bf16.msra.mxu0 0
    %1275 = vmatpush.bf16.msra.mxu0 %v1268
    %1276 = vmatpush.bf16.msra.mxu0 %v1237
    %1277 = vmatpush.bf16.msra.mxu0 %v1236
    %1278 = vmatmul.bf16.gmra.mxu0 %v1243
    %v1279 = vpop.f32.mrf.mxu0
    %v1280 = vadd.f32 %v1224, %v1279
    %v1281 = vpop.f32.mrf.mxu0
    %v1282 = vadd.f32 %v1224, %v1281
    %1283 = vmatmul.bf16.gmra.mxu0 %v1246
    %v1284 = vpop.f32.mrf.mxu0
    %v1285 = vadd.f32 %v1224, %v1284
    %v1286 = vpop.f32.mrf.mxu0
    %v1287 = vadd.f32 %v1224, %v1286
    %1288 = vmatmul.bf16.gmra.mxu0 %v1249
    %v1289 = vpop.f32.mrf.mxu0
    %v1290 = vadd.f32 %v1224, %v1289
    %v1291 = vpop.f32.mrf.mxu0
    %v1292 = vadd.f32 %v1224, %v1291
    %1293 = vmatmul.bf16.gmra.mxu0 %v1252
    %v1294 = vpop.f32.mrf.mxu0
    %v1295 = vadd.f32 %v1224, %v1294
    %v1296 = vpop.f32.mrf.mxu0
    %v1297 = vadd.f32 %v1224, %v1296
    %1298 = vmatmul.bf16.gmra.mxu0 %v1255
    %v1299 = vpop.f32.mrf.mxu0
    %v1300 = vadd.f32 %v1224, %v1299
    %v1301 = vpop.f32.mrf.mxu0
    %v1302 = vadd.f32 %v1224, %v1301
    %1303 = vmatmul.bf16.gmra.mxu0 %v1258
    %v1304 = vpop.f32.mrf.mxu0
    %v1305 = vadd.f32 %v1224, %v1304
    %v1306 = vpop.f32.mrf.mxu0
    %v1307 = vadd.f32 %v1224, %v1306
    %1308 = vmatmul.bf16.gmra.mxu0 %v1261
    %v1309 = vpop.f32.mrf.mxu0
    %v1310 = vadd.f32 %v1224, %v1309
    %v1311 = vpop.f32.mrf.mxu0
    %v1312 = vadd.f32 %v1224, %v1311
    %1313 = vmatmul.bf16.gmra.mxu0 %v1264
    %v1314 = vpop.f32.mrf.mxu0
    %v1315 = vadd.f32 %v1224, %v1314
    %v1316 = vpop.f32.mrf.mxu0
    %v1317 = vadd.f32 %v1224, %v1316
    %1318 = vdwg.mxu0
    %v1319 = vmax.f32 %v1280, 0.0
    %v1320 = vmax.f32 %v1282, 0.0
    %v1321 = vmax.f32 %v1285, 0.0
    %v1322 = vmax.f32 %v1287, 0.0
    %v1323 = vmax.f32 %v1290, 0.0
    %v1324 = vmax.f32 %v1292, 0.0
    %v1325 = vmax.f32 %v1295, 0.0
    %v1326 = vmax.f32 %v1297, 0.0
    %v1327 = vmax.f32 %v1300, 0.0
    %v1328 = vmax.f32 %v1302, 0.0
    %v1329 = vmax.f32 %v1305, 0.0
    %v1330 = vmax.f32 %v1307, 0.0
    %v1331 = vmax.f32 %v1310, 0.0
    %v1332 = vmax.f32 %v1312, 0.0
    %v1333 = vmax.f32 %v1315, 0.0
    %v1334 = vmax.f32 %v1317, 0.0
    %1335 = vst.msk [vmem:[%s5] sm:$0xff] %vm214, %v1319
    %1336 = vst.msk [vmem:[%s5 + $0x8] sm:$0xff] %vm214, %v1320
    %1337 = vst.msk [vmem:[%s5 + $0x10] sm:$0xff] %vm214, %v1321
    %1338 = vst.msk [vmem:[%s5 + $0x18] sm:$0xff] %vm214, %v1322
    %1339 = vst.msk [vmem:[%s5 + $0x20] sm:$0xff] %vm214, %v1323
    %1340 = vst.msk [vmem:[%s5 + $0x28] sm:$0xff] %vm214, %v1324
    %1341 = vst.msk [vmem:[%s5 + $0x30] sm:$0xff] %vm214, %v1325
    %1342 = vst.msk [vmem:[%s5 + $0x38] sm:$0xff] %vm214, %v1326
    %1343 = vst.msk [vmem:[%s5 + $0x40] sm:$0xff] %vm214, %v1327
    %1344 = vst.msk [vmem:[%s5 + $0x48] sm:$0xff] %vm214, %v1328
    %1345 = vst.msk [vmem:[%s5 + $0x50] sm:$0xff] %vm214, %v1329
    %1346 = vst.msk [vmem:[%s5 + $0x58] sm:$0xff] %vm214, %v1330
    %1347 = vst.msk [vmem:[%s5 + $0x60] sm:$0xff] %vm214, %v1331
    %1348 = vst.msk [vmem:[%s5 + $0x68] sm:$0xff] %vm214, %v1332
    %1349 = vst.msk [vmem:[%s5 + $0x70] sm:$0xff] %vm214, %v1333
    %1350 = vst.msk [vmem:[%s5 + $0x78] sm:$0xff] %vm214, %v1334
    %v1351 = vsel %vm214, %v1319, 0.0
    %v1352 = vsel %vm214, %v1320, 0.0
    %v1353 = vadd.f32 %v1351, %v1352
    %v1354 = vsel %vm214, %v1321, 0.0
    %v1355 = vadd.f32 %v1353, %v1354
    %v1356 = vsel %vm214, %v1322, 0.0
    %v1357 = vadd.f32 %v1355, %v1356
    %v1358 = vsel %vm214, %v1323, 0.0
    %v1359 = vadd.f32 %v1357, %v1358
    %v1360 = vsel %vm214, %v1324, 0.0
    %v1361 = vadd.f32 %v1359, %v1360
    %v1362 = vsel %vm214, %v1325, 0.0
    %v1363 = vadd.f32 %v1361, %v1362
    %v1364 = vsel %vm214, %v1326, 0.0
    %v1365 = vadd.f32 %v1363, %v1364
    %v1366 = vsel %vm214, %v1327, 0.0
    %v1367 = vadd.f32 %v1365, %v1366
    %v1368 = vsel %vm214, %v1328, 0.0
    %v1369 = vadd.f32 %v1367, %v1368
    %v1370 = vsel %vm214, %v1329, 0.0
    %v1371 = vadd.f32 %v1369, %v1370
    %v1372 = vsel %vm214, %v1330, 0.0
    %v1373 = vadd.f32 %v1371, %v1372
    %v1374 = vsel %vm214, %v1331, 0.0
    %v1375 = vadd.f32 %v1373, %v1374
    %v1376 = vsel %vm214, %v1332, 0.0
    %v1377 = vadd.f32 %v1375, %v1376
    %v1378 = vsel %vm214, %v1333, 0.0
    %v1379 = vadd.f32 %v1377, %v1378
    %v1380 = vsel %vm214, %v1334, 0.0
    %v1381 = vadd.f32 %v1379, %v1380
    %v1382 = vrot.slane %v1381, 4
    %v1383 = vadd.f32 %v1381, %v1382
    %v1384 = vrot.slane %v1383, 2
    %v1385 = vadd.f32 %v1383, %v1384
    %v1386 = vrot.slane %v1385, 1
    %v1387 = vadd.f32 %v1385, %v1386
    %v1388 = vmul.f32 %v1319, %v1319
    %v1389 = vmul.f32 %v1320, %v1320
    %v1390 = vmul.f32 %v1321, %v1321
    %v1391 = vmul.f32 %v1322, %v1322
    %v1392 = vmul.f32 %v1323, %v1323
    %v1393 = vmul.f32 %v1324, %v1324
    %v1394 = vmul.f32 %v1325, %v1325
    %v1395 = vmul.f32 %v1326, %v1326
    %v1396 = vmul.f32 %v1327, %v1327
    %v1397 = vmul.f32 %v1328, %v1328
    %v1398 = vmul.f32 %v1329, %v1329
    %v1399 = vmul.f32 %v1330, %v1330
    %v1400 = vmul.f32 %v1331, %v1331
    %v1401 = vmul.f32 %v1332, %v1332
    %v1402 = vmul.f32 %v1333, %v1333
    %v1403 = vmul.f32 %v1334, %v1334
    %v1404 = vsel %vm214, %v1388, 0.0
    %v1405 = vsel %vm214, %v1389, 0.0
    %v1406 = vadd.f32 %v1404, %v1405
    %v1407 = vsel %vm214, %v1390, 0.0
    %v1408 = vadd.f32 %v1406, %v1407
    %v1409 = vsel %vm214, %v1391, 0.0
    %v1410 = vadd.f32 %v1408, %v1409
    %v1411 = vsel %vm214, %v1392, 0.0
    %v1412 = vadd.f32 %v1410, %v1411
    %v1413 = vsel %vm214, %v1393, 0.0
    %v1414 = vadd.f32 %v1412, %v1413
    %v1415 = vsel %vm214, %v1394, 0.0
    %v1416 = vadd.f32 %v1414, %v1415
    %v1417 = vsel %vm214, %v1395, 0.0
    %v1418 = vadd.f32 %v1416, %v1417
    %v1419 = vsel %vm214, %v1396, 0.0
    %v1420 = vadd.f32 %v1418, %v1419
    %v1421 = vsel %vm214, %v1397, 0.0
    %v1422 = vadd.f32 %v1420, %v1421
    %v1423 = vsel %vm214, %v1398, 0.0
    %v1424 = vadd.f32 %v1422, %v1423
    %v1425 = vsel %vm214, %v1399, 0.0
    %v1426 = vadd.f32 %v1424, %v1425
    %v1427 = vsel %vm214, %v1400, 0.0
    %v1428 = vadd.f32 %v1426, %v1427
    %v1429 = vsel %vm214, %v1401, 0.0
    %v1430 = vadd.f32 %v1428, %v1429
    %v1431 = vsel %vm214, %v1402, 0.0
    %v1432 = vadd.f32 %v1430, %v1431
    %v1433 = vsel %vm214, %v1403, 0.0
    %v1434 = vadd.f32 %v1432, %v1433
    %v1435 = vrot.slane %v1434, 4
    %v1436 = vadd.f32 %v1434, %v1435
    %v1437 = vrot.slane %v1436, 2
    %v1438 = vadd.f32 %v1436, %v1437
    %v1439 = vrot.slane %v1438, 1
    %v1440 = vadd.f32 %v1438, %v1439
    %vm1441 = vcmask 1040384
    %v1442 = vsel %vm1441, %v1387, %v1440
    %vm1443 = vcmask 58368
    %1444 = vst.msk [vmem:[%s6] sm:$0x3] %vm1443, %v1442
    // Predicated region
    $region98: #{down_conv.3} parent=1 // pred_check
      _
    $region99: #{down_conv.3} parent=1 // pred_check_branch
      %1446 = sbr.rel (0) target = $region101
    $region100: #{down_conv.3} parent=1 // pred_region
      _
    $region101: #{down_conv.3} parent=1 // pred_fallthru
      _
    // Predicated region
    $region102: #{down_conv.3} parent=1 // pred_check
      _
    $region103: #{down_conv.3} parent=1 // pred_check_branch
      %1448 = sbr.rel (0) target = $region105
    $region104: #{down_conv.3} parent=1 // pred_region
      _
    $region105: #{down_conv.3} parent=1 // pred_fallthru
      _
    // Predicated region
    $region106: #{down_conv.3} parent=1 // pred_check
      _
    $region107: #{down_conv.3} parent=1 // pred_check_branch
      %1450 = sbr.rel (0) target = $region109
    $region108: #{down_conv.3} parent=1 // pred_region
      _
    $region109: #{down_conv.3} parent=1 // pred_fallthru
      _
    // Predicated region
    $region110: #{down_conv.3} parent=1 // pred_check
      _
    $region111: #{down_conv.3} parent=1 // pred_check_branch
      %1452 = sbr.rel (0) target = $region113
    $region112: #{down_conv.3} parent=1 // pred_region
      _
    $region113: #{down_conv.3} parent=1 // pred_fallthru
      _

</llo_original>
